<compile_context>
chip_gen: v6e
topology: v6e:2x2x1
jax: 0.10.0
libtpu: 0.0.40
codegen_flags: <defaults>
</compile_context>

<pallas_src>
import jax
import jax.numpy as jnp
from jax.experimental import pallas as pl
from jax.experimental.pallas import tpu as pltpu

WINDOW_SIZE = 512
DIMS = [WINDOW_SIZE, 256, 64, 16, 64, 256, WINDOW_SIZE]  # 6 linear layers


def _ae_kernel(x_ref,
               w1, b1, w2, b2, w34, b34, w5, b5, w6, b6,
               o_ref):
    """Full (latent-fused) autoencoder forward for one batch tile.

    encoder: 512 -> 256 -> ReLU -> 64 -> ReLU
    fused  :  64 -> 64 (== 64->16->64, exact, no nonlinearity in between) -> ReLU
    decoder:  64 -> 256 -> ReLU -> 256 -> 512
    Matmul inputs are bf16, accumulation / bias / ReLU are f32.
    """
    h = x_ref[...].astype(jnp.bfloat16)

    h = jnp.dot(h, w1[...], preferred_element_type=jnp.float32) + b1[...]
    h = jnp.maximum(h, 0.0).astype(jnp.bfloat16)

    h = jnp.dot(h, w2[...], preferred_element_type=jnp.float32) + b2[...]
    h = jnp.maximum(h, 0.0).astype(jnp.bfloat16)

    h = jnp.dot(h, w34[...], preferred_element_type=jnp.float32) + b34[...]
    h = jnp.maximum(h, 0.0).astype(jnp.bfloat16)

    h = jnp.dot(h, w5[...], preferred_element_type=jnp.float32) + b5[...]
    h = jnp.maximum(h, 0.0).astype(jnp.bfloat16)

    y = jnp.dot(h, w6[...], preferred_element_type=jnp.float32) + b6[...]
    o_ref[...] = y.astype(o_ref.dtype)


def prepare_params(params, compute_dtype=jnp.bfloat16):
    """Fuse the activation-free latent pair (exact) and cast weights to bf16.

    params: list of 6 (W [in,out] f32, b [1,out] f32).
    Returns flat list [w1,b1,w2,b2,w34,b34,w5,b5,w6,b6] with bf16 weights and
    f32 biases.
    """
    (w1, b1), (w2, b2), (w3, b3), (w4, b4), (w5, b5), (w6, b6) = params
    # (h @ W3 + b3) @ W4 + b4 == h @ (W3 @ W4) + (b3 @ W4 + b4)  -- no ReLU on latent
    w34 = w3 @ w4
    b34 = b3 @ w4 + b4
    flat = []
    for w, b in [(w1, b1), (w2, b2), (w34, b34), (w5, b5), (w6, b6)]:
        flat.append(w.astype(compute_dtype))
        flat.append(b.astype(jnp.float32))
    return flat


def autoencoder_forward(x, flat_params, *, batch_tile=512):
    """x: [B, 512] float32; flat_params: output of prepare_params()."""
    B, D = x.shape
    assert D == WINDOW_SIZE

    # Tile size: large by default (MXU utilization), shrunk/padded for small B.
    bt = min(batch_tile, pl.cdiv(B, 8) * 8)
    Bp = pl.cdiv(B, bt) * bt
    x_p = x if Bp == B else jnp.pad(x, ((0, Bp - B), (0, 0)))

    x_spec = pl.BlockSpec((bt, WINDOW_SIZE), lambda i: (i, 0))
    out_spec = pl.BlockSpec((bt, WINDOW_SIZE), lambda i: (i, 0))
    # Weights/biases: full blocks with a constant index_map -> stay resident in
    # VMEM across all grid steps (total ~0.6 MiB in bf16 after fusion).
    param_specs = [pl.BlockSpec(p.shape, lambda i: (0, 0)) for p in flat_params]

    out = pl.pallas_call(
        _ae_kernel,
        out_shape=jax.ShapeDtypeStruct((Bp, WINDOW_SIZE), x.dtype),
        grid_spec=pltpu.PrefetchScalarGridSpec(
            num_scalar_prefetch=0,
            grid=(Bp // bt,),
            in_specs=[x_spec] + param_specs,
            out_specs=out_spec,
        ),
        compiler_params=pltpu.CompilerParams(
            dimension_semantics=("parallel",)),
    )(x_p, *flat_params)

    return out if Bp == B else out[:B]


def init_params(key):
    """Deterministic init, mimicking nn.Linear's U(-1/sqrt(fan_in), +1/sqrt(fan_in))."""
    params = []
    for li in range(6):
        fan_in, fan_out = DIMS[li], DIMS[li + 1]
        key, kw, kb = jax.random.split(key, 3)
        bound = 1.0 / jnp.sqrt(fan_in)
        w = jax.random.uniform(kw, (fan_in, fan_out), jnp.float32, -bound, bound)
        b = jax.random.uniform(kb, (1, fan_out), jnp.float32, -bound, bound)
        params.append((w, b))
    return params


def reference_forward(x, params):
    """Pure-f32, unfused reference identical to the PyTorch module."""
    h = x
    for li, (w, b) in enumerate(params):
        h = h @ w + b
        if li not in (2, 5):  # no ReLU after latent (16) and final (512) layers
            h = jnp.maximum(h, 0.0)
    return h


if __name__ == "__main__":
    key = jax.random.PRNGKey(0)
    params = init_params(key)
    flat_params = prepare_params(params)

    B = 1024  # grid of 2 tiles at the default batch_tile=512 (uses both v7x TCs)
    x = jax.random.normal(jax.random.PRNGKey(1), (B, WINDOW_SIZE), jnp.float32)

    out = autoencoder_forward(x, flat_params)
    out = jax.block_until_ready(out)

    ref = reference_forward(x, params)
    assert out.shape == (B, WINDOW_SIZE)
    # Loosened tolerance: matmul inputs are bf16 (f32 accumulation); the latent
    # fusion itself is exact.
    assert jnp.allclose(out, ref, atol=3e-2, rtol=3e-2), "mismatch vs reference"

    print("KERNEL_OK")
</pallas_src>

<mosaic_0001>
module attributes {stable_mosaic.version = 11 : i64} {
  func.func @_ae_kernel(%arg0: i32, %arg1: memref<512x512xf32, #tpu.memory_space<vmem>>, %arg2: memref<512x256xbf16, #tpu.memory_space<vmem>>, %arg3: memref<1x256xf32, #tpu.memory_space<vmem>>, %arg4: memref<256x64xbf16, #tpu.memory_space<vmem>>, %arg5: memref<1x64xf32, #tpu.memory_space<vmem>>, %arg6: memref<64x64xbf16, #tpu.memory_space<vmem>>, %arg7: memref<1x64xf32, #tpu.memory_space<vmem>>, %arg8: memref<64x256xbf16, #tpu.memory_space<vmem>>, %arg9: memref<1x256xf32, #tpu.memory_space<vmem>>, %arg10: memref<256x512xbf16, #tpu.memory_space<vmem>>, %arg11: memref<1x512xf32, #tpu.memory_space<vmem>>, %arg12: memref<512x512xf32, #tpu.memory_space<vmem>>) attributes {dimension_semantics = [#tpu.dimension_semantics<parallel>], iteration_bounds = array<i64: 2>, scalar_prefetch = 0 : i64, scratch_operands = 0 : i64, tpu.core_type = #tpu.core_type<tc>, window_params = [{transform_indices = @transform_0, window_bounds = array<i64: 512, 512>}, {pipeline_mode = #tpu.pipeline_mode<synchronous>, transform_indices = @transform_1, window_bounds = array<i64: 512, 256>}, {pipeline_mode = #tpu.pipeline_mode<synchronous>, transform_indices = @transform_2, window_bounds = array<i64: 1, 256>}, {pipeline_mode = #tpu.pipeline_mode<synchronous>, transform_indices = @transform_3, window_bounds = array<i64: 256, 64>}, {pipeline_mode = #tpu.pipeline_mode<synchronous>, transform_indices = @transform_4, window_bounds = array<i64: 1, 64>}, {pipeline_mode = #tpu.pipeline_mode<synchronous>, transform_indices = @transform_5, window_bounds = array<i64: 64, 64>}, {pipeline_mode = #tpu.pipeline_mode<synchronous>, transform_indices = @transform_6, window_bounds = array<i64: 1, 64>}, {pipeline_mode = #tpu.pipeline_mode<synchronous>, transform_indices = @transform_7, window_bounds = array<i64: 64, 256>}, {pipeline_mode = #tpu.pipeline_mode<synchronous>, transform_indices = @transform_8, window_bounds = array<i64: 1, 256>}, {pipeline_mode = #tpu.pipeline_mode<synchronous>, transform_indices = @transform_9, window_bounds = array<i64: 256, 512>}, {pipeline_mode = #tpu.pipeline_mode<synchronous>, transform_indices = @transform_10, window_bounds = array<i64: 1, 512>}, {transform_indices = @transform_11, window_bounds = array<i64: 512, 512>}]} {
    %c0 = arith.constant 0 : index
    %c0_0 = arith.constant 0 : index
    %0 = vector.load %arg1[%c0, %c0_0] : memref<512x512xf32, #tpu.memory_space<vmem>>, vector<512x512xf32>
    %1 = arith.truncf %0 : vector<512x512xf32> to vector<512x512xbf16>
    %c0_1 = arith.constant 0 : index
    %c0_2 = arith.constant 0 : index
    %2 = vector.load %arg2[%c0_1, %c0_2] : memref<512x256xbf16, #tpu.memory_space<vmem>>, vector<512x256xbf16>
    %cst = arith.constant dense<0.000000e+00> : vector<512x256xf32>
    %3 = tpu.matmul %1, %2, %cst {dimension_numbers = #tpu.dot_dimension_numbers<[1], [0], [0], [1], [0, 0, 1, 1], [], []>} : vector<512x512xbf16>, vector<512x256xbf16>, vector<512x256xf32> -> vector<512x256xf32>
    %c0_3 = arith.constant 0 : index
    %c0_4 = arith.constant 0 : index
    %4 = vector.load %arg3[%c0_3, %c0_4] : memref<1x256xf32, #tpu.memory_space<vmem>>, vector<1x256xf32>
    %5 = vector.broadcast %4 : vector<1x256xf32> to vector<512x256xf32>
    %6 = arith.addf %3, %5 : vector<512x256xf32>
    %cst_5 = arith.constant 0.000000e+00 : f32
    %7 = vector.broadcast %cst_5 : f32 to vector<512x256xf32>
    %8 = arith.maximumf %6, %7 : vector<512x256xf32>
    %9 = arith.truncf %8 : vector<512x256xf32> to vector<512x256xbf16>
    %c0_6 = arith.constant 0 : index
    %c0_7 = arith.constant 0 : index
    %10 = vector.load %arg4[%c0_6, %c0_7] : memref<256x64xbf16, #tpu.memory_space<vmem>>, vector<256x64xbf16>
    %cst_8 = arith.constant dense<0.000000e+00> : vector<512x64xf32>
    %11 = tpu.matmul %9, %10, %cst_8 {dimension_numbers = #tpu.dot_dimension_numbers<[1], [0], [0], [1], [0, 0, 1, 1], [], []>} : vector<512x256xbf16>, vector<256x64xbf16>, vector<512x64xf32> -> vector<512x64xf32>
    %c0_9 = arith.constant 0 : index
    %c0_10 = arith.constant 0 : index
    %12 = vector.load %arg5[%c0_9, %c0_10] : memref<1x64xf32, #tpu.memory_space<vmem>>, vector<1x64xf32>
    %13 = vector.broadcast %12 : vector<1x64xf32> to vector<512x64xf32>
    %14 = arith.addf %11, %13 : vector<512x64xf32>
    %cst_11 = arith.constant 0.000000e+00 : f32
    %15 = vector.broadcast %cst_11 : f32 to vector<512x64xf32>
    %16 = arith.maximumf %14, %15 : vector<512x64xf32>
    %17 = arith.truncf %16 : vector<512x64xf32> to vector<512x64xbf16>
    %c0_12 = arith.constant 0 : index
    %c0_13 = arith.constant 0 : index
    %18 = vector.load %arg6[%c0_12, %c0_13] : memref<64x64xbf16, #tpu.memory_space<vmem>>, vector<64x64xbf16>
    %cst_14 = arith.constant dense<0.000000e+00> : vector<512x64xf32>
    %19 = tpu.matmul %17, %18, %cst_14 {dimension_numbers = #tpu.dot_dimension_numbers<[1], [0], [0], [1], [0, 0, 1, 1], [], []>} : vector<512x64xbf16>, vector<64x64xbf16>, vector<512x64xf32> -> vector<512x64xf32>
    %c0_15 = arith.constant 0 : index
    %c0_16 = arith.constant 0 : index
    %20 = vector.load %arg7[%c0_15, %c0_16] : memref<1x64xf32, #tpu.memory_space<vmem>>, vector<1x64xf32>
    %21 = vector.broadcast %20 : vector<1x64xf32> to vector<512x64xf32>
    %22 = arith.addf %19, %21 : vector<512x64xf32>
    %cst_17 = arith.constant 0.000000e+00 : f32
    %23 = vector.broadcast %cst_17 : f32 to vector<512x64xf32>
    %24 = arith.maximumf %22, %23 : vector<512x64xf32>
    %25 = arith.truncf %24 : vector<512x64xf32> to vector<512x64xbf16>
    %c0_18 = arith.constant 0 : index
    %c0_19 = arith.constant 0 : index
    %26 = vector.load %arg8[%c0_18, %c0_19] : memref<64x256xbf16, #tpu.memory_space<vmem>>, vector<64x256xbf16>
    %cst_20 = arith.constant dense<0.000000e+00> : vector<512x256xf32>
    %27 = tpu.matmul %25, %26, %cst_20 {dimension_numbers = #tpu.dot_dimension_numbers<[1], [0], [0], [1], [0, 0, 1, 1], [], []>} : vector<512x64xbf16>, vector<64x256xbf16>, vector<512x256xf32> -> vector<512x256xf32>
    %c0_21 = arith.constant 0 : index
    %c0_22 = arith.constant 0 : index
    %28 = vector.load %arg9[%c0_21, %c0_22] : memref<1x256xf32, #tpu.memory_space<vmem>>, vector<1x256xf32>
    %29 = vector.broadcast %28 : vector<1x256xf32> to vector<512x256xf32>
    %30 = arith.addf %27, %29 : vector<512x256xf32>
    %cst_23 = arith.constant 0.000000e+00 : f32
    %31 = vector.broadcast %cst_23 : f32 to vector<512x256xf32>
    %32 = arith.maximumf %30, %31 : vector<512x256xf32>
    %33 = arith.truncf %32 : vector<512x256xf32> to vector<512x256xbf16>
    %c0_24 = arith.constant 0 : index
    %c0_25 = arith.constant 0 : index
    %34 = vector.load %arg10[%c0_24, %c0_25] : memref<256x512xbf16, #tpu.memory_space<vmem>>, vector<256x512xbf16>
    %cst_26 = arith.constant dense<0.000000e+00> : vector<512x512xf32>
    %35 = tpu.matmul %33, %34, %cst_26 {dimension_numbers = #tpu.dot_dimension_numbers<[1], [0], [0], [1], [0, 0, 1, 1], [], []>} : vector<512x256xbf16>, vector<256x512xbf16>, vector<512x512xf32> -> vector<512x512xf32>
    %c0_27 = arith.constant 0 : index
    %c0_28 = arith.constant 0 : index
    %36 = vector.load %arg11[%c0_27, %c0_28] : memref<1x512xf32, #tpu.memory_space<vmem>>, vector<1x512xf32>
    %37 = vector.broadcast %36 : vector<1x512xf32> to vector<512x512xf32>
    %38 = arith.addf %35, %37 : vector<512x512xf32>
    %c0_29 = arith.constant 0 : index
    %c0_30 = arith.constant 0 : index
    %39 = vector.load %arg12[%c0_29, %c0_30] : memref<512x512xf32, #tpu.memory_space<vmem>>, vector<512x512xf32>
    tpu.vector_store %arg12[%c0_29, %c0_30], %38 {strides = array<i32>} : memref<512x512xf32, #tpu.memory_space<vmem>>, vector<512x512xf32>,
    return
  }
  func.func @transform_0(%arg0: i32) -> (i32, i32) {
    %c0_i32 = arith.constant 0 : i32
    %c0_i32_0 = arith.constant 0 : i32
    return %arg0, %c0_i32 : i32, i32
  }
  func.func @transform_1(%arg0: i32) -> (i32, i32) {
    %c0_i32 = arith.constant 0 : i32
    %c0_i32_0 = arith.constant 0 : i32
    %c0_i32_1 = arith.constant 0 : i32
    return %c0_i32, %c0_i32_0 : i32, i32
  }
  func.func @transform_2(%arg0: i32) -> (i32, i32) {
    %c0_i32 = arith.constant 0 : i32
    %c0_i32_0 = arith.constant 0 : i32
    %c0_i32_1 = arith.constant 0 : i32
    return %c0_i32, %c0_i32_0 : i32, i32
  }
  func.func @transform_3(%arg0: i32) -> (i32, i32) {
    %c0_i32 = arith.constant 0 : i32
    %c0_i32_0 = arith.constant 0 : i32
    %c0_i32_1 = arith.constant 0 : i32
    return %c0_i32, %c0_i32_0 : i32, i32
  }
  func.func @transform_4(%arg0: i32) -> (i32, i32) {
    %c0_i32 = arith.constant 0 : i32
    %c0_i32_0 = arith.constant 0 : i32
    %c0_i32_1 = arith.constant 0 : i32
    return %c0_i32, %c0_i32_0 : i32, i32
  }
  func.func @transform_5(%arg0: i32) -> (i32, i32) {
    %c0_i32 = arith.constant 0 : i32
    %c0_i32_0 = arith.constant 0 : i32
    %c0_i32_1 = arith.constant 0 : i32
    return %c0_i32, %c0_i32_0 : i32, i32
  }
  func.func @transform_6(%arg0: i32) -> (i32, i32) {
    %c0_i32 = arith.constant 0 : i32
    %c0_i32_0 = arith.constant 0 : i32
    %c0_i32_1 = arith.constant 0 : i32
    return %c0_i32, %c0_i32_0 : i32, i32
  }
  func.func @transform_7(%arg0: i32) -> (i32, i32) {
    %c0_i32 = arith.constant 0 : i32
    %c0_i32_0 = arith.constant 0 : i32
    %c0_i32_1 = arith.constant 0 : i32
    return %c0_i32, %c0_i32_0 : i32, i32
  }
  func.func @transform_8(%arg0: i32) -> (i32, i32) {
    %c0_i32 = arith.constant 0 : i32
    %c0_i32_0 = arith.constant 0 : i32
    %c0_i32_1 = arith.constant 0 : i32
    return %c0_i32, %c0_i32_0 : i32, i32
  }
  func.func @transform_9(%arg0: i32) -> (i32, i32) {
    %c0_i32 = arith.constant 0 : i32
    %c0_i32_0 = arith.constant 0 : i32
    %c0_i32_1 = arith.constant 0 : i32
    return %c0_i32, %c0_i32_0 : i32, i32
  }
  func.func @transform_10(%arg0: i32) -> (i32, i32) {
    %c0_i32 = arith.constant 0 : i32
    %c0_i32_0 = arith.constant 0 : i32
    %c0_i32_1 = arith.constant 0 : i32
    return %c0_i32, %c0_i32_0 : i32, i32
  }
  func.func @transform_11(%arg0: i32) -> (i32, i32) {
    %c0_i32 = arith.constant 0 : i32
    %c0_i32_0 = arith.constant 0 : i32
    return %arg0, %c0_i32 : i32, i32
  }
}

</mosaic_0001>

<llo_original>
// kernel: tpu_custom_call.1
$region0: #{tpu_custom_call.1}
  #allocation0 [shape = 'u32[]', space=smem, size = 0x4, offset = 0x4, fixed_abs, tag = 'smem constant byte address 0x4 - core index']
  #allocation1 [shape = 'u32[144,128]{1,0:T(1,128)}', space=vmem, size = 0x12000, scoped, tag = 'internal scratch']
  %s0 = inlined_call_operand.hbm [shape: f32[1024,512], index: 0, kind: input, shape index: {}]
  %s1 = inlined_call_operand.hbm [shape: bf16[512,256], index: 1, kind: input, shape index: {}]
  %s2 = inlined_call_operand.hbm [shape: f32[1,256], index: 2, kind: input, shape index: {}]
  %s3 = inlined_call_operand.vmem [shape: bf16[256,64], index: 3, kind: input, shape index: {}]
  %s4 = inlined_call_operand.hbm [shape: f32[1,64], index: 4, kind: input, shape index: {}]
  %s5 = inlined_call_operand.hbm [shape: bf16[64,64], index: 5, kind: input, shape index: {}]
  %s6 = inlined_call_operand.hbm [shape: f32[1,64], index: 6, kind: input, shape index: {}]
  %s7 = inlined_call_operand.hbm [shape: bf16[64,256], index: 7, kind: input, shape index: {}]
  %s8 = inlined_call_operand.hbm [shape: f32[1,256], index: 8, kind: input, shape index: {}]
  %s9 = inlined_call_operand.hbm [shape: bf16[256,512], index: 9, kind: input, shape index: {}]
  %s10 = inlined_call_operand.hbm [shape: f32[1,512], index: 10, kind: input, shape index: {}]
  %s11 = inlined_call_operand.hbm [shape: f32[1024,512], index: 11, kind: output, shape index: {}]
  %s12 = sld [smem:[#allocation0]]
  $region117: #{tpu_custom_call.1} parent=0
    _
  %s14 = ssub.s32 1, %s12
  %s15 = scalar_select 0, %s14, %s12
  $region1: #{tpu_custom_call.1} parent=0
    #allocation2 [shape = 'u8[2097152]{0}', space=vmem, size = 0x200000, scoped, tag = 'input window, operand 0']
    #allocation3 [shape = 's32[2]{0}', space=sflag, size = 0x8, scoped, tag = 'scoped memory for tpu_custom_call.1']
    #allocation4 [shape = 's32[2]{0}', space=sflag, size = 0x8, scoped, tag = 'scoped memory for tpu_custom_call.1']
    #allocation5 [shape = 'u8[262144]{0}', space=vmem, size = 0x40000, scoped, tag = 'input window, operand 1, single buffered']
    #allocation6 [shape = 's32[1]{0}', space=sflag, size = 0x4, scoped, tag = 'scoped memory for tpu_custom_call.1']
    #allocation7 [shape = 'u8[1024]{0}', space=vmem, size = 0x400, scoped, tag = 'input window, operand 2, single buffered']
    #allocation8 [shape = 'u8[512]{0}', space=vmem, size = 0x400, scoped, tag = 'input window, operand 4, single buffered']
    #allocation9 [shape = 's32[1]{0}', space=sflag, size = 0x4, scoped, tag = 'scoped memory for tpu_custom_call.1']
    #allocation10 [shape = 'u8[16384]{0}', space=vmem, size = 0x4000, scoped, tag = 'input window, operand 5, single buffered']
    #allocation11 [shape = 'u8[512]{0}', space=vmem, size = 0x400, scoped, tag = 'input window, operand 6, single buffered']
    #allocation12 [shape = 's32[1]{0}', space=sflag, size = 0x4, scoped, tag = 'scoped memory for tpu_custom_call.1']
    #allocation13 [shape = 'u8[32768]{0}', space=vmem, size = 0x8000, scoped, tag = 'input window, operand 7, single buffered']
    #allocation14 [shape = 'u8[1024]{0}', space=vmem, size = 0x400, scoped, tag = 'input window, operand 8, single buffered']
    #allocation15 [shape = 's32[1]{0}', space=sflag, size = 0x4, scoped, tag = 'scoped memory for tpu_custom_call.1']
    #allocation16 [shape = 'u8[262144]{0}', space=vmem, size = 0x40000, scoped, tag = 'input window, operand 9, single buffered']
    #allocation17 [shape = 'u8[2048]{0}', space=vmem, size = 0x800, scoped, tag = 'input window, operand 10, single buffered']
    #allocation18 [shape = 's32[1]{0}', space=sflag, size = 0x4, scoped, tag = 'scoped memory for tpu_custom_call.1']
    #allocation19 [shape = 'u8[2097152]{0}', space=vmem, size = 0x200000, scoped, tag = 'output window, operand 0']
    %16 = vsyncpa [#allocation3], 0
    %s17 = scalar_lea.sflag [#allocation3], 1
    %18 = vsyncpa %s17, 0
    %19 = vsyncpa [#allocation6], 0
    %20 = vsyncpa [#allocation9], 0
    %21 = vsyncpa [#allocation12], 0
    %22 = vsyncpa [#allocation15], 0
    %23 = vsyncpa [#allocation18], 0
    %24 = vsyncpa [#allocation4], 0
    %s25 = scalar_lea.sflag [#allocation4], 1
    %26 = vsyncpa %s25, 0
    loop: start=0, step=1, limit=4
    $region2: #{tpu_custom_call.1} parent=1 // loop_pre_header
      _
    $region3: #{tpu_custom_call.1} parent=1 // loop_header
      %s28 = sphi 0, %s32
      %p29 = scmp.ge.s32.totalorder %s28, 4
      %s38 = sphi 0, %s40
      %s41 = sphi 0, %s38
      %s42 = sphi 0, %s41
      %s58 = sphi 0, %s42
      %s62 = sphi 0, %s62
      %s64 = sphi 0, %s62
      %s65 = sphi 0, %s64
      %s79 = sphi 0, %s65
      %s83 = sphi 0, %s83
      %s85 = sphi 0, %s83
      %s86 = sphi 0, %s85
      %s100 = sphi 0, %s86
      %s104 = sphi 0, %s104
      %s106 = sphi 0, %s104
      %s107 = sphi 0, %s106
      %s121 = sphi 0, %s107
      %s125 = sphi 0, %s125
      %s127 = sphi 0, %s125
      %s128 = sphi 0, %s127
      %s142 = sphi 0, %s128
      %s146 = sphi 0, %s146
      %s148 = sphi 0, %s146
      %s149 = sphi 0, %s148
      %s163 = sphi 0, %s149
      %s167 = sphi 0, %s167
      %s169 = sphi 0, %s167
      %s170 = sphi 0, %s169
      %s184 = sphi 0, %s170
      %s188 = sphi 0, %s188
      %s190 = sphi 0, %s188
      %s191 = sphi 0, %s190
      %s205 = sphi 0, %s191
      %s209 = sphi 0, %s209
      %s211 = sphi 0, %s209
      %s212 = sphi 0, %s211
      %s226 = sphi 0, %s212
      %s230 = sphi 0, %s230
      %s232 = sphi 0, %s230
      %s233 = sphi 0, %s232
      %s247 = sphi 0, %s233
      %s251 = sphi 0, %s251
      %s253 = sphi 0, %s251
      %s254 = sphi 0, %s253
      %s268 = sphi 0, %s254
      %s274 = sphi 0, %s276
      %s277 = sphi 0, %s274
      %s278 = sphi 0, %s277
      %s294 = sphi 0, %s278
    $region4: #{tpu_custom_call.1} parent=1 // loop_header_branch
      %31 = sbr.rel (%p29) target = $region8
    $region5: #{tpu_custom_call.1} parent=1 // loop_body
      %s33 = ssub.s32 %s28, 1
      %s34 = ssub.s32 %s28, 2
      %s35 = sadd.s32 %s28, 1
      %s36 = ssub.s32 %s28, %s35
      %p37 = scmp.eq.s32.totalorder %s36, 0
      %s39 = sadd.s32 %s38, 1
      %s40 = scalar_select %p37, %s38, %s39
      %p43 = pneg %p37
      %p44 = scmp.eq.s32.totalorder %s28, 1
      %p45 = por %p43, %p44
      %p46 = scmp.ne.s32.totalorder %s38, %s41
      %p47 = scmp.eq.s32.totalorder %s28, 0
      %p48 = por %p46, %p47
      %p49 = scmp.ne.s32.totalorder %s38, %s41
      %p50 = scmp.eq.s32.totalorder %s33, 1
      %p51 = por %p49, %p50
      %p52 = scmp.ne.s32.totalorder %s41, %s42
      %p53 = scmp.eq.s32.totalorder %s33, 0
      %p54 = por %p52, %p53
      %p55 = scmp.ne.s32.totalorder %s41, %s42
      %p56 = scmp.eq.s32.totalorder %s34, 1
      %p57 = por %p55, %p56
      %p59 = scmp.ne.s32.totalorder %s42, %s58
      %p60 = scmp.eq.s32.totalorder %s34, 0
      %p61 = por %p59, %p60
      %s63 = sadd.s32 %s62, 1
      %p66 = scmp.eq.s32.totalorder %s28, 1
      %p67 = scmp.ne.s32.totalorder %s62, %s64
      %p68 = scmp.eq.s32.totalorder %s28, 0
      %p69 = por %p67, %p68
      %p70 = scmp.ne.s32.totalorder %s62, %s64
      %p71 = scmp.eq.s32.totalorder %s33, 1
      %p72 = por %p70, %p71
      %p73 = scmp.ne.s32.totalorder %s64, %s65
      %p74 = scmp.eq.s32.totalorder %s33, 0
      %p75 = por %p73, %p74
      %p76 = scmp.ne.s32.totalorder %s64, %s65
      %p77 = scmp.eq.s32.totalorder %s34, 1
      %p78 = por %p76, %p77
      %p80 = scmp.ne.s32.totalorder %s65, %s79
      %p81 = scmp.eq.s32.totalorder %s34, 0
      %p82 = por %p80, %p81
      %s84 = sadd.s32 %s83, 1
      %p87 = scmp.eq.s32.totalorder %s28, 1
      %p88 = scmp.ne.s32.totalorder %s83, %s85
      %p89 = scmp.eq.s32.totalorder %s28, 0
      %p90 = por %p88, %p89
      %p91 = scmp.ne.s32.totalorder %s83, %s85
      %p92 = scmp.eq.s32.totalorder %s33, 1
      %p93 = por %p91, %p92
      %p94 = scmp.ne.s32.totalorder %s85, %s86
      %p95 = scmp.eq.s32.totalorder %s33, 0
      %p96 = por %p94, %p95
      %p97 = scmp.ne.s32.totalorder %s85, %s86
      %p98 = scmp.eq.s32.totalorder %s34, 1
      %p99 = por %p97, %p98
      %p101 = scmp.ne.s32.totalorder %s86, %s100
      %p102 = scmp.eq.s32.totalorder %s34, 0
      %p103 = por %p101, %p102
      %s105 = sadd.s32 %s104, 1
      %p108 = scmp.eq.s32.totalorder %s28, 1
      %p109 = scmp.ne.s32.totalorder %s104, %s106
      %p110 = scmp.eq.s32.totalorder %s28, 0
      %p111 = por %p109, %p110
      %p112 = scmp.ne.s32.totalorder %s104, %s106
      %p113 = scmp.eq.s32.totalorder %s33, 1
      %p114 = por %p112, %p113
      %p115 = scmp.ne.s32.totalorder %s106, %s107
      %p116 = scmp.eq.s32.totalorder %s33, 0
      %p117 = por %p115, %p116
      %p118 = scmp.ne.s32.totalorder %s106, %s107
      %p119 = scmp.eq.s32.totalorder %s34, 1
      %p120 = por %p118, %p119
      %p122 = scmp.ne.s32.totalorder %s107, %s121
      %p123 = scmp.eq.s32.totalorder %s34, 0
      %p124 = por %p122, %p123
      %s126 = sadd.s32 %s125, 1
      %p129 = scmp.eq.s32.totalorder %s28, 1
      %p130 = scmp.ne.s32.totalorder %s125, %s127
      %p131 = scmp.eq.s32.totalorder %s28, 0
      %p132 = por %p130, %p131
      %p133 = scmp.ne.s32.totalorder %s125, %s127
      %p134 = scmp.eq.s32.totalorder %s33, 1
      %p135 = por %p133, %p134
      %p136 = scmp.ne.s32.totalorder %s127, %s128
      %p137 = scmp.eq.s32.totalorder %s33, 0
      %p138 = por %p136, %p137
      %p139 = scmp.ne.s32.totalorder %s127, %s128
      %p140 = scmp.eq.s32.totalorder %s34, 1
      %p141 = por %p139, %p140
      %p143 = scmp.ne.s32.totalorder %s128, %s142
      %p144 = scmp.eq.s32.totalorder %s34, 0
      %p145 = por %p143, %p144
      %s147 = sadd.s32 %s146, 1
      %p150 = scmp.eq.s32.totalorder %s28, 1
      %p151 = scmp.ne.s32.totalorder %s146, %s148
      %p152 = scmp.eq.s32.totalorder %s28, 0
      %p153 = por %p151, %p152
      %p154 = scmp.ne.s32.totalorder %s146, %s148
      %p155 = scmp.eq.s32.totalorder %s33, 1
      %p156 = por %p154, %p155
      %p157 = scmp.ne.s32.totalorder %s148, %s149
      %p158 = scmp.eq.s32.totalorder %s33, 0
      %p159 = por %p157, %p158
      %p160 = scmp.ne.s32.totalorder %s148, %s149
      %p161 = scmp.eq.s32.totalorder %s34, 1
      %p162 = por %p160, %p161
      %p164 = scmp.ne.s32.totalorder %s149, %s163
      %p165 = scmp.eq.s32.totalorder %s34, 0
      %p166 = por %p164, %p165
      %s168 = sadd.s32 %s167, 1
      %p171 = scmp.eq.s32.totalorder %s28, 1
      %p172 = scmp.ne.s32.totalorder %s167, %s169
      %p173 = scmp.eq.s32.totalorder %s28, 0
      %p174 = por %p172, %p173
      %p175 = scmp.ne.s32.totalorder %s167, %s169
      %p176 = scmp.eq.s32.totalorder %s33, 1
      %p177 = por %p175, %p176
      %p178 = scmp.ne.s32.totalorder %s169, %s170
      %p179 = scmp.eq.s32.totalorder %s33, 0
      %p180 = por %p178, %p179
      %p181 = scmp.ne.s32.totalorder %s169, %s170
      %p182 = scmp.eq.s32.totalorder %s34, 1
      %p183 = por %p181, %p182
      %p185 = scmp.ne.s32.totalorder %s170, %s184
      %p186 = scmp.eq.s32.totalorder %s34, 0
      %p187 = por %p185, %p186
      %s189 = sadd.s32 %s188, 1
      %p192 = scmp.eq.s32.totalorder %s28, 1
      %p193 = scmp.ne.s32.totalorder %s188, %s190
      %p194 = scmp.eq.s32.totalorder %s28, 0
      %p195 = por %p193, %p194
      %p196 = scmp.ne.s32.totalorder %s188, %s190
      %p197 = scmp.eq.s32.totalorder %s33, 1
      %p198 = por %p196, %p197
      %p199 = scmp.ne.s32.totalorder %s190, %s191
      %p200 = scmp.eq.s32.totalorder %s33, 0
      %p201 = por %p199, %p200
      %p202 = scmp.ne.s32.totalorder %s190, %s191
      %p203 = scmp.eq.s32.totalorder %s34, 1
      %p204 = por %p202, %p203
      %p206 = scmp.ne.s32.totalorder %s191, %s205
      %p207 = scmp.eq.s32.totalorder %s34, 0
      %p208 = por %p206, %p207
      %s210 = sadd.s32 %s209, 1
      %p213 = scmp.eq.s32.totalorder %s28, 1
      %p214 = scmp.ne.s32.totalorder %s209, %s211
      %p215 = scmp.eq.s32.totalorder %s28, 0
      %p216 = por %p214, %p215
      %p217 = scmp.ne.s32.totalorder %s209, %s211
      %p218 = scmp.eq.s32.totalorder %s33, 1
      %p219 = por %p217, %p218
      %p220 = scmp.ne.s32.totalorder %s211, %s212
      %p221 = scmp.eq.s32.totalorder %s33, 0
      %p222 = por %p220, %p221
      %p223 = scmp.ne.s32.totalorder %s211, %s212
      %p224 = scmp.eq.s32.totalorder %s34, 1
      %p225 = por %p223, %p224
      %p227 = scmp.ne.s32.totalorder %s212, %s226
      %p228 = scmp.eq.s32.totalorder %s34, 0
      %p229 = por %p227, %p228
      %s231 = sadd.s32 %s230, 1
      %p234 = scmp.eq.s32.totalorder %s28, 1
      %p235 = scmp.ne.s32.totalorder %s230, %s232
      %p236 = scmp.eq.s32.totalorder %s28, 0
      %p237 = por %p235, %p236
      %p238 = scmp.ne.s32.totalorder %s230, %s232
      %p239 = scmp.eq.s32.totalorder %s33, 1
      %p240 = por %p238, %p239
      %p241 = scmp.ne.s32.totalorder %s232, %s233
      %p242 = scmp.eq.s32.totalorder %s33, 0
      %p243 = por %p241, %p242
      %p244 = scmp.ne.s32.totalorder %s232, %s233
      %p245 = scmp.eq.s32.totalorder %s34, 1
      %p246 = por %p244, %p245
      %p248 = scmp.ne.s32.totalorder %s233, %s247
      %p249 = scmp.eq.s32.totalorder %s34, 0
      %p250 = por %p248, %p249
      %s252 = sadd.s32 %s251, 1
      %p255 = scmp.eq.s32.totalorder %s28, 1
      %p256 = scmp.ne.s32.totalorder %s251, %s253
      %p257 = scmp.eq.s32.totalorder %s28, 0
      %p258 = por %p256, %p257
      %p259 = scmp.ne.s32.totalorder %s251, %s253
      %p260 = scmp.eq.s32.totalorder %s33, 1
      %p261 = por %p259, %p260
      %p262 = scmp.ne.s32.totalorder %s253, %s254
      %p263 = scmp.eq.s32.totalorder %s33, 0
      %p264 = por %p262, %p263
      %p265 = scmp.ne.s32.totalorder %s253, %s254
      %p266 = scmp.eq.s32.totalorder %s34, 1
      %p267 = por %p265, %p266
      %p269 = scmp.ne.s32.totalorder %s254, %s268
      %p270 = scmp.eq.s32.totalorder %s34, 0
      %p271 = por %p269, %p270
      %s272 = ssub.s32 %s28, %s35
      %p273 = scmp.eq.s32.totalorder %s272, 0
      %s275 = sadd.s32 %s274, 1
      %s276 = scalar_select %p273, %s274, %s275
      %p279 = pneg %p273
      %p280 = scmp.eq.s32.totalorder %s28, 1
      %p281 = por %p279, %p280
      %p282 = scmp.ne.s32.totalorder %s274, %s277
      %p283 = scmp.eq.s32.totalorder %s28, 0
      %p284 = por %p282, %p283
      %p285 = scmp.ne.s32.totalorder %s274, %s277
      %p286 = scmp.eq.s32.totalorder %s33, 1
      %p287 = por %p285, %p286
      %p288 = scmp.ne.s32.totalorder %s277, %s278
      %p289 = scmp.eq.s32.totalorder %s33, 0
      %p290 = por %p288, %p289
      %p291 = scmp.ne.s32.totalorder %s277, %s278
      %p292 = scmp.eq.s32.totalorder %s34, 1
      %p293 = por %p291, %p292
      %p295 = scmp.ne.s32.totalorder %s278, %s294
      %p296 = scmp.eq.s32.totalorder %s34, 0
      %p297 = por %p295, %p296
      %p298 = scmp.le.s32.totalorder 1, %s28
      %p299 = scmp.lt.s32.totalorder %s28, 3
      %p300 = pnand %p298, %p299
      %p301 = pneg %p300
      // Predicated region
      $region9: #{tpu_custom_call.1} parent=5 // pred_check
        _
      $region10: #{tpu_custom_call.1} parent=5 // pred_check_branch
        %303 = sbr.rel (%p300) target = $region12
      $region11: #{tpu_custom_call.1} parent=5 // pred_region
        %s304 = ssub.s32 %s28, 1
        // Predicated region
        $region13: #{tpu_custom_call.1} parent=11 // pred_check
          %p305 = pneg %p75
        $region14: #{tpu_custom_call.1} parent=11 // pred_check_branch
          %307 = sbr.rel (%p305) target = $region16
        $region15: #{tpu_custom_call.1} parent=11 // pred_region
          %s309 = ssub.s32 8192, 8192
          %310 = vsyncadd [#allocation6], %s309
          %s311 = sshll.u32 [#allocation5], 4
          %s312 = int_to_ptr.vmem [resolvable:$true] %s311
          %317 = dma.hbm_to_vmem [thread:$0]  %s1, 8192, %s312, [#allocation6], 128, 128, 8
        $region16: #{tpu_custom_call.1} parent=11 // pred_fallthru
          _
        // Predicated region
        $region17: #{tpu_custom_call.1} parent=11 // pred_check
          %p318 = pneg %p96
        $region18: #{tpu_custom_call.1} parent=11 // pred_check_branch
          %320 = sbr.rel (%p318) target = $region20
        $region19: #{tpu_custom_call.1} parent=11 // pred_region
          %s322 = ssub.s32 32, 32
          %323 = vsyncadd [#allocation6], %s322
          %s325 = sshll.u32 [#allocation7], 4
          %s326 = int_to_ptr.vmem [resolvable:$true] %s325
          %328 = dma.hbm_to_vmem [thread:$0]  %s2, 32, %s326, [#allocation6]
        $region20: #{tpu_custom_call.1} parent=11 // pred_fallthru
          _
        // Predicated region
        $region21: #{tpu_custom_call.1} parent=11 // pred_check
          %p329 = pneg %p117
        $region22: #{tpu_custom_call.1} parent=11 // pred_check_branch
          %331 = sbr.rel (%p329) target = $region24
        $region23: #{tpu_custom_call.1} parent=11 // pred_region
          _
        $region24: #{tpu_custom_call.1} parent=11 // pred_fallthru
          _
        // Predicated region
        $region25: #{tpu_custom_call.1} parent=11 // pred_check
          %p332 = pneg %p138
        $region26: #{tpu_custom_call.1} parent=11 // pred_check_branch
          %334 = sbr.rel (%p332) target = $region28
        $region27: #{tpu_custom_call.1} parent=11 // pred_region
          %s336 = ssub.s32 16, 16
          %337 = vsyncadd [#allocation9], %s336
          %s339 = sshll.u32 [#allocation8], 4
          %s340 = int_to_ptr.vmem [resolvable:$true] %s339
          %342 = dma.hbm_to_vmem [thread:$0]  %s4, 16, %s340, [#allocation9]
        $region28: #{tpu_custom_call.1} parent=11 // pred_fallthru
          _
        // Predicated region
        $region29: #{tpu_custom_call.1} parent=11 // pred_check
          %p343 = pneg %p159
        $region30: #{tpu_custom_call.1} parent=11 // pred_check_branch
          %345 = sbr.rel (%p343) target = $region32
        $region31: #{tpu_custom_call.1} parent=11 // pred_region
          %s347 = ssub.s32 512, 512
          %348 = vsyncadd [#allocation9], %s347
          %s349 = sshll.u32 [#allocation10], 4
          %s350 = int_to_ptr.vmem [resolvable:$true] %s349
          %355 = dma.hbm_to_vmem [thread:$0]  %s5, 512, %s350, [#allocation9], 64, 64, 4
        $region32: #{tpu_custom_call.1} parent=11 // pred_fallthru
          _
        // Predicated region
        $region33: #{tpu_custom_call.1} parent=11 // pred_check
          %p356 = pneg %p180
        $region34: #{tpu_custom_call.1} parent=11 // pred_check_branch
          %358 = sbr.rel (%p356) target = $region36
        $region35: #{tpu_custom_call.1} parent=11 // pred_region
          %s360 = ssub.s32 16, 16
          %361 = vsyncadd [#allocation12], %s360
          %s363 = sshll.u32 [#allocation11], 4
          %s364 = int_to_ptr.vmem [resolvable:$true] %s363
          %366 = dma.hbm_to_vmem [thread:$0]  %s6, 16, %s364, [#allocation12]
        $region36: #{tpu_custom_call.1} parent=11 // pred_fallthru
          _
        // Predicated region
        $region37: #{tpu_custom_call.1} parent=11 // pred_check
          %p367 = pneg %p201
        $region38: #{tpu_custom_call.1} parent=11 // pred_check_branch
          %369 = sbr.rel (%p367) target = $region40
        $region39: #{tpu_custom_call.1} parent=11 // pred_region
          %s371 = ssub.s32 1024, 1024
          %372 = vsyncadd [#allocation12], %s371
          %s373 = sshll.u32 [#allocation13], 4
          %s374 = int_to_ptr.vmem [resolvable:$true] %s373
          %379 = dma.hbm_to_vmem [thread:$0]  %s7, 1024, %s374, [#allocation12], 128, 128, 8
        $region40: #{tpu_custom_call.1} parent=11 // pred_fallthru
          _
        // Predicated region
        $region41: #{tpu_custom_call.1} parent=11 // pred_check
          %p380 = pneg %p222
        $region42: #{tpu_custom_call.1} parent=11 // pred_check_branch
          %382 = sbr.rel (%p380) target = $region44
        $region43: #{tpu_custom_call.1} parent=11 // pred_region
          %s384 = ssub.s32 32, 32
          %385 = vsyncadd [#allocation15], %s384
          %s387 = sshll.u32 [#allocation14], 4
          %s388 = int_to_ptr.vmem [resolvable:$true] %s387
          %390 = dma.hbm_to_vmem [thread:$0]  %s8, 32, %s388, [#allocation15]
        $region44: #{tpu_custom_call.1} parent=11 // pred_fallthru
          _
        // Predicated region
        $region45: #{tpu_custom_call.1} parent=11 // pred_check
          %p391 = pneg %p243
        $region46: #{tpu_custom_call.1} parent=11 // pred_check_branch
          %393 = sbr.rel (%p391) target = $region48
        $region47: #{tpu_custom_call.1} parent=11 // pred_region
          %s395 = ssub.s32 8192, 8192
          %396 = vsyncadd [#allocation15], %s395
          %s397 = sshll.u32 [#allocation16], 4
          %s398 = int_to_ptr.vmem [resolvable:$true] %s397
          %403 = dma.hbm_to_vmem [thread:$0]  %s9, 8192, %s398, [#allocation15], 256, 256, 16
        $region48: #{tpu_custom_call.1} parent=11 // pred_fallthru
          _
        // Predicated region
        $region49: #{tpu_custom_call.1} parent=11 // pred_check
          %p404 = pneg %p264
        $region50: #{tpu_custom_call.1} parent=11 // pred_check_branch
          %406 = sbr.rel (%p404) target = $region52
        $region51: #{tpu_custom_call.1} parent=11 // pred_region
          %s408 = ssub.s32 64, 64
          %409 = vsyncadd [#allocation18], %s408
          %s411 = sshll.u32 [#allocation17], 4
          %s412 = int_to_ptr.vmem [resolvable:$true] %s411
          %414 = dma.hbm_to_vmem [thread:$0]  %s10, 64, %s412, [#allocation18]
        $region52: #{tpu_custom_call.1} parent=11 // pred_fallthru
          _
      $region12: #{tpu_custom_call.1} parent=5 // pred_fallthru
        _
      %p415 = scmp.lt.s32.totalorder %s28, 2
      // Predicated region
      $region53: #{tpu_custom_call.1} parent=5 // pred_check
        %p416 = pneg %p415
      $region54: #{tpu_custom_call.1} parent=5 // pred_check_branch
        %418 = sbr.rel (%p416) target = $region56
      $region55: #{tpu_custom_call.1} parent=5 // pred_region
        // Predicated region
        $region57: #{tpu_custom_call.1} parent=55 // pred_check
          %p419 = pneg %p48
        $region58: #{tpu_custom_call.1} parent=55 // pred_check_branch
          %421 = sbr.rel (%p419) target = $region60
        $region59: #{tpu_custom_call.1} parent=55 // pred_region
          %s422 = sand.u32 %s38, 1
          %s423 = scalar_lea.sflag [#allocation3], %s422
          %s424 = sand.u32 %s38, 1
          %s425 = smul.addr %s424, 2048
          %s426 = scalar_lea.vmem [#allocation2], %s425
          %s427 = smul.u32 64, %s28
          %s429 = ssub.s32 32768, 32768
          %430 = vsyncadd %s423, %s429
          %s431 = smul.addr %s427, 4
          %s432 = smul.addr %s431, 128
          %s433 = scalar_lea.hbm %s0, %s432
          %s434 = sshll.u32 %s426, 4
          %s435 = int_to_ptr.vmem [resolvable:$true] %s434
          %440 = dma.hbm_to_vmem [thread:$0]  %s433, 32768, %s435, %s423, 512, 512, 32
        $region60: #{tpu_custom_call.1} parent=55 // pred_fallthru
          _
      $region56: #{tpu_custom_call.1} parent=5 // pred_fallthru
        _
      %p441 = scmp.le.s32.totalorder 1, %s28
      %p442 = scmp.lt.s32.totalorder %s28, 3
      %p443 = pnand %p441, %p442
      %p444 = pneg %p443
      // Predicated region
      $region61: #{tpu_custom_call.1} parent=5 // pred_check
        _
      $region62: #{tpu_custom_call.1} parent=5 // pred_check_branch
        %446 = sbr.rel (%p443) target = $region64
      $region63: #{tpu_custom_call.1} parent=5 // pred_region
        %s447 = ssub.s32 %s28, 1
        %s448 = sand.u32 %s41, 1
        %s449 = scalar_lea.sflag [#allocation3], %s448
        %s450 = sand.u32 %s41, 1
        %s451 = smul.addr %s450, 2048
        %s452 = scalar_lea.vmem [#allocation2], %s451
        // Predicated region
        $region65: #{tpu_custom_call.1} parent=63 // pred_check
          %p453 = pneg %p54
        $region66: #{tpu_custom_call.1} parent=63 // pred_check_branch
          %455 = sbr.rel (%p453) target = $region68
        $region67: #{tpu_custom_call.1} parent=63 // pred_region
          %456 = dma.done %s449, 32768
        $region68: #{tpu_custom_call.1} parent=63 // pred_fallthru
          _
        // Predicated region
        $region69: #{tpu_custom_call.1} parent=63 // pred_check
          %p457 = pneg %p75
        $region70: #{tpu_custom_call.1} parent=63 // pred_check_branch
          %459 = sbr.rel (%p457) target = $region72
        $region71: #{tpu_custom_call.1} parent=63 // pred_region
          %460 = dma.done [#allocation6], 8192
        $region72: #{tpu_custom_call.1} parent=63 // pred_fallthru
          _
        // Predicated region
        $region73: #{tpu_custom_call.1} parent=63 // pred_check
          %p461 = pneg %p96
        $region74: #{tpu_custom_call.1} parent=63 // pred_check_branch
          %463 = sbr.rel (%p461) target = $region76
        $region75: #{tpu_custom_call.1} parent=63 // pred_region
          %464 = dma.done [#allocation6], 32
        $region76: #{tpu_custom_call.1} parent=63 // pred_fallthru
          _
        // Predicated region
        $region77: #{tpu_custom_call.1} parent=63 // pred_check
          %p465 = pneg %p138
        $region78: #{tpu_custom_call.1} parent=63 // pred_check_branch
          %467 = sbr.rel (%p465) target = $region80
        $region79: #{tpu_custom_call.1} parent=63 // pred_region
          %468 = dma.done [#allocation9], 16
        $region80: #{tpu_custom_call.1} parent=63 // pred_fallthru
          _
        // Predicated region
        $region81: #{tpu_custom_call.1} parent=63 // pred_check
          %p469 = pneg %p159
        $region82: #{tpu_custom_call.1} parent=63 // pred_check_branch
          %471 = sbr.rel (%p469) target = $region84
        $region83: #{tpu_custom_call.1} parent=63 // pred_region
          %472 = dma.done [#allocation9], 512
        $region84: #{tpu_custom_call.1} parent=63 // pred_fallthru
          _
        // Predicated region
        $region85: #{tpu_custom_call.1} parent=63 // pred_check
          %p473 = pneg %p180
        $region86: #{tpu_custom_call.1} parent=63 // pred_check_branch
          %475 = sbr.rel (%p473) target = $region88
        $region87: #{tpu_custom_call.1} parent=63 // pred_region
          %476 = dma.done [#allocation12], 16
        $region88: #{tpu_custom_call.1} parent=63 // pred_fallthru
          _
        // Predicated region
        $region89: #{tpu_custom_call.1} parent=63 // pred_check
          %p477 = pneg %p201
        $region90: #{tpu_custom_call.1} parent=63 // pred_check_branch
          %479 = sbr.rel (%p477) target = $region92
        $region91: #{tpu_custom_call.1} parent=63 // pred_region
          %480 = dma.done [#allocation12], 1024
        $region92: #{tpu_custom_call.1} parent=63 // pred_fallthru
          _
        // Predicated region
        $region93: #{tpu_custom_call.1} parent=63 // pred_check
          %p481 = pneg %p222
        $region94: #{tpu_custom_call.1} parent=63 // pred_check_branch
          %483 = sbr.rel (%p481) target = $region96
        $region95: #{tpu_custom_call.1} parent=63 // pred_region
          %484 = dma.done [#allocation15], 32
        $region96: #{tpu_custom_call.1} parent=63 // pred_fallthru
          _
        // Predicated region
        $region97: #{tpu_custom_call.1} parent=63 // pred_check
          %p485 = pneg %p243
        $region98: #{tpu_custom_call.1} parent=63 // pred_check_branch
          %487 = sbr.rel (%p485) target = $region100
        $region99: #{tpu_custom_call.1} parent=63 // pred_region
          %488 = dma.done [#allocation15], 8192
        $region100: #{tpu_custom_call.1} parent=63 // pred_fallthru
          _
        // Predicated region
        $region101: #{tpu_custom_call.1} parent=63 // pred_check
          %p489 = pneg %p264
        $region102: #{tpu_custom_call.1} parent=63 // pred_check_branch
          %491 = sbr.rel (%p489) target = $region104
        $region103: #{tpu_custom_call.1} parent=63 // pred_region
          %492 = dma.done [#allocation18], 64
        $region104: #{tpu_custom_call.1} parent=63 // pred_fallthru
          _
        %s493 = sand.u32 %s41, 1
        %s494 = scalar_lea.sflag [#allocation3], %s493
        %s495 = sand.u32 %s41, 1
        %s496 = smul.addr %s495, 2048
        %s497 = scalar_lea.vmem [#allocation2], %s496
        %p498 = pneg %p54
        %p499 = pneg %p51
        %p500 = pneg %p75
        %p501 = pneg %p72
        %p502 = pneg %p96
        %p503 = pneg %p93
        %p504 = pneg %p117
        %p505 = pneg %p114
        %p506 = pneg %p138
        %p507 = pneg %p135
        %p508 = pneg %p159
        %p509 = pneg %p156
        %p510 = pneg %p180
        %p511 = pneg %p177
        %p512 = pneg %p201
        %p513 = pneg %p198
        %p514 = pneg %p222
        %p515 = pneg %p219
        %p516 = pneg %p243
        %p517 = pneg %p240
        %p518 = pneg %p264
        %p519 = pneg %p261
        %p520 = pneg %p290
        %p521 = pneg %p287
        %s522 = sand.u32 %s277, 1
        %s523 = scalar_lea.sflag [#allocation4], %s522
        %s524 = sand.u32 %s277, 1
        %s525 = smul.addr %s524, 2048
        %s526 = scalar_lea.vmem [#allocation19], %s525
        %s527 = smul.u32 64, %s33
        %s528 = smul.u32 64, %s33
        %v530 = vld [vmem:[%s452] sm:$0xff]
        %v531 = vld [vmem:[%s452 + $0x8] sm:$0xff]
        %v532 = vld [vmem:[%s452 + $0x10] sm:$0xff]
        %v533 = vld [vmem:[%s452 + $0x18] sm:$0xff]
        %v534 = vld [vmem:[%s452 + $0x20] sm:$0xff]
        %v535 = vld [vmem:[%s452 + $0x28] sm:$0xff]
        %v536 = vld [vmem:[%s452 + $0x30] sm:$0xff]
        %v537 = vld [vmem:[%s452 + $0x38] sm:$0xff]
        %v538 = vld [vmem:[%s452 + $0x40] sm:$0xff]
        %v539 = vld [vmem:[%s452 + $0x48] sm:$0xff]
        %v540 = vld [vmem:[%s452 + $0x50] sm:$0xff]
        %v541 = vld [vmem:[%s452 + $0x58] sm:$0xff]
        %v542 = vld [vmem:[%s452 + $0x60] sm:$0xff]
        %v543 = vld [vmem:[%s452 + $0x68] sm:$0xff]
        %v544 = vld [vmem:[%s452 + $0x70] sm:$0xff]
        %v545 = vld [vmem:[%s452 + $0x78] sm:$0xff]
        %v546 = vld [vmem:[%s452 + $0x80] sm:$0xff]
        %v547 = vld [vmem:[%s452 + $0x88] sm:$0xff]
        %v548 = vld [vmem:[%s452 + $0x90] sm:$0xff]
        %v549 = vld [vmem:[%s452 + $0x98] sm:$0xff]
        %v550 = vld [vmem:[%s452 + $0xa0] sm:$0xff]
        %v551 = vld [vmem:[%s452 + $0xa8] sm:$0xff]
        %v552 = vld [vmem:[%s452 + $0xb0] sm:$0xff]
        %v553 = vld [vmem:[%s452 + $0xb8] sm:$0xff]
        %v554 = vld [vmem:[%s452 + $0xc0] sm:$0xff]
        %v555 = vld [vmem:[%s452 + $0xc8] sm:$0xff]
        %v556 = vld [vmem:[%s452 + $0xd0] sm:$0xff]
        %v557 = vld [vmem:[%s452 + $0xd8] sm:$0xff]
        %v558 = vld [vmem:[%s452 + $0xe0] sm:$0xff]
        %v559 = vld [vmem:[%s452 + $0xe8] sm:$0xff]
        %v560 = vld [vmem:[%s452 + $0xf0] sm:$0xff]
        %v561 = vld [vmem:[%s452 + $0xf8] sm:$0xff]
        %v562 = vld [vmem:[%s452 + $0x100] sm:$0xff]
        %v563 = vld [vmem:[%s452 + $0x108] sm:$0xff]
        %v564 = vld [vmem:[%s452 + $0x110] sm:$0xff]
        %v565 = vld [vmem:[%s452 + $0x118] sm:$0xff]
        %v566 = vld [vmem:[%s452 + $0x120] sm:$0xff]
        %v567 = vld [vmem:[%s452 + $0x128] sm:$0xff]
        %v568 = vld [vmem:[%s452 + $0x130] sm:$0xff]
        %v569 = vld [vmem:[%s452 + $0x138] sm:$0xff]
        %v570 = vld [vmem:[%s452 + $0x140] sm:$0xff]
        %v571 = vld [vmem:[%s452 + $0x148] sm:$0xff]
        %v572 = vld [vmem:[%s452 + $0x150] sm:$0xff]
        %v573 = vld [vmem:[%s452 + $0x158] sm:$0xff]
        %v574 = vld [vmem:[%s452 + $0x160] sm:$0xff]
        %v575 = vld [vmem:[%s452 + $0x168] sm:$0xff]
        %v576 = vld [vmem:[%s452 + $0x170] sm:$0xff]
        %v577 = vld [vmem:[%s452 + $0x178] sm:$0xff]
        %v578 = vld [vmem:[%s452 + $0x180] sm:$0xff]
        %v579 = vld [vmem:[%s452 + $0x188] sm:$0xff]
        %v580 = vld [vmem:[%s452 + $0x190] sm:$0xff]
        %v581 = vld [vmem:[%s452 + $0x198] sm:$0xff]
        %v582 = vld [vmem:[%s452 + $0x1a0] sm:$0xff]
        %v583 = vld [vmem:[%s452 + $0x1a8] sm:$0xff]
        %v584 = vld [vmem:[%s452 + $0x1b0] sm:$0xff]
        %v585 = vld [vmem:[%s452 + $0x1b8] sm:$0xff]
        %v586 = vld [vmem:[%s452 + $0x1c0] sm:$0xff]
        %v587 = vld [vmem:[%s452 + $0x1c8] sm:$0xff]
        %v588 = vld [vmem:[%s452 + $0x1d0] sm:$0xff]
        %v589 = vld [vmem:[%s452 + $0x1d8] sm:$0xff]
        %v590 = vld [vmem:[%s452 + $0x1e0] sm:$0xff]
        %v591 = vld [vmem:[%s452 + $0x1e8] sm:$0xff]
        %v592 = vld [vmem:[%s452 + $0x1f0] sm:$0xff]
        %v593 = vld [vmem:[%s452 + $0x1f8] sm:$0xff]
        %v594 = vld [vmem:[%s452 + $0x200] sm:$0xff]
        %v595 = vld [vmem:[%s452 + $0x208] sm:$0xff]
        %v596 = vld [vmem:[%s452 + $0x210] sm:$0xff]
        %v597 = vld [vmem:[%s452 + $0x218] sm:$0xff]
        %v598 = vld [vmem:[%s452 + $0x220] sm:$0xff]
        %v599 = vld [vmem:[%s452 + $0x228] sm:$0xff]
        %v600 = vld [vmem:[%s452 + $0x230] sm:$0xff]
        %v601 = vld [vmem:[%s452 + $0x238] sm:$0xff]
        %v602 = vld [vmem:[%s452 + $0x240] sm:$0xff]
        %v603 = vld [vmem:[%s452 + $0x248] sm:$0xff]
        %v604 = vld [vmem:[%s452 + $0x250] sm:$0xff]
        %v605 = vld [vmem:[%s452 + $0x258] sm:$0xff]
        %v606 = vld [vmem:[%s452 + $0x260] sm:$0xff]
        %v607 = vld [vmem:[%s452 + $0x268] sm:$0xff]
        %v608 = vld [vmem:[%s452 + $0x270] sm:$0xff]
        %v609 = vld [vmem:[%s452 + $0x278] sm:$0xff]
        %v610 = vld [vmem:[%s452 + $0x280] sm:$0xff]
        %v611 = vld [vmem:[%s452 + $0x288] sm:$0xff]
        %v612 = vld [vmem:[%s452 + $0x290] sm:$0xff]
        %v613 = vld [vmem:[%s452 + $0x298] sm:$0xff]
        %v614 = vld [vmem:[%s452 + $0x2a0] sm:$0xff]
        %v615 = vld [vmem:[%s452 + $0x2a8] sm:$0xff]
        %v616 = vld [vmem:[%s452 + $0x2b0] sm:$0xff]
        %v617 = vld [vmem:[%s452 + $0x2b8] sm:$0xff]
        %v618 = vld [vmem:[%s452 + $0x2c0] sm:$0xff]
        %v619 = vld [vmem:[%s452 + $0x2c8] sm:$0xff]
        %v620 = vld [vmem:[%s452 + $0x2d0] sm:$0xff]
        %v621 = vld [vmem:[%s452 + $0x2d8] sm:$0xff]
        %v622 = vld [vmem:[%s452 + $0x2e0] sm:$0xff]
        %v623 = vld [vmem:[%s452 + $0x2e8] sm:$0xff]
        %v624 = vld [vmem:[%s452 + $0x2f0] sm:$0xff]
        %v625 = vld [vmem:[%s452 + $0x2f8] sm:$0xff]
        %v626 = vld [vmem:[%s452 + $0x300] sm:$0xff]
        %v627 = vld [vmem:[%s452 + $0x308] sm:$0xff]
        %v628 = vld [vmem:[%s452 + $0x310] sm:$0xff]
        %v629 = vld [vmem:[%s452 + $0x318] sm:$0xff]
        %v630 = vld [vmem:[%s452 + $0x320] sm:$0xff]
        %v631 = vld [vmem:[%s452 + $0x328] sm:$0xff]
        %v632 = vld [vmem:[%s452 + $0x330] sm:$0xff]
        %v633 = vld [vmem:[%s452 + $0x338] sm:$0xff]
        %v634 = vld [vmem:[%s452 + $0x340] sm:$0xff]
        %v635 = vld [vmem:[%s452 + $0x348] sm:$0xff]
        %v636 = vld [vmem:[%s452 + $0x350] sm:$0xff]
        %v637 = vld [vmem:[%s452 + $0x358] sm:$0xff]
        %v638 = vld [vmem:[%s452 + $0x360] sm:$0xff]
        %v639 = vld [vmem:[%s452 + $0x368] sm:$0xff]
        %v640 = vld [vmem:[%s452 + $0x370] sm:$0xff]
        %v641 = vld [vmem:[%s452 + $0x378] sm:$0xff]
        %v642 = vld [vmem:[%s452 + $0x380] sm:$0xff]
        %v643 = vld [vmem:[%s452 + $0x388] sm:$0xff]
        %v644 = vld [vmem:[%s452 + $0x390] sm:$0xff]
        %v645 = vld [vmem:[%s452 + $0x398] sm:$0xff]
        %v646 = vld [vmem:[%s452 + $0x3a0] sm:$0xff]
        %v647 = vld [vmem:[%s452 + $0x3a8] sm:$0xff]
        %v648 = vld [vmem:[%s452 + $0x3b0] sm:$0xff]
        %v649 = vld [vmem:[%s452 + $0x3b8] sm:$0xff]
        %v650 = vld [vmem:[%s452 + $0x3c0] sm:$0xff]
        %v651 = vld [vmem:[%s452 + $0x3c8] sm:$0xff]
        %v652 = vld [vmem:[%s452 + $0x3d0] sm:$0xff]
        %v653 = vld [vmem:[%s452 + $0x3d8] sm:$0xff]
        %v654 = vld [vmem:[%s452 + $0x3e0] sm:$0xff]
        %v655 = vld [vmem:[%s452 + $0x3e8] sm:$0xff]
        %v656 = vld [vmem:[%s452 + $0x3f0] sm:$0xff]
        %v657 = vld [vmem:[%s452 + $0x3f8] sm:$0xff]
        %v658 = vld [vmem:[%s452 + $0x400] sm:$0xff]
        %v659 = vld [vmem:[%s452 + $0x408] sm:$0xff]
        %v660 = vld [vmem:[%s452 + $0x410] sm:$0xff]
        %v661 = vld [vmem:[%s452 + $0x418] sm:$0xff]
        %v662 = vld [vmem:[%s452 + $0x420] sm:$0xff]
        %v663 = vld [vmem:[%s452 + $0x428] sm:$0xff]
        %v664 = vld [vmem:[%s452 + $0x430] sm:$0xff]
        %v665 = vld [vmem:[%s452 + $0x438] sm:$0xff]
        %v666 = vld [vmem:[%s452 + $0x440] sm:$0xff]
        %v667 = vld [vmem:[%s452 + $0x448] sm:$0xff]
        %v668 = vld [vmem:[%s452 + $0x450] sm:$0xff]
        %v669 = vld [vmem:[%s452 + $0x458] sm:$0xff]
        %v670 = vld [vmem:[%s452 + $0x460] sm:$0xff]
        %v671 = vld [vmem:[%s452 + $0x468] sm:$0xff]
        %v672 = vld [vmem:[%s452 + $0x470] sm:$0xff]
        %v673 = vld [vmem:[%s452 + $0x478] sm:$0xff]
        %v674 = vld [vmem:[%s452 + $0x480] sm:$0xff]
        %v675 = vld [vmem:[%s452 + $0x488] sm:$0xff]
        %v676 = vld [vmem:[%s452 + $0x490] sm:$0xff]
        %v677 = vld [vmem:[%s452 + $0x498] sm:$0xff]
        %v678 = vld [vmem:[%s452 + $0x4a0] sm:$0xff]
        %v679 = vld [vmem:[%s452 + $0x4a8] sm:$0xff]
        %v680 = vld [vmem:[%s452 + $0x4b0] sm:$0xff]
        %v681 = vld [vmem:[%s452 + $0x4b8] sm:$0xff]
        %v682 = vld [vmem:[%s452 + $0x4c0] sm:$0xff]
        %v683 = vld [vmem:[%s452 + $0x4c8] sm:$0xff]
        %v684 = vld [vmem:[%s452 + $0x4d0] sm:$0xff]
        %v685 = vld [vmem:[%s452 + $0x4d8] sm:$0xff]
        %v686 = vld [vmem:[%s452 + $0x4e0] sm:$0xff]
        %v687 = vld [vmem:[%s452 + $0x4e8] sm:$0xff]
        %v688 = vld [vmem:[%s452 + $0x4f0] sm:$0xff]
        %v689 = vld [vmem:[%s452 + $0x4f8] sm:$0xff]
        %v690 = vld [vmem:[%s452 + $0x500] sm:$0xff]
        %v691 = vld [vmem:[%s452 + $0x508] sm:$0xff]
        %v692 = vld [vmem:[%s452 + $0x510] sm:$0xff]
        %v693 = vld [vmem:[%s452 + $0x518] sm:$0xff]
        %v694 = vld [vmem:[%s452 + $0x520] sm:$0xff]
        %v695 = vld [vmem:[%s452 + $0x528] sm:$0xff]
        %v696 = vld [vmem:[%s452 + $0x530] sm:$0xff]
        %v697 = vld [vmem:[%s452 + $0x538] sm:$0xff]
        %v698 = vld [vmem:[%s452 + $0x540] sm:$0xff]
        %v699 = vld [vmem:[%s452 + $0x548] sm:$0xff]
        %v700 = vld [vmem:[%s452 + $0x550] sm:$0xff]
        %v701 = vld [vmem:[%s452 + $0x558] sm:$0xff]
        %v702 = vld [vmem:[%s452 + $0x560] sm:$0xff]
        %v703 = vld [vmem:[%s452 + $0x568] sm:$0xff]
        %v704 = vld [vmem:[%s452 + $0x570] sm:$0xff]
        %v705 = vld [vmem:[%s452 + $0x578] sm:$0xff]
        %v706 = vld [vmem:[%s452 + $0x580] sm:$0xff]
        %v707 = vld [vmem:[%s452 + $0x588] sm:$0xff]
        %v708 = vld [vmem:[%s452 + $0x590] sm:$0xff]
        %v709 = vld [vmem:[%s452 + $0x598] sm:$0xff]
        %v710 = vld [vmem:[%s452 + $0x5a0] sm:$0xff]
        %v711 = vld [vmem:[%s452 + $0x5a8] sm:$0xff]
        %v712 = vld [vmem:[%s452 + $0x5b0] sm:$0xff]
        %v713 = vld [vmem:[%s452 + $0x5b8] sm:$0xff]
        %v714 = vld [vmem:[%s452 + $0x5c0] sm:$0xff]
        %v715 = vld [vmem:[%s452 + $0x5c8] sm:$0xff]
        %v716 = vld [vmem:[%s452 + $0x5d0] sm:$0xff]
        %v717 = vld [vmem:[%s452 + $0x5d8] sm:$0xff]
        %v718 = vld [vmem:[%s452 + $0x5e0] sm:$0xff]
        %v719 = vld [vmem:[%s452 + $0x5e8] sm:$0xff]
        %v720 = vld [vmem:[%s452 + $0x5f0] sm:$0xff]
        %v721 = vld [vmem:[%s452 + $0x5f8] sm:$0xff]
        %v722 = vld [vmem:[%s452 + $0x600] sm:$0xff]
        %v723 = vld [vmem:[%s452 + $0x608] sm:$0xff]
        %v724 = vld [vmem:[%s452 + $0x610] sm:$0xff]
        %v725 = vld [vmem:[%s452 + $0x618] sm:$0xff]
        %v726 = vld [vmem:[%s452 + $0x620] sm:$0xff]
        %v727 = vld [vmem:[%s452 + $0x628] sm:$0xff]
        %v728 = vld [vmem:[%s452 + $0x630] sm:$0xff]
        %v729 = vld [vmem:[%s452 + $0x638] sm:$0xff]
        %v730 = vld [vmem:[%s452 + $0x640] sm:$0xff]
        %v731 = vld [vmem:[%s452 + $0x648] sm:$0xff]
        %v732 = vld [vmem:[%s452 + $0x650] sm:$0xff]
        %v733 = vld [vmem:[%s452 + $0x658] sm:$0xff]
        %v734 = vld [vmem:[%s452 + $0x660] sm:$0xff]
        %v735 = vld [vmem:[%s452 + $0x668] sm:$0xff]
        %v736 = vld [vmem:[%s452 + $0x670] sm:$0xff]
        %v737 = vld [vmem:[%s452 + $0x678] sm:$0xff]
        %v738 = vld [vmem:[%s452 + $0x680] sm:$0xff]
        %v739 = vld [vmem:[%s452 + $0x688] sm:$0xff]
        %v740 = vld [vmem:[%s452 + $0x690] sm:$0xff]
        %v741 = vld [vmem:[%s452 + $0x698] sm:$0xff]
        %v742 = vld [vmem:[%s452 + $0x6a0] sm:$0xff]
        %v743 = vld [vmem:[%s452 + $0x6a8] sm:$0xff]
        %v744 = vld [vmem:[%s452 + $0x6b0] sm:$0xff]
        %v745 = vld [vmem:[%s452 + $0x6b8] sm:$0xff]
        %v746 = vld [vmem:[%s452 + $0x6c0] sm:$0xff]
        %v747 = vld [vmem:[%s452 + $0x6c8] sm:$0xff]
        %v748 = vld [vmem:[%s452 + $0x6d0] sm:$0xff]
        %v749 = vld [vmem:[%s452 + $0x6d8] sm:$0xff]
        %v750 = vld [vmem:[%s452 + $0x6e0] sm:$0xff]
        %v751 = vld [vmem:[%s452 + $0x6e8] sm:$0xff]
        %v752 = vld [vmem:[%s452 + $0x6f0] sm:$0xff]
        %v753 = vld [vmem:[%s452 + $0x6f8] sm:$0xff]
        %v754 = vld [vmem:[%s452 + $0x700] sm:$0xff]
        %v755 = vld [vmem:[%s452 + $0x708] sm:$0xff]
        %v756 = vld [vmem:[%s452 + $0x710] sm:$0xff]
        %v757 = vld [vmem:[%s452 + $0x718] sm:$0xff]
        %v758 = vld [vmem:[%s452 + $0x720] sm:$0xff]
        %v759 = vld [vmem:[%s452 + $0x728] sm:$0xff]
        %v760 = vld [vmem:[%s452 + $0x730] sm:$0xff]
        %v761 = vld [vmem:[%s452 + $0x738] sm:$0xff]
        %v762 = vld [vmem:[%s452 + $0x740] sm:$0xff]
        %v763 = vld [vmem:[%s452 + $0x748] sm:$0xff]
        %v764 = vld [vmem:[%s452 + $0x750] sm:$0xff]
        %v765 = vld [vmem:[%s452 + $0x758] sm:$0xff]
        %v766 = vld [vmem:[%s452 + $0x760] sm:$0xff]
        %v767 = vld [vmem:[%s452 + $0x768] sm:$0xff]
        %v768 = vld [vmem:[%s452 + $0x770] sm:$0xff]
        %v769 = vld [vmem:[%s452 + $0x778] sm:$0xff]
        %v770 = vld [vmem:[%s452 + $0x780] sm:$0xff]
        %v771 = vld [vmem:[%s452 + $0x788] sm:$0xff]
        %v772 = vld [vmem:[%s452 + $0x790] sm:$0xff]
        %v773 = vld [vmem:[%s452 + $0x798] sm:$0xff]
        %v774 = vld [vmem:[%s452 + $0x7a0] sm:$0xff]
        %v775 = vld [vmem:[%s452 + $0x7a8] sm:$0xff]
        %v776 = vld [vmem:[%s452 + $0x7b0] sm:$0xff]
        %v777 = vld [vmem:[%s452 + $0x7b8] sm:$0xff]
        %v778 = vld [vmem:[%s452 + $0x7c0] sm:$0xff]
        %v779 = vld [vmem:[%s452 + $0x7c8] sm:$0xff]
        %v780 = vld [vmem:[%s452 + $0x7d0] sm:$0xff]
        %v781 = vld [vmem:[%s452 + $0x7d8] sm:$0xff]
        %v782 = vld [vmem:[%s452 + $0x7e0] sm:$0xff]
        %v783 = vld [vmem:[%s452 + $0x7e8] sm:$0xff]
        %v784 = vld [vmem:[%s452 + $0x7f0] sm:$0xff]
        %v785 = vld [vmem:[%s452 + $0x7f8] sm:$0xff]
        %v786 = vpack.c.bf16 %v534, %v530
        %v787 = vpack.c.bf16 %v535, %v531
        %v788 = vpack.c.bf16 %v536, %v532
        %v789 = vpack.c.bf16 %v537, %v533
        %v790 = vpack.c.bf16 %v542, %v538
        %v791 = vpack.c.bf16 %v543, %v539
        %v792 = vpack.c.bf16 %v544, %v540
        %v793 = vpack.c.bf16 %v545, %v541
        %v794 = vpack.c.bf16 %v550, %v546
        %v795 = vpack.c.bf16 %v551, %v547
        %v796 = vpack.c.bf16 %v552, %v548
        %v797 = vpack.c.bf16 %v553, %v549
        %v798 = vpack.c.bf16 %v558, %v554
        %v799 = vpack.c.bf16 %v559, %v555
        %v800 = vpack.c.bf16 %v560, %v556
        %v801 = vpack.c.bf16 %v561, %v557
        %v802 = vpack.c.bf16 %v566, %v562
        %v803 = vpack.c.bf16 %v567, %v563
        %v804 = vpack.c.bf16 %v568, %v564
        %v805 = vpack.c.bf16 %v569, %v565
        %v806 = vpack.c.bf16 %v574, %v570
        %v807 = vpack.c.bf16 %v575, %v571
        %v808 = vpack.c.bf16 %v576, %v572
        %v809 = vpack.c.bf16 %v577, %v573
        %v810 = vpack.c.bf16 %v582, %v578
        %v811 = vpack.c.bf16 %v583, %v579
        %v812 = vpack.c.bf16 %v584, %v580
        %v813 = vpack.c.bf16 %v585, %v581
        %v814 = vpack.c.bf16 %v590, %v586
        %v815 = vpack.c.bf16 %v591, %v587
        %v816 = vpack.c.bf16 %v592, %v588
        %v817 = vpack.c.bf16 %v593, %v589
        %v818 = vpack.c.bf16 %v598, %v594
        %v819 = vpack.c.bf16 %v599, %v595
        %v820 = vpack.c.bf16 %v600, %v596
        %v821 = vpack.c.bf16 %v601, %v597
        %v822 = vpack.c.bf16 %v606, %v602
        %v823 = vpack.c.bf16 %v607, %v603
        %v824 = vpack.c.bf16 %v608, %v604
        %v825 = vpack.c.bf16 %v609, %v605
        %v826 = vpack.c.bf16 %v614, %v610
        %v827 = vpack.c.bf16 %v615, %v611
        %v828 = vpack.c.bf16 %v616, %v612
        %v829 = vpack.c.bf16 %v617, %v613
        %v830 = vpack.c.bf16 %v622, %v618
        %v831 = vpack.c.bf16 %v623, %v619
        %v832 = vpack.c.bf16 %v624, %v620
        %v833 = vpack.c.bf16 %v625, %v621
        %v834 = vpack.c.bf16 %v630, %v626
        %v835 = vpack.c.bf16 %v631, %v627
        %v836 = vpack.c.bf16 %v632, %v628
        %v837 = vpack.c.bf16 %v633, %v629
        %v838 = vpack.c.bf16 %v638, %v634
        %v839 = vpack.c.bf16 %v639, %v635
        %v840 = vpack.c.bf16 %v640, %v636
        %v841 = vpack.c.bf16 %v641, %v637
        %v842 = vpack.c.bf16 %v646, %v642
        %v843 = vpack.c.bf16 %v647, %v643
        %v844 = vpack.c.bf16 %v648, %v644
        %v845 = vpack.c.bf16 %v649, %v645
        %v846 = vpack.c.bf16 %v654, %v650
        %v847 = vpack.c.bf16 %v655, %v651
        %v848 = vpack.c.bf16 %v656, %v652
        %v849 = vpack.c.bf16 %v657, %v653
        %v850 = vpack.c.bf16 %v662, %v658
        %v851 = vpack.c.bf16 %v663, %v659
        %v852 = vpack.c.bf16 %v664, %v660
        %v853 = vpack.c.bf16 %v665, %v661
        %v854 = vpack.c.bf16 %v670, %v666
        %v855 = vpack.c.bf16 %v671, %v667
        %v856 = vpack.c.bf16 %v672, %v668
        %v857 = vpack.c.bf16 %v673, %v669
        %v858 = vpack.c.bf16 %v678, %v674
        %v859 = vpack.c.bf16 %v679, %v675
        %v860 = vpack.c.bf16 %v680, %v676
        %v861 = vpack.c.bf16 %v681, %v677
        %v862 = vpack.c.bf16 %v686, %v682
        %v863 = vpack.c.bf16 %v687, %v683
        %v864 = vpack.c.bf16 %v688, %v684
        %v865 = vpack.c.bf16 %v689, %v685
        %v866 = vpack.c.bf16 %v694, %v690
        %v867 = vpack.c.bf16 %v695, %v691
        %v868 = vpack.c.bf16 %v696, %v692
        %v869 = vpack.c.bf16 %v697, %v693
        %v870 = vpack.c.bf16 %v702, %v698
        %v871 = vpack.c.bf16 %v703, %v699
        %v872 = vpack.c.bf16 %v704, %v700
        %v873 = vpack.c.bf16 %v705, %v701
        %v874 = vpack.c.bf16 %v710, %v706
        %v875 = vpack.c.bf16 %v711, %v707
        %v876 = vpack.c.bf16 %v712, %v708
        %v877 = vpack.c.bf16 %v713, %v709
        %v878 = vpack.c.bf16 %v718, %v714
        %v879 = vpack.c.bf16 %v719, %v715
        %v880 = vpack.c.bf16 %v720, %v716
        %v881 = vpack.c.bf16 %v721, %v717
        %v882 = vpack.c.bf16 %v726, %v722
        %v883 = vpack.c.bf16 %v727, %v723
        %v884 = vpack.c.bf16 %v728, %v724
        %v885 = vpack.c.bf16 %v729, %v725
        %v886 = vpack.c.bf16 %v734, %v730
        %v887 = vpack.c.bf16 %v735, %v731
        %v888 = vpack.c.bf16 %v736, %v732
        %v889 = vpack.c.bf16 %v737, %v733
        %v890 = vpack.c.bf16 %v742, %v738
        %v891 = vpack.c.bf16 %v743, %v739
        %v892 = vpack.c.bf16 %v744, %v740
        %v893 = vpack.c.bf16 %v745, %v741
        %v894 = vpack.c.bf16 %v750, %v746
        %v895 = vpack.c.bf16 %v751, %v747
        %v896 = vpack.c.bf16 %v752, %v748
        %v897 = vpack.c.bf16 %v753, %v749
        %v898 = vpack.c.bf16 %v758, %v754
        %v899 = vpack.c.bf16 %v759, %v755
        %v900 = vpack.c.bf16 %v760, %v756
        %v901 = vpack.c.bf16 %v761, %v757
        %v902 = vpack.c.bf16 %v766, %v762
        %v903 = vpack.c.bf16 %v767, %v763
        %v904 = vpack.c.bf16 %v768, %v764
        %v905 = vpack.c.bf16 %v769, %v765
        %v906 = vpack.c.bf16 %v774, %v770
        %v907 = vpack.c.bf16 %v775, %v771
        %v908 = vpack.c.bf16 %v776, %v772
        %v909 = vpack.c.bf16 %v777, %v773
        %v910 = vpack.c.bf16 %v782, %v778
        %v911 = vpack.c.bf16 %v783, %v779
        %v912 = vpack.c.bf16 %v784, %v780
        %v913 = vpack.c.bf16 %v785, %v781
        %v914 = vld [vmem:[#allocation5] sm:$0xff]
        %v915 = vld [vmem:[#allocation5 + $0x8] sm:$0xff]
        %v916 = vld [vmem:[#allocation5 + $0x10] sm:$0xff]
        %v917 = vld [vmem:[#allocation5 + $0x18] sm:$0xff]
        %v918 = vld [vmem:[#allocation5 + $0x20] sm:$0xff]
        %v919 = vld [vmem:[#allocation5 + $0x28] sm:$0xff]
        %v920 = vld [vmem:[#allocation5 + $0x30] sm:$0xff]
        %v921 = vld [vmem:[#allocation5 + $0x38] sm:$0xff]
        %v922 = vld [vmem:[#allocation5 + $0x40] sm:$0xff]
        %v923 = vld [vmem:[#allocation5 + $0x48] sm:$0xff]
        %v924 = vld [vmem:[#allocation5 + $0x50] sm:$0xff]
        %v925 = vld [vmem:[#allocation5 + $0x58] sm:$0xff]
        %v926 = vld [vmem:[#allocation5 + $0x60] sm:$0xff]
        %v927 = vld [vmem:[#allocation5 + $0x68] sm:$0xff]
        %v928 = vld [vmem:[#allocation5 + $0x70] sm:$0xff]
        %v929 = vld [vmem:[#allocation5 + $0x78] sm:$0xff]
        %v930 = vld [vmem:[#allocation5 + $0x80] sm:$0xff]
        %v931 = vld [vmem:[#allocation5 + $0x88] sm:$0xff]
        %v932 = vld [vmem:[#allocation5 + $0x90] sm:$0xff]
        %v933 = vld [vmem:[#allocation5 + $0x98] sm:$0xff]
        %v934 = vld [vmem:[#allocation5 + $0xa0] sm:$0xff]
        %v935 = vld [vmem:[#allocation5 + $0xa8] sm:$0xff]
        %v936 = vld [vmem:[#allocation5 + $0xb0] sm:$0xff]
        %v937 = vld [vmem:[#allocation5 + $0xb8] sm:$0xff]
        %v938 = vld [vmem:[#allocation5 + $0xc0] sm:$0xff]
        %v939 = vld [vmem:[#allocation5 + $0xc8] sm:$0xff]
        %v940 = vld [vmem:[#allocation5 + $0xd0] sm:$0xff]
        %v941 = vld [vmem:[#allocation5 + $0xd8] sm:$0xff]
        %v942 = vld [vmem:[#allocation5 + $0xe0] sm:$0xff]
        %v943 = vld [vmem:[#allocation5 + $0xe8] sm:$0xff]
        %v944 = vld [vmem:[#allocation5 + $0xf0] sm:$0xff]
        %v945 = vld [vmem:[#allocation5 + $0xf8] sm:$0xff]
        %v946 = vld [vmem:[#allocation5 + $0x100] sm:$0xff]
        %v947 = vld [vmem:[#allocation5 + $0x108] sm:$0xff]
        %v948 = vld [vmem:[#allocation5 + $0x110] sm:$0xff]
        %v949 = vld [vmem:[#allocation5 + $0x118] sm:$0xff]
        %v950 = vld [vmem:[#allocation5 + $0x120] sm:$0xff]
        %v951 = vld [vmem:[#allocation5 + $0x128] sm:$0xff]
        %v952 = vld [vmem:[#allocation5 + $0x130] sm:$0xff]
        %v953 = vld [vmem:[#allocation5 + $0x138] sm:$0xff]
        %v954 = vld [vmem:[#allocation5 + $0x140] sm:$0xff]
        %v955 = vld [vmem:[#allocation5 + $0x148] sm:$0xff]
        %v956 = vld [vmem:[#allocation5 + $0x150] sm:$0xff]
        %v957 = vld [vmem:[#allocation5 + $0x158] sm:$0xff]
        %v958 = vld [vmem:[#allocation5 + $0x160] sm:$0xff]
        %v959 = vld [vmem:[#allocation5 + $0x168] sm:$0xff]
        %v960 = vld [vmem:[#allocation5 + $0x170] sm:$0xff]
        %v961 = vld [vmem:[#allocation5 + $0x178] sm:$0xff]
        %v962 = vld [vmem:[#allocation5 + $0x180] sm:$0xff]
        %v963 = vld [vmem:[#allocation5 + $0x188] sm:$0xff]
        %v964 = vld [vmem:[#allocation5 + $0x190] sm:$0xff]
        %v965 = vld [vmem:[#allocation5 + $0x198] sm:$0xff]
        %v966 = vld [vmem:[#allocation5 + $0x1a0] sm:$0xff]
        %v967 = vld [vmem:[#allocation5 + $0x1a8] sm:$0xff]
        %v968 = vld [vmem:[#allocation5 + $0x1b0] sm:$0xff]
        %v969 = vld [vmem:[#allocation5 + $0x1b8] sm:$0xff]
        %v970 = vld [vmem:[#allocation5 + $0x1c0] sm:$0xff]
        %v971 = vld [vmem:[#allocation5 + $0x1c8] sm:$0xff]
        %v972 = vld [vmem:[#allocation5 + $0x1d0] sm:$0xff]
        %v973 = vld [vmem:[#allocation5 + $0x1d8] sm:$0xff]
        %v974 = vld [vmem:[#allocation5 + $0x1e0] sm:$0xff]
        %v975 = vld [vmem:[#allocation5 + $0x1e8] sm:$0xff]
        %v976 = vld [vmem:[#allocation5 + $0x1f0] sm:$0xff]
        %v977 = vld [vmem:[#allocation5 + $0x1f8] sm:$0xff]
        %v978 = vld [vmem:[#allocation7] sm:$0x3]
        %v980 = vlaneseq
        %v981 = vshrl.u32 %v980, 7
        %v982 = vsub.s32 0, %v981
        %v983 = vrot.slane %v978, %v982
        %v984 = vlaneseq
        %v985 = vshrl.u32 %v984, 7
        %v986 = vsub.s32 1, %v985
        %v987 = vrot.slane %v978, %v986
        %v1054 = vunpack.c.l.b16 %v914
        %v1055 = vunpack.c.h.b16 %v914
        %v1056 = vunpack.c.l.b16 %v915
        %v1057 = vunpack.c.h.b16 %v915
        %v1058 = vunpack.c.l.b16 %v916
        %v1059 = vunpack.c.h.b16 %v916
        %v1060 = vunpack.c.l.b16 %v917
        %v1061 = vunpack.c.h.b16 %v917
        %v1062 = vunpack.c.l.b16 %v918
        %v1063 = vunpack.c.h.b16 %v918
        %v1064 = vunpack.c.l.b16 %v919
        %v1065 = vunpack.c.h.b16 %v919
        %v1066 = vunpack.c.l.b16 %v920
        %v1067 = vunpack.c.h.b16 %v920
        %v1068 = vunpack.c.l.b16 %v921
        %v1069 = vunpack.c.h.b16 %v921
        %v1070 = vunpack.c.l.b16 %v922
        %v1071 = vunpack.c.h.b16 %v922
        %v1072 = vunpack.c.l.b16 %v923
        %v1073 = vunpack.c.h.b16 %v923
        %v1074 = vunpack.c.l.b16 %v924
        %v1075 = vunpack.c.h.b16 %v924
        %v1076 = vunpack.c.l.b16 %v925
        %v1077 = vunpack.c.h.b16 %v925
        %v1078 = vunpack.c.l.b16 %v926
        %v1079 = vunpack.c.h.b16 %v926
        %v1080 = vunpack.c.l.b16 %v927
        %v1081 = vunpack.c.h.b16 %v927
        %v1082 = vunpack.c.l.b16 %v928
        %v1083 = vunpack.c.h.b16 %v928
        %v1084 = vunpack.c.l.b16 %v929
        %v1085 = vunpack.c.h.b16 %v929
        %v1086 = vunpack.c.l.b16 %v930
        %v1087 = vunpack.c.h.b16 %v930
        %v1088 = vunpack.c.l.b16 %v931
        %v1089 = vunpack.c.h.b16 %v931
        %v1090 = vunpack.c.l.b16 %v932
        %v1091 = vunpack.c.h.b16 %v932
        %v1092 = vunpack.c.l.b16 %v933
        %v1093 = vunpack.c.h.b16 %v933
        %v1094 = vunpack.c.l.b16 %v934
        %v1095 = vunpack.c.h.b16 %v934
        %v1096 = vunpack.c.l.b16 %v935
        %v1097 = vunpack.c.h.b16 %v935
        %v1098 = vunpack.c.l.b16 %v936
        %v1099 = vunpack.c.h.b16 %v936
        %v1100 = vunpack.c.l.b16 %v937
        %v1101 = vunpack.c.h.b16 %v937
        %v1102 = vunpack.c.l.b16 %v938
        %v1103 = vunpack.c.h.b16 %v938
        %v1104 = vunpack.c.l.b16 %v939
        %v1105 = vunpack.c.h.b16 %v939
        %v1106 = vunpack.c.l.b16 %v940
        %v1107 = vunpack.c.h.b16 %v940
        %v1108 = vunpack.c.l.b16 %v941
        %v1109 = vunpack.c.h.b16 %v941
        %v1110 = vunpack.c.l.b16 %v942
        %v1111 = vunpack.c.h.b16 %v942
        %v1112 = vunpack.c.l.b16 %v943
        %v1113 = vunpack.c.h.b16 %v943
        %v1114 = vunpack.c.l.b16 %v944
        %v1115 = vunpack.c.h.b16 %v944
        %v1116 = vunpack.c.l.b16 %v945
        %v1117 = vunpack.c.h.b16 %v945
        %v1118 = vunpack.c.l.b16 %v946
        %v1119 = vunpack.c.h.b16 %v946
        %v1120 = vunpack.c.l.b16 %v947
        %v1121 = vunpack.c.h.b16 %v947
        %v1122 = vunpack.c.l.b16 %v948
        %v1123 = vunpack.c.h.b16 %v948
        %v1124 = vunpack.c.l.b16 %v949
        %v1125 = vunpack.c.h.b16 %v949
        %v1126 = vunpack.c.l.b16 %v950
        %v1127 = vunpack.c.h.b16 %v950
        %v1128 = vunpack.c.l.b16 %v951
        %v1129 = vunpack.c.h.b16 %v951
        %v1130 = vunpack.c.l.b16 %v952
        %v1131 = vunpack.c.h.b16 %v952
        %v1132 = vunpack.c.l.b16 %v953
        %v1133 = vunpack.c.h.b16 %v953
        %v1134 = vunpack.c.l.b16 %v954
        %v1135 = vunpack.c.h.b16 %v954
        %v1136 = vunpack.c.l.b16 %v955
        %v1137 = vunpack.c.h.b16 %v955
        %v1138 = vunpack.c.l.b16 %v956
        %v1139 = vunpack.c.h.b16 %v956
        %v1140 = vunpack.c.l.b16 %v957
        %v1141 = vunpack.c.h.b16 %v957
        %v1142 = vunpack.c.l.b16 %v958
        %v1143 = vunpack.c.h.b16 %v958
        %v1144 = vunpack.c.l.b16 %v959
        %v1145 = vunpack.c.h.b16 %v959
        %v1146 = vunpack.c.l.b16 %v960
        %v1147 = vunpack.c.h.b16 %v960
        %v1148 = vunpack.c.l.b16 %v961
        %v1149 = vunpack.c.h.b16 %v961
        %v1150 = vunpack.c.l.b16 %v962
        %v1151 = vunpack.c.h.b16 %v962
        %v1152 = vunpack.c.l.b16 %v963
        %v1153 = vunpack.c.h.b16 %v963
        %v1154 = vunpack.c.l.b16 %v964
        %v1155 = vunpack.c.h.b16 %v964
        %v1156 = vunpack.c.l.b16 %v965
        %v1157 = vunpack.c.h.b16 %v965
        %v1158 = vunpack.c.l.b16 %v966
        %v1159 = vunpack.c.h.b16 %v966
        %v1160 = vunpack.c.l.b16 %v967
        %v1161 = vunpack.c.h.b16 %v967
        %v1162 = vunpack.c.l.b16 %v968
        %v1163 = vunpack.c.h.b16 %v968
        %v1164 = vunpack.c.l.b16 %v969
        %v1165 = vunpack.c.h.b16 %v969
        %v1166 = vunpack.c.l.b16 %v970
        %v1167 = vunpack.c.h.b16 %v970
        %v1168 = vunpack.c.l.b16 %v971
        %v1169 = vunpack.c.h.b16 %v971
        %v1170 = vunpack.c.l.b16 %v972
        %v1171 = vunpack.c.h.b16 %v972
        %v1172 = vunpack.c.l.b16 %v973
        %v1173 = vunpack.c.h.b16 %v973
        %v1174 = vunpack.c.l.b16 %v974
        %v1175 = vunpack.c.h.b16 %v974
        %v1176 = vunpack.c.l.b16 %v975
        %v1177 = vunpack.c.h.b16 %v975
        %v1178 = vunpack.c.l.b16 %v976
        %v1179 = vunpack.c.h.b16 %v976
        %v1180 = vunpack.c.l.b16 %v977
        %v1181 = vunpack.c.h.b16 %v977
        %v1182 = vpack.c.b16 %v1056, %v1054
        %v1183 = vpack.c.b16 %v1057, %v1055
        %v1184 = vpack.c.b16 %v1060, %v1058
        %v1185 = vpack.c.b16 %v1061, %v1059
        %v1186 = vpack.c.b16 %v1064, %v1062
        %v1187 = vpack.c.b16 %v1065, %v1063
        %v1188 = vpack.c.b16 %v1068, %v1066
        %v1189 = vpack.c.b16 %v1069, %v1067
        %v1190 = vpack.c.b16 %v1072, %v1070
        %v1191 = vpack.c.b16 %v1073, %v1071
        %v1192 = vpack.c.b16 %v1076, %v1074
        %v1193 = vpack.c.b16 %v1077, %v1075
        %v1194 = vpack.c.b16 %v1080, %v1078
        %v1195 = vpack.c.b16 %v1081, %v1079
        %v1196 = vpack.c.b16 %v1084, %v1082
        %v1197 = vpack.c.b16 %v1085, %v1083
        %v1198 = vpack.c.b16 %v1088, %v1086
        %v1199 = vpack.c.b16 %v1089, %v1087
        %v1200 = vpack.c.b16 %v1092, %v1090
        %v1201 = vpack.c.b16 %v1093, %v1091
        %v1202 = vpack.c.b16 %v1096, %v1094
        %v1203 = vpack.c.b16 %v1097, %v1095
        %v1204 = vpack.c.b16 %v1100, %v1098
        %v1205 = vpack.c.b16 %v1101, %v1099
        %v1206 = vpack.c.b16 %v1104, %v1102
        %v1207 = vpack.c.b16 %v1105, %v1103
        %v1208 = vpack.c.b16 %v1108, %v1106
        %v1209 = vpack.c.b16 %v1109, %v1107
        %v1210 = vpack.c.b16 %v1112, %v1110
        %v1211 = vpack.c.b16 %v1113, %v1111
        %v1212 = vpack.c.b16 %v1116, %v1114
        %v1213 = vpack.c.b16 %v1117, %v1115
        %v1214 = vpack.c.b16 %v1120, %v1118
        %v1215 = vpack.c.b16 %v1121, %v1119
        %v1216 = vpack.c.b16 %v1124, %v1122
        %v1217 = vpack.c.b16 %v1125, %v1123
        %v1218 = vpack.c.b16 %v1128, %v1126
        %v1219 = vpack.c.b16 %v1129, %v1127
        %v1220 = vpack.c.b16 %v1132, %v1130
        %v1221 = vpack.c.b16 %v1133, %v1131
        %v1222 = vpack.c.b16 %v1136, %v1134
        %v1223 = vpack.c.b16 %v1137, %v1135
        %v1224 = vpack.c.b16 %v1140, %v1138
        %v1225 = vpack.c.b16 %v1141, %v1139
        %v1226 = vpack.c.b16 %v1144, %v1142
        %v1227 = vpack.c.b16 %v1145, %v1143
        %v1228 = vpack.c.b16 %v1148, %v1146
        %v1229 = vpack.c.b16 %v1149, %v1147
        %v1230 = vpack.c.b16 %v1152, %v1150
        %v1231 = vpack.c.b16 %v1153, %v1151
        %v1232 = vpack.c.b16 %v1156, %v1154
        %v1233 = vpack.c.b16 %v1157, %v1155
        %v1234 = vpack.c.b16 %v1160, %v1158
        %v1235 = vpack.c.b16 %v1161, %v1159
        %v1236 = vpack.c.b16 %v1164, %v1162
        %v1237 = vpack.c.b16 %v1165, %v1163
        %v1238 = vpack.c.b16 %v1168, %v1166
        %v1239 = vpack.c.b16 %v1169, %v1167
        %v1240 = vpack.c.b16 %v1172, %v1170
        %v1241 = vpack.c.b16 %v1173, %v1171
        %v1242 = vpack.c.b16 %v1176, %v1174
        %v1243 = vpack.c.b16 %v1177, %v1175
        %v1244 = vpack.c.b16 %v1180, %v1178
        %v1245 = vpack.c.b16 %v1181, %v1179
        %1310 = vmatprep.subr.bf16.mxu0 %v1197
        %1311 = vmatpush1.bf16.msra.mxu0 %v1196
        %1312 = vmatprep.subr.bf16.mxu0 %v1195
        %1313 = vmatpush1.bf16.msra.mxu0 %v1194
        %1314 = vmatprep.subr.bf16.mxu0 %v1193
        %1315 = vmatpush1.bf16.msra.mxu0 %v1192
        %1316 = vmatprep.subr.bf16.mxu0 %v1191
        %1317 = vmatpush1.bf16.msra.mxu0 %v1190
        %1318 = vmatprep.subr.bf16.mxu0 %v1189
        %1319 = vmatpush1.bf16.msra.mxu0 %v1188
        %1320 = vmatprep.subr.bf16.mxu0 %v1187
        %1321 = vmatpush1.bf16.msra.mxu0 %v1186
        %1322 = vmatprep.subr.bf16.mxu0 %v1185
        %1323 = vmatpush1.bf16.msra.mxu0 %v1184
        %1324 = vmatprep.subr.bf16.mxu0 %v1183
        %1325 = vmatpush1.bf16.msra.mxu0 %v1182
        %1326 = vmatprep.subr.bf16.mxu0 %v1213
        %1327 = vmatpush2.bf16.msra.mxu0 %v1212
        %1328 = vmatprep.subr.bf16.mxu0 %v1211
        %1329 = vmatpush2.bf16.msra.mxu0 %v1210
        %1330 = vmatprep.subr.bf16.mxu0 %v1209
        %1331 = vmatpush2.bf16.msra.mxu0 %v1208
        %1332 = vmatprep.subr.bf16.mxu0 %v1207
        %1333 = vmatpush2.bf16.msra.mxu0 %v1206
        %1334 = vmatprep.subr.bf16.mxu0 %v1205
        %1335 = vmatpush2.bf16.msra.mxu0 %v1204
        %1336 = vmatprep.subr.bf16.mxu0 %v1203
        %1337 = vmatpush2.bf16.msra.mxu0 %v1202
        %1338 = vmatprep.subr.bf16.mxu0 %v1201
        %1339 = vmatpush2.bf16.msra.mxu0 %v1200
        %1340 = vmatprep.subr.bf16.mxu0 %v1199
        %1341 = vmatpush2.bf16.msra.mxu0 %v1198
        %1342 = vmatprep.mubr.bf16.mxu0 %v787
        %1343 = vmatmul.mubr.bf16.gmra.mxu0 %v786
        %v1344 = vpop.f32.mrf.mxu0
        %v1345 = vadd.f32 %v983, %v1344
        %v1346 = vpop.f32.mrf.mxu0
        %v1347 = vadd.f32 %v987, %v1346
        %v1348 = vpop.f32.mrf.mxu0
        %v1349 = vadd.f32 %v983, %v1348
        %v1350 = vpop.f32.mrf.mxu0
        %v1351 = vadd.f32 %v987, %v1350
        %1352 = vmatprep.mubr.bf16.mxu0 %v791
        %1353 = vmatmul.mubr.bf16.gmra.mxu0 %v790
        %v1354 = vpop.f32.mrf.mxu0
        %v1355 = vadd.f32 %v983, %v1354
        %v1356 = vpop.f32.mrf.mxu0
        %v1357 = vadd.f32 %v987, %v1356
        %v1358 = vpop.f32.mrf.mxu0
        %v1359 = vadd.f32 %v983, %v1358
        %v1360 = vpop.f32.mrf.mxu0
        %v1361 = vadd.f32 %v987, %v1360
        %1362 = vmatprep.mubr.bf16.mxu0 %v795
        %1363 = vmatmul.mubr.bf16.gmra.mxu0 %v794
        %v1364 = vpop.f32.mrf.mxu0
        %v1365 = vadd.f32 %v983, %v1364
        %v1366 = vpop.f32.mrf.mxu0
        %v1367 = vadd.f32 %v987, %v1366
        %v1368 = vpop.f32.mrf.mxu0
        %v1369 = vadd.f32 %v983, %v1368
        %v1370 = vpop.f32.mrf.mxu0
        %v1371 = vadd.f32 %v987, %v1370
        %1372 = vmatprep.mubr.bf16.mxu0 %v799
        %1373 = vmatmul.mubr.bf16.gmra.mxu0 %v798
        %v1374 = vpop.f32.mrf.mxu0
        %v1375 = vadd.f32 %v983, %v1374
        %v1376 = vpop.f32.mrf.mxu0
        %v1377 = vadd.f32 %v987, %v1376
        %v1378 = vpop.f32.mrf.mxu0
        %v1379 = vadd.f32 %v983, %v1378
        %v1380 = vpop.f32.mrf.mxu0
        %v1381 = vadd.f32 %v987, %v1380
        %1382 = vmatprep.mubr.bf16.mxu0 %v803
        %1383 = vmatmul.mubr.bf16.gmra.mxu0 %v802
        %v1384 = vpop.f32.mrf.mxu0
        %v1385 = vadd.f32 %v983, %v1384
        %v1386 = vpop.f32.mrf.mxu0
        %v1387 = vadd.f32 %v987, %v1386
        %v1388 = vpop.f32.mrf.mxu0
        %v1389 = vadd.f32 %v983, %v1388
        %v1390 = vpop.f32.mrf.mxu0
        %v1391 = vadd.f32 %v987, %v1390
        %1392 = vmatprep.mubr.bf16.mxu0 %v807
        %1393 = vmatmul.mubr.bf16.gmra.mxu0 %v806
        %v1394 = vpop.f32.mrf.mxu0
        %v1395 = vadd.f32 %v983, %v1394
        %v1396 = vpop.f32.mrf.mxu0
        %v1397 = vadd.f32 %v987, %v1396
        %v1398 = vpop.f32.mrf.mxu0
        %v1399 = vadd.f32 %v983, %v1398
        %v1400 = vpop.f32.mrf.mxu0
        %v1401 = vadd.f32 %v987, %v1400
        %1402 = vmatprep.mubr.bf16.mxu0 %v811
        %1403 = vmatmul.mubr.bf16.gmra.mxu0 %v810
        %v1404 = vpop.f32.mrf.mxu0
        %v1405 = vadd.f32 %v983, %v1404
        %v1406 = vpop.f32.mrf.mxu0
        %v1407 = vadd.f32 %v987, %v1406
        %v1408 = vpop.f32.mrf.mxu0
        %v1409 = vadd.f32 %v983, %v1408
        %v1410 = vpop.f32.mrf.mxu0
        %v1411 = vadd.f32 %v987, %v1410
        %1412 = vmatprep.mubr.bf16.mxu0 %v815
        %1413 = vmatmul.mubr.bf16.gmra.mxu0 %v814
        %v1414 = vpop.f32.mrf.mxu0
        %v1415 = vadd.f32 %v983, %v1414
        %v1416 = vpop.f32.mrf.mxu0
        %v1417 = vadd.f32 %v987, %v1416
        %v1418 = vpop.f32.mrf.mxu0
        %v1419 = vadd.f32 %v983, %v1418
        %v1420 = vpop.f32.mrf.mxu0
        %v1421 = vadd.f32 %v987, %v1420
        %1422 = vmatprep.mubr.bf16.mxu0 %v819
        %1423 = vmatmul.mubr.bf16.gmra.mxu0 %v818
        %v1424 = vpop.f32.mrf.mxu0
        %v1425 = vadd.f32 %v983, %v1424
        %v1426 = vpop.f32.mrf.mxu0
        %v1427 = vadd.f32 %v987, %v1426
        %v1428 = vpop.f32.mrf.mxu0
        %v1429 = vadd.f32 %v983, %v1428
        %v1430 = vpop.f32.mrf.mxu0
        %v1431 = vadd.f32 %v987, %v1430
        %1432 = vmatprep.mubr.bf16.mxu0 %v823
        %1433 = vmatmul.mubr.bf16.gmra.mxu0 %v822
        %v1434 = vpop.f32.mrf.mxu0
        %v1435 = vadd.f32 %v983, %v1434
        %v1436 = vpop.f32.mrf.mxu0
        %v1437 = vadd.f32 %v987, %v1436
        %v1438 = vpop.f32.mrf.mxu0
        %v1439 = vadd.f32 %v983, %v1438
        %v1440 = vpop.f32.mrf.mxu0
        %v1441 = vadd.f32 %v987, %v1440
        %1442 = vmatprep.mubr.bf16.mxu0 %v827
        %1443 = vmatmul.mubr.bf16.gmra.mxu0 %v826
        %v1444 = vpop.f32.mrf.mxu0
        %v1445 = vadd.f32 %v983, %v1444
        %v1446 = vpop.f32.mrf.mxu0
        %v1447 = vadd.f32 %v987, %v1446
        %v1448 = vpop.f32.mrf.mxu0
        %v1449 = vadd.f32 %v983, %v1448
        %v1450 = vpop.f32.mrf.mxu0
        %v1451 = vadd.f32 %v987, %v1450
        %1452 = vmatprep.mubr.bf16.mxu0 %v831
        %1453 = vmatmul.mubr.bf16.gmra.mxu0 %v830
        %v1454 = vpop.f32.mrf.mxu0
        %v1455 = vadd.f32 %v983, %v1454
        %v1456 = vpop.f32.mrf.mxu0
        %v1457 = vadd.f32 %v987, %v1456
        %v1458 = vpop.f32.mrf.mxu0
        %v1459 = vadd.f32 %v983, %v1458
        %v1460 = vpop.f32.mrf.mxu0
        %v1461 = vadd.f32 %v987, %v1460
        %1462 = vmatprep.mubr.bf16.mxu0 %v835
        %1463 = vmatmul.mubr.bf16.gmra.mxu0 %v834
        %v1464 = vpop.f32.mrf.mxu0
        %v1465 = vadd.f32 %v983, %v1464
        %v1466 = vpop.f32.mrf.mxu0
        %v1467 = vadd.f32 %v987, %v1466
        %v1468 = vpop.f32.mrf.mxu0
        %v1469 = vadd.f32 %v983, %v1468
        %v1470 = vpop.f32.mrf.mxu0
        %v1471 = vadd.f32 %v987, %v1470
        %1472 = vmatprep.mubr.bf16.mxu0 %v839
        %1473 = vmatmul.mubr.bf16.gmra.mxu0 %v838
        %v1474 = vpop.f32.mrf.mxu0
        %v1475 = vadd.f32 %v983, %v1474
        %v1476 = vpop.f32.mrf.mxu0
        %v1477 = vadd.f32 %v987, %v1476
        %v1478 = vpop.f32.mrf.mxu0
        %v1479 = vadd.f32 %v983, %v1478
        %v1480 = vpop.f32.mrf.mxu0
        %v1481 = vadd.f32 %v987, %v1480
        %1482 = vmatprep.mubr.bf16.mxu0 %v843
        %1483 = vmatmul.mubr.bf16.gmra.mxu0 %v842
        %v1484 = vpop.f32.mrf.mxu0
        %v1485 = vadd.f32 %v983, %v1484
        %v1486 = vpop.f32.mrf.mxu0
        %v1487 = vadd.f32 %v987, %v1486
        %v1488 = vpop.f32.mrf.mxu0
        %v1489 = vadd.f32 %v983, %v1488
        %v1490 = vpop.f32.mrf.mxu0
        %v1491 = vadd.f32 %v987, %v1490
        %1492 = vmatprep.mubr.bf16.mxu0 %v847
        %1493 = vmatmul.mubr.bf16.gmra.mxu0 %v846
        %v1494 = vpop.f32.mrf.mxu0
        %v1495 = vadd.f32 %v983, %v1494
        %v1496 = vpop.f32.mrf.mxu0
        %v1497 = vadd.f32 %v987, %v1496
        %v1498 = vpop.f32.mrf.mxu0
        %v1499 = vadd.f32 %v983, %v1498
        %v1500 = vpop.f32.mrf.mxu0
        %v1501 = vadd.f32 %v987, %v1500
        %1502 = vmatprep.mubr.bf16.mxu0 %v851
        %1503 = vmatmul.mubr.bf16.gmra.mxu0 %v850
        %v1504 = vpop.f32.mrf.mxu0
        %v1505 = vadd.f32 %v983, %v1504
        %v1506 = vpop.f32.mrf.mxu0
        %v1507 = vadd.f32 %v987, %v1506
        %v1508 = vpop.f32.mrf.mxu0
        %v1509 = vadd.f32 %v983, %v1508
        %v1510 = vpop.f32.mrf.mxu0
        %v1511 = vadd.f32 %v987, %v1510
        %1512 = vmatprep.mubr.bf16.mxu0 %v855
        %1513 = vmatmul.mubr.bf16.gmra.mxu0 %v854
        %v1514 = vpop.f32.mrf.mxu0
        %v1515 = vadd.f32 %v983, %v1514
        %v1516 = vpop.f32.mrf.mxu0
        %v1517 = vadd.f32 %v987, %v1516
        %v1518 = vpop.f32.mrf.mxu0
        %v1519 = vadd.f32 %v983, %v1518
        %v1520 = vpop.f32.mrf.mxu0
        %v1521 = vadd.f32 %v987, %v1520
        %1522 = vmatprep.mubr.bf16.mxu0 %v859
        %1523 = vmatmul.mubr.bf16.gmra.mxu0 %v858
        %v1524 = vpop.f32.mrf.mxu0
        %v1525 = vadd.f32 %v983, %v1524
        %v1526 = vpop.f32.mrf.mxu0
        %v1527 = vadd.f32 %v987, %v1526
        %v1528 = vpop.f32.mrf.mxu0
        %v1529 = vadd.f32 %v983, %v1528
        %v1530 = vpop.f32.mrf.mxu0
        %v1531 = vadd.f32 %v987, %v1530
        %1532 = vmatprep.mubr.bf16.mxu0 %v863
        %1533 = vmatmul.mubr.bf16.gmra.mxu0 %v862
        %v1534 = vpop.f32.mrf.mxu0
        %v1535 = vadd.f32 %v983, %v1534
        %v1536 = vpop.f32.mrf.mxu0
        %v1537 = vadd.f32 %v987, %v1536
        %v1538 = vpop.f32.mrf.mxu0
        %v1539 = vadd.f32 %v983, %v1538
        %v1540 = vpop.f32.mrf.mxu0
        %v1541 = vadd.f32 %v987, %v1540
        %1542 = vmatprep.mubr.bf16.mxu0 %v867
        %1543 = vmatmul.mubr.bf16.gmra.mxu0 %v866
        %v1544 = vpop.f32.mrf.mxu0
        %v1545 = vadd.f32 %v983, %v1544
        %v1546 = vpop.f32.mrf.mxu0
        %v1547 = vadd.f32 %v987, %v1546
        %v1548 = vpop.f32.mrf.mxu0
        %v1549 = vadd.f32 %v983, %v1548
        %v1550 = vpop.f32.mrf.mxu0
        %v1551 = vadd.f32 %v987, %v1550
        %1552 = vmatprep.mubr.bf16.mxu0 %v871
        %1553 = vmatmul.mubr.bf16.gmra.mxu0 %v870
        %v1554 = vpop.f32.mrf.mxu0
        %v1555 = vadd.f32 %v983, %v1554
        %v1556 = vpop.f32.mrf.mxu0
        %v1557 = vadd.f32 %v987, %v1556
        %v1558 = vpop.f32.mrf.mxu0
        %v1559 = vadd.f32 %v983, %v1558
        %v1560 = vpop.f32.mrf.mxu0
        %v1561 = vadd.f32 %v987, %v1560
        %1562 = vmatprep.mubr.bf16.mxu0 %v875
        %1563 = vmatmul.mubr.bf16.gmra.mxu0 %v874
        %v1564 = vpop.f32.mrf.mxu0
        %v1565 = vadd.f32 %v983, %v1564
        %v1566 = vpop.f32.mrf.mxu0
        %v1567 = vadd.f32 %v987, %v1566
        %v1568 = vpop.f32.mrf.mxu0
        %v1569 = vadd.f32 %v983, %v1568
        %v1570 = vpop.f32.mrf.mxu0
        %v1571 = vadd.f32 %v987, %v1570
        %1572 = vmatprep.mubr.bf16.mxu0 %v879
        %1573 = vmatmul.mubr.bf16.gmra.mxu0 %v878
        %v1574 = vpop.f32.mrf.mxu0
        %v1575 = vadd.f32 %v983, %v1574
        %v1576 = vpop.f32.mrf.mxu0
        %v1577 = vadd.f32 %v987, %v1576
        %v1578 = vpop.f32.mrf.mxu0
        %v1579 = vadd.f32 %v983, %v1578
        %v1580 = vpop.f32.mrf.mxu0
        %v1581 = vadd.f32 %v987, %v1580
        %1582 = vmatprep.mubr.bf16.mxu0 %v883
        %1583 = vmatmul.mubr.bf16.gmra.mxu0 %v882
        %v1584 = vpop.f32.mrf.mxu0
        %v1585 = vadd.f32 %v983, %v1584
        %v1586 = vpop.f32.mrf.mxu0
        %v1587 = vadd.f32 %v987, %v1586
        %v1588 = vpop.f32.mrf.mxu0
        %v1589 = vadd.f32 %v983, %v1588
        %v1590 = vpop.f32.mrf.mxu0
        %v1591 = vadd.f32 %v987, %v1590
        %1592 = vmatprep.mubr.bf16.mxu0 %v887
        %1593 = vmatmul.mubr.bf16.gmra.mxu0 %v886
        %v1594 = vpop.f32.mrf.mxu0
        %v1595 = vadd.f32 %v983, %v1594
        %v1596 = vpop.f32.mrf.mxu0
        %v1597 = vadd.f32 %v987, %v1596
        %v1598 = vpop.f32.mrf.mxu0
        %v1599 = vadd.f32 %v983, %v1598
        %v1600 = vpop.f32.mrf.mxu0
        %v1601 = vadd.f32 %v987, %v1600
        %1602 = vmatprep.mubr.bf16.mxu0 %v891
        %1603 = vmatmul.mubr.bf16.gmra.mxu0 %v890
        %v1604 = vpop.f32.mrf.mxu0
        %v1605 = vadd.f32 %v983, %v1604
        %v1606 = vpop.f32.mrf.mxu0
        %v1607 = vadd.f32 %v987, %v1606
        %v1608 = vpop.f32.mrf.mxu0
        %v1609 = vadd.f32 %v983, %v1608
        %v1610 = vpop.f32.mrf.mxu0
        %v1611 = vadd.f32 %v987, %v1610
        %1612 = vmatprep.mubr.bf16.mxu0 %v895
        %1613 = vmatmul.mubr.bf16.gmra.mxu0 %v894
        %v1614 = vpop.f32.mrf.mxu0
        %v1615 = vadd.f32 %v983, %v1614
        %v1616 = vpop.f32.mrf.mxu0
        %v1617 = vadd.f32 %v987, %v1616
        %v1618 = vpop.f32.mrf.mxu0
        %v1619 = vadd.f32 %v983, %v1618
        %v1620 = vpop.f32.mrf.mxu0
        %v1621 = vadd.f32 %v987, %v1620
        %1622 = vmatprep.mubr.bf16.mxu0 %v899
        %1623 = vmatmul.mubr.bf16.gmra.mxu0 %v898
        %v1624 = vpop.f32.mrf.mxu0
        %v1625 = vadd.f32 %v983, %v1624
        %v1626 = vpop.f32.mrf.mxu0
        %v1627 = vadd.f32 %v987, %v1626
        %v1628 = vpop.f32.mrf.mxu0
        %v1629 = vadd.f32 %v983, %v1628
        %v1630 = vpop.f32.mrf.mxu0
        %v1631 = vadd.f32 %v987, %v1630
        %1632 = vmatprep.mubr.bf16.mxu0 %v903
        %1633 = vmatmul.mubr.bf16.gmra.mxu0 %v902
        %v1634 = vpop.f32.mrf.mxu0
        %v1635 = vadd.f32 %v983, %v1634
        %v1636 = vpop.f32.mrf.mxu0
        %v1637 = vadd.f32 %v987, %v1636
        %v1638 = vpop.f32.mrf.mxu0
        %v1639 = vadd.f32 %v983, %v1638
        %v1640 = vpop.f32.mrf.mxu0
        %v1641 = vadd.f32 %v987, %v1640
        %1642 = vmatprep.mubr.bf16.mxu0 %v907
        %1643 = vmatmul.mubr.bf16.gmra.mxu0 %v906
        %v1644 = vpop.f32.mrf.mxu0
        %v1645 = vadd.f32 %v983, %v1644
        %v1646 = vpop.f32.mrf.mxu0
        %v1647 = vadd.f32 %v987, %v1646
        %v1648 = vpop.f32.mrf.mxu0
        %v1649 = vadd.f32 %v983, %v1648
        %v1650 = vpop.f32.mrf.mxu0
        %v1651 = vadd.f32 %v987, %v1650
        %1652 = vmatprep.mubr.bf16.mxu0 %v911
        %1653 = vmatmul.mubr.bf16.gmra.mxu0 %v910
        %v1654 = vpop.f32.mrf.mxu0
        %v1655 = vadd.f32 %v983, %v1654
        %v1656 = vpop.f32.mrf.mxu0
        %v1657 = vadd.f32 %v987, %v1656
        %v1658 = vpop.f32.mrf.mxu0
        %v1659 = vadd.f32 %v983, %v1658
        %v1660 = vpop.f32.mrf.mxu0
        %v1661 = vadd.f32 %v987, %v1660
        %1662 = vdwg.mxu0
        %1663 = vmatprep.subr.bf16.mxu0 %v1229
        %1664 = vmatpush1.bf16.msra.mxu0 %v1228
        %1665 = vmatprep.subr.bf16.mxu0 %v1227
        %1666 = vmatpush1.bf16.msra.mxu0 %v1226
        %1667 = vmatprep.subr.bf16.mxu0 %v1225
        %1668 = vmatpush1.bf16.msra.mxu0 %v1224
        %1669 = vmatprep.subr.bf16.mxu0 %v1223
        %1670 = vmatpush1.bf16.msra.mxu0 %v1222
        %1671 = vmatprep.subr.bf16.mxu0 %v1221
        %1672 = vmatpush1.bf16.msra.mxu0 %v1220
        %1673 = vmatprep.subr.bf16.mxu0 %v1219
        %1674 = vmatpush1.bf16.msra.mxu0 %v1218
        %1675 = vmatprep.subr.bf16.mxu0 %v1217
        %1676 = vmatpush1.bf16.msra.mxu0 %v1216
        %1677 = vmatprep.subr.bf16.mxu0 %v1215
        %1678 = vmatpush1.bf16.msra.mxu0 %v1214
        %1679 = vmatprep.subr.bf16.mxu0 %v1245
        %1680 = vmatpush2.bf16.msra.mxu0 %v1244
        %1681 = vmatprep.subr.bf16.mxu0 %v1243
        %1682 = vmatpush2.bf16.msra.mxu0 %v1242
        %1683 = vmatprep.subr.bf16.mxu0 %v1241
        %1684 = vmatpush2.bf16.msra.mxu0 %v1240
        %1685 = vmatprep.subr.bf16.mxu0 %v1239
        %1686 = vmatpush2.bf16.msra.mxu0 %v1238
        %1687 = vmatprep.subr.bf16.mxu0 %v1237
        %1688 = vmatpush2.bf16.msra.mxu0 %v1236
        %1689 = vmatprep.subr.bf16.mxu0 %v1235
        %1690 = vmatpush2.bf16.msra.mxu0 %v1234
        %1691 = vmatprep.subr.bf16.mxu0 %v1233
        %1692 = vmatpush2.bf16.msra.mxu0 %v1232
        %1693 = vmatprep.subr.bf16.mxu0 %v1231
        %1694 = vmatpush2.bf16.msra.mxu0 %v1230
        %1695 = vmatprep.mubr.bf16.mxu0 %v789
        %1696 = vmatmul.mubr.bf16.gmra.mxu0 %v788
        %v1697 = vpop.f32.mrf.mxu0
        %v1698 = vadd.f32 %v1345, %v1697
        %v1699 = vpop.f32.mrf.mxu0
        %v1700 = vadd.f32 %v1347, %v1699
        %v1701 = vpop.f32.mrf.mxu0
        %v1702 = vadd.f32 %v1349, %v1701
        %v1703 = vpop.f32.mrf.mxu0
        %v1704 = vadd.f32 %v1351, %v1703
        %1705 = vmatprep.mubr.bf16.mxu0 %v793
        %1706 = vmatmul.mubr.bf16.gmra.mxu0 %v792
        %v1707 = vpop.f32.mrf.mxu0
        %v1708 = vadd.f32 %v1355, %v1707
        %v1709 = vpop.f32.mrf.mxu0
        %v1710 = vadd.f32 %v1357, %v1709
        %v1711 = vpop.f32.mrf.mxu0
        %v1712 = vadd.f32 %v1359, %v1711
        %v1713 = vpop.f32.mrf.mxu0
        %v1714 = vadd.f32 %v1361, %v1713
        %1715 = vmatprep.mubr.bf16.mxu0 %v797
        %1716 = vmatmul.mubr.bf16.gmra.mxu0 %v796
        %v1717 = vpop.f32.mrf.mxu0
        %v1718 = vadd.f32 %v1365, %v1717
        %v1719 = vpop.f32.mrf.mxu0
        %v1720 = vadd.f32 %v1367, %v1719
        %v1721 = vpop.f32.mrf.mxu0
        %v1722 = vadd.f32 %v1369, %v1721
        %v1723 = vpop.f32.mrf.mxu0
        %v1724 = vadd.f32 %v1371, %v1723
        %1725 = vmatprep.mubr.bf16.mxu0 %v801
        %1726 = vmatmul.mubr.bf16.gmra.mxu0 %v800
        %v1727 = vpop.f32.mrf.mxu0
        %v1728 = vadd.f32 %v1375, %v1727
        %v1729 = vpop.f32.mrf.mxu0
        %v1730 = vadd.f32 %v1377, %v1729
        %v1731 = vpop.f32.mrf.mxu0
        %v1732 = vadd.f32 %v1379, %v1731
        %v1733 = vpop.f32.mrf.mxu0
        %v1734 = vadd.f32 %v1381, %v1733
        %1735 = vmatprep.mubr.bf16.mxu0 %v805
        %1736 = vmatmul.mubr.bf16.gmra.mxu0 %v804
        %v1737 = vpop.f32.mrf.mxu0
        %v1738 = vadd.f32 %v1385, %v1737
        %v1739 = vpop.f32.mrf.mxu0
        %v1740 = vadd.f32 %v1387, %v1739
        %v1741 = vpop.f32.mrf.mxu0
        %v1742 = vadd.f32 %v1389, %v1741
        %v1743 = vpop.f32.mrf.mxu0
        %v1744 = vadd.f32 %v1391, %v1743
        %1745 = vmatprep.mubr.bf16.mxu0 %v809
        %1746 = vmatmul.mubr.bf16.gmra.mxu0 %v808
        %v1747 = vpop.f32.mrf.mxu0
        %v1748 = vadd.f32 %v1395, %v1747
        %v1749 = vpop.f32.mrf.mxu0
        %v1750 = vadd.f32 %v1397, %v1749
        %v1751 = vpop.f32.mrf.mxu0
        %v1752 = vadd.f32 %v1399, %v1751
        %v1753 = vpop.f32.mrf.mxu0
        %v1754 = vadd.f32 %v1401, %v1753
        %1755 = vmatprep.mubr.bf16.mxu0 %v813
        %1756 = vmatmul.mubr.bf16.gmra.mxu0 %v812
        %v1757 = vpop.f32.mrf.mxu0
        %v1758 = vadd.f32 %v1405, %v1757
        %v1759 = vpop.f32.mrf.mxu0
        %v1760 = vadd.f32 %v1407, %v1759
        %v1761 = vpop.f32.mrf.mxu0
        %v1762 = vadd.f32 %v1409, %v1761
        %v1763 = vpop.f32.mrf.mxu0
        %v1764 = vadd.f32 %v1411, %v1763
        %1765 = vmatprep.mubr.bf16.mxu0 %v817
        %1766 = vmatmul.mubr.bf16.gmra.mxu0 %v816
        %v1767 = vpop.f32.mrf.mxu0
        %v1768 = vadd.f32 %v1415, %v1767
        %v1769 = vpop.f32.mrf.mxu0
        %v1770 = vadd.f32 %v1417, %v1769
        %v1771 = vpop.f32.mrf.mxu0
        %v1772 = vadd.f32 %v1419, %v1771
        %v1773 = vpop.f32.mrf.mxu0
        %v1774 = vadd.f32 %v1421, %v1773
        %1775 = vmatprep.mubr.bf16.mxu0 %v821
        %1776 = vmatmul.mubr.bf16.gmra.mxu0 %v820
        %v1777 = vpop.f32.mrf.mxu0
        %v1778 = vadd.f32 %v1425, %v1777
        %v1779 = vpop.f32.mrf.mxu0
        %v1780 = vadd.f32 %v1427, %v1779
        %v1781 = vpop.f32.mrf.mxu0
        %v1782 = vadd.f32 %v1429, %v1781
        %v1783 = vpop.f32.mrf.mxu0
        %v1784 = vadd.f32 %v1431, %v1783
        %1785 = vmatprep.mubr.bf16.mxu0 %v825
        %1786 = vmatmul.mubr.bf16.gmra.mxu0 %v824
        %v1787 = vpop.f32.mrf.mxu0
        %v1788 = vadd.f32 %v1435, %v1787
        %v1789 = vpop.f32.mrf.mxu0
        %v1790 = vadd.f32 %v1437, %v1789
        %v1791 = vpop.f32.mrf.mxu0
        %v1792 = vadd.f32 %v1439, %v1791
        %v1793 = vpop.f32.mrf.mxu0
        %v1794 = vadd.f32 %v1441, %v1793
        %1795 = vmatprep.mubr.bf16.mxu0 %v829
        %1796 = vmatmul.mubr.bf16.gmra.mxu0 %v828
        %v1797 = vpop.f32.mrf.mxu0
        %v1798 = vadd.f32 %v1445, %v1797
        %v1799 = vpop.f32.mrf.mxu0
        %v1800 = vadd.f32 %v1447, %v1799
        %v1801 = vpop.f32.mrf.mxu0
        %v1802 = vadd.f32 %v1449, %v1801
        %v1803 = vpop.f32.mrf.mxu0
        %v1804 = vadd.f32 %v1451, %v1803
        %1805 = vmatprep.mubr.bf16.mxu0 %v833
        %1806 = vmatmul.mubr.bf16.gmra.mxu0 %v832
        %v1807 = vpop.f32.mrf.mxu0
        %v1808 = vadd.f32 %v1455, %v1807
        %v1809 = vpop.f32.mrf.mxu0
        %v1810 = vadd.f32 %v1457, %v1809
        %v1811 = vpop.f32.mrf.mxu0
        %v1812 = vadd.f32 %v1459, %v1811
        %v1813 = vpop.f32.mrf.mxu0
        %v1814 = vadd.f32 %v1461, %v1813
        %1815 = vmatprep.mubr.bf16.mxu0 %v837
        %1816 = vmatmul.mubr.bf16.gmra.mxu0 %v836
        %v1817 = vpop.f32.mrf.mxu0
        %v1818 = vadd.f32 %v1465, %v1817
        %v1819 = vpop.f32.mrf.mxu0
        %v1820 = vadd.f32 %v1467, %v1819
        %v1821 = vpop.f32.mrf.mxu0
        %v1822 = vadd.f32 %v1469, %v1821
        %v1823 = vpop.f32.mrf.mxu0
        %v1824 = vadd.f32 %v1471, %v1823
        %1825 = vmatprep.mubr.bf16.mxu0 %v841
        %1826 = vmatmul.mubr.bf16.gmra.mxu0 %v840
        %v1827 = vpop.f32.mrf.mxu0
        %v1828 = vadd.f32 %v1475, %v1827
        %v1829 = vpop.f32.mrf.mxu0
        %v1830 = vadd.f32 %v1477, %v1829
        %v1831 = vpop.f32.mrf.mxu0
        %v1832 = vadd.f32 %v1479, %v1831
        %v1833 = vpop.f32.mrf.mxu0
        %v1834 = vadd.f32 %v1481, %v1833
        %1835 = vmatprep.mubr.bf16.mxu0 %v845
        %1836 = vmatmul.mubr.bf16.gmra.mxu0 %v844
        %v1837 = vpop.f32.mrf.mxu0
        %v1838 = vadd.f32 %v1485, %v1837
        %v1839 = vpop.f32.mrf.mxu0
        %v1840 = vadd.f32 %v1487, %v1839
        %v1841 = vpop.f32.mrf.mxu0
        %v1842 = vadd.f32 %v1489, %v1841
        %v1843 = vpop.f32.mrf.mxu0
        %v1844 = vadd.f32 %v1491, %v1843
        %1845 = vmatprep.mubr.bf16.mxu0 %v849
        %1846 = vmatmul.mubr.bf16.gmra.mxu0 %v848
        %v1847 = vpop.f32.mrf.mxu0
        %v1848 = vadd.f32 %v1495, %v1847
        %v1849 = vpop.f32.mrf.mxu0
        %v1850 = vadd.f32 %v1497, %v1849
        %v1851 = vpop.f32.mrf.mxu0
        %v1852 = vadd.f32 %v1499, %v1851
        %v1853 = vpop.f32.mrf.mxu0
        %v1854 = vadd.f32 %v1501, %v1853
        %1855 = vmatprep.mubr.bf16.mxu0 %v853
        %1856 = vmatmul.mubr.bf16.gmra.mxu0 %v852
        %v1857 = vpop.f32.mrf.mxu0
        %v1858 = vadd.f32 %v1505, %v1857
        %v1859 = vpop.f32.mrf.mxu0
        %v1860 = vadd.f32 %v1507, %v1859
        %v1861 = vpop.f32.mrf.mxu0
        %v1862 = vadd.f32 %v1509, %v1861
        %v1863 = vpop.f32.mrf.mxu0
        %v1864 = vadd.f32 %v1511, %v1863
        %1865 = vmatprep.mubr.bf16.mxu0 %v857
        %1866 = vmatmul.mubr.bf16.gmra.mxu0 %v856
        %v1867 = vpop.f32.mrf.mxu0
        %v1868 = vadd.f32 %v1515, %v1867
        %v1869 = vpop.f32.mrf.mxu0
        %v1870 = vadd.f32 %v1517, %v1869
        %v1871 = vpop.f32.mrf.mxu0
        %v1872 = vadd.f32 %v1519, %v1871
        %v1873 = vpop.f32.mrf.mxu0
        %v1874 = vadd.f32 %v1521, %v1873
        %1875 = vmatprep.mubr.bf16.mxu0 %v861
        %1876 = vmatmul.mubr.bf16.gmra.mxu0 %v860
        %v1877 = vpop.f32.mrf.mxu0
        %v1878 = vadd.f32 %v1525, %v1877
        %v1879 = vpop.f32.mrf.mxu0
        %v1880 = vadd.f32 %v1527, %v1879
        %v1881 = vpop.f32.mrf.mxu0
        %v1882 = vadd.f32 %v1529, %v1881
        %v1883 = vpop.f32.mrf.mxu0
        %v1884 = vadd.f32 %v1531, %v1883
        %1885 = vmatprep.mubr.bf16.mxu0 %v865
        %1886 = vmatmul.mubr.bf16.gmra.mxu0 %v864
        %v1887 = vpop.f32.mrf.mxu0
        %v1888 = vadd.f32 %v1535, %v1887
        %v1889 = vpop.f32.mrf.mxu0
        %v1890 = vadd.f32 %v1537, %v1889
        %v1891 = vpop.f32.mrf.mxu0
        %v1892 = vadd.f32 %v1539, %v1891
        %v1893 = vpop.f32.mrf.mxu0
        %v1894 = vadd.f32 %v1541, %v1893
        %1895 = vmatprep.mubr.bf16.mxu0 %v869
        %1896 = vmatmul.mubr.bf16.gmra.mxu0 %v868
        %v1897 = vpop.f32.mrf.mxu0
        %v1898 = vadd.f32 %v1545, %v1897
        %v1899 = vpop.f32.mrf.mxu0
        %v1900 = vadd.f32 %v1547, %v1899
        %v1901 = vpop.f32.mrf.mxu0
        %v1902 = vadd.f32 %v1549, %v1901
        %v1903 = vpop.f32.mrf.mxu0
        %v1904 = vadd.f32 %v1551, %v1903
        %1905 = vmatprep.mubr.bf16.mxu0 %v873
        %1906 = vmatmul.mubr.bf16.gmra.mxu0 %v872
        %v1907 = vpop.f32.mrf.mxu0
        %v1908 = vadd.f32 %v1555, %v1907
        %v1909 = vpop.f32.mrf.mxu0
        %v1910 = vadd.f32 %v1557, %v1909
        %v1911 = vpop.f32.mrf.mxu0
        %v1912 = vadd.f32 %v1559, %v1911
        %v1913 = vpop.f32.mrf.mxu0
        %v1914 = vadd.f32 %v1561, %v1913
        %1915 = vmatprep.mubr.bf16.mxu0 %v877
        %1916 = vmatmul.mubr.bf16.gmra.mxu0 %v876
        %v1917 = vpop.f32.mrf.mxu0
        %v1918 = vadd.f32 %v1565, %v1917
        %v1919 = vpop.f32.mrf.mxu0
        %v1920 = vadd.f32 %v1567, %v1919
        %v1921 = vpop.f32.mrf.mxu0
        %v1922 = vadd.f32 %v1569, %v1921
        %v1923 = vpop.f32.mrf.mxu0
        %v1924 = vadd.f32 %v1571, %v1923
        %1925 = vmatprep.mubr.bf16.mxu0 %v881
        %1926 = vmatmul.mubr.bf16.gmra.mxu0 %v880
        %v1927 = vpop.f32.mrf.mxu0
        %v1928 = vadd.f32 %v1575, %v1927
        %v1929 = vpop.f32.mrf.mxu0
        %v1930 = vadd.f32 %v1577, %v1929
        %v1931 = vpop.f32.mrf.mxu0
        %v1932 = vadd.f32 %v1579, %v1931
        %v1933 = vpop.f32.mrf.mxu0
        %v1934 = vadd.f32 %v1581, %v1933
        %1935 = vmatprep.mubr.bf16.mxu0 %v885
        %1936 = vmatmul.mubr.bf16.gmra.mxu0 %v884
        %v1937 = vpop.f32.mrf.mxu0
        %v1938 = vadd.f32 %v1585, %v1937
        %v1939 = vpop.f32.mrf.mxu0
        %v1940 = vadd.f32 %v1587, %v1939
        %v1941 = vpop.f32.mrf.mxu0
        %v1942 = vadd.f32 %v1589, %v1941
        %v1943 = vpop.f32.mrf.mxu0
        %v1944 = vadd.f32 %v1591, %v1943
        %1945 = vmatprep.mubr.bf16.mxu0 %v889
        %1946 = vmatmul.mubr.bf16.gmra.mxu0 %v888
        %v1947 = vpop.f32.mrf.mxu0
        %v1948 = vadd.f32 %v1595, %v1947
        %v1949 = vpop.f32.mrf.mxu0
        %v1950 = vadd.f32 %v1597, %v1949
        %v1951 = vpop.f32.mrf.mxu0
        %v1952 = vadd.f32 %v1599, %v1951
        %v1953 = vpop.f32.mrf.mxu0
        %v1954 = vadd.f32 %v1601, %v1953
        %1955 = vmatprep.mubr.bf16.mxu0 %v893
        %1956 = vmatmul.mubr.bf16.gmra.mxu0 %v892
        %v1957 = vpop.f32.mrf.mxu0
        %v1958 = vadd.f32 %v1605, %v1957
        %v1959 = vpop.f32.mrf.mxu0
        %v1960 = vadd.f32 %v1607, %v1959
        %v1961 = vpop.f32.mrf.mxu0
        %v1962 = vadd.f32 %v1609, %v1961
        %v1963 = vpop.f32.mrf.mxu0
        %v1964 = vadd.f32 %v1611, %v1963
        %1965 = vmatprep.mubr.bf16.mxu0 %v897
        %1966 = vmatmul.mubr.bf16.gmra.mxu0 %v896
        %v1967 = vpop.f32.mrf.mxu0
        %v1968 = vadd.f32 %v1615, %v1967
        %v1969 = vpop.f32.mrf.mxu0
        %v1970 = vadd.f32 %v1617, %v1969
        %v1971 = vpop.f32.mrf.mxu0
        %v1972 = vadd.f32 %v1619, %v1971
        %v1973 = vpop.f32.mrf.mxu0
        %v1974 = vadd.f32 %v1621, %v1973
        %1975 = vmatprep.mubr.bf16.mxu0 %v901
        %1976 = vmatmul.mubr.bf16.gmra.mxu0 %v900
        %v1977 = vpop.f32.mrf.mxu0
        %v1978 = vadd.f32 %v1625, %v1977
        %v1979 = vpop.f32.mrf.mxu0
        %v1980 = vadd.f32 %v1627, %v1979
        %v1981 = vpop.f32.mrf.mxu0
        %v1982 = vadd.f32 %v1629, %v1981
        %v1983 = vpop.f32.mrf.mxu0
        %v1984 = vadd.f32 %v1631, %v1983
        %1985 = vmatprep.mubr.bf16.mxu0 %v905
        %1986 = vmatmul.mubr.bf16.gmra.mxu0 %v904
        %v1987 = vpop.f32.mrf.mxu0
        %v1988 = vadd.f32 %v1635, %v1987
        %v1989 = vpop.f32.mrf.mxu0
        %v1990 = vadd.f32 %v1637, %v1989
        %v1991 = vpop.f32.mrf.mxu0
        %v1992 = vadd.f32 %v1639, %v1991
        %v1993 = vpop.f32.mrf.mxu0
        %v1994 = vadd.f32 %v1641, %v1993
        %1995 = vmatprep.mubr.bf16.mxu0 %v909
        %1996 = vmatmul.mubr.bf16.gmra.mxu0 %v908
        %v1997 = vpop.f32.mrf.mxu0
        %v1998 = vadd.f32 %v1645, %v1997
        %v1999 = vpop.f32.mrf.mxu0
        %v2000 = vadd.f32 %v1647, %v1999
        %v2001 = vpop.f32.mrf.mxu0
        %v2002 = vadd.f32 %v1649, %v2001
        %v2003 = vpop.f32.mrf.mxu0
        %v2004 = vadd.f32 %v1651, %v2003
        %2005 = vmatprep.mubr.bf16.mxu0 %v913
        %2006 = vmatmul.mubr.bf16.gmra.mxu0 %v912
        %v2007 = vpop.f32.mrf.mxu0
        %v2008 = vadd.f32 %v1655, %v2007
        %v2009 = vpop.f32.mrf.mxu0
        %v2010 = vadd.f32 %v1657, %v2009
        %v2011 = vpop.f32.mrf.mxu0
        %v2012 = vadd.f32 %v1659, %v2011
        %v2013 = vpop.f32.mrf.mxu0
        %v2014 = vadd.f32 %v1661, %v2013
        %2015 = vdwg.mxu0
        %v2016 = vmax.f32 %v1698, 0.0
        %v2017 = vmax.f32 %v1700, 0.0
        %v2018 = vmax.f32 %v1702, 0.0
        %v2019 = vmax.f32 %v1704, 0.0
        %v2020 = vmax.f32 %v1708, 0.0
        %v2021 = vmax.f32 %v1710, 0.0
        %v2022 = vmax.f32 %v1712, 0.0
        %v2023 = vmax.f32 %v1714, 0.0
        %v2024 = vmax.f32 %v1718, 0.0
        %v2025 = vmax.f32 %v1720, 0.0
        %v2026 = vmax.f32 %v1722, 0.0
        %v2027 = vmax.f32 %v1724, 0.0
        %v2028 = vmax.f32 %v1728, 0.0
        %v2029 = vmax.f32 %v1730, 0.0
        %v2030 = vmax.f32 %v1732, 0.0
        %v2031 = vmax.f32 %v1734, 0.0
        %v2032 = vmax.f32 %v1738, 0.0
        %v2033 = vmax.f32 %v1740, 0.0
        %v2034 = vmax.f32 %v1742, 0.0
        %v2035 = vmax.f32 %v1744, 0.0
        %v2036 = vmax.f32 %v1748, 0.0
        %v2037 = vmax.f32 %v1750, 0.0
        %v2038 = vmax.f32 %v1752, 0.0
        %v2039 = vmax.f32 %v1754, 0.0
        %v2040 = vmax.f32 %v1758, 0.0
        %v2041 = vmax.f32 %v1760, 0.0
        %v2042 = vmax.f32 %v1762, 0.0
        %v2043 = vmax.f32 %v1764, 0.0
        %v2044 = vmax.f32 %v1768, 0.0
        %v2045 = vmax.f32 %v1770, 0.0
        %v2046 = vmax.f32 %v1772, 0.0
        %v2047 = vmax.f32 %v1774, 0.0
        %v2048 = vmax.f32 %v1778, 0.0
        %v2049 = vmax.f32 %v1780, 0.0
        %v2050 = vmax.f32 %v1782, 0.0
        %v2051 = vmax.f32 %v1784, 0.0
        %v2052 = vmax.f32 %v1788, 0.0
        %v2053 = vmax.f32 %v1790, 0.0
        %v2054 = vmax.f32 %v1792, 0.0
        %v2055 = vmax.f32 %v1794, 0.0
        %v2056 = vmax.f32 %v1798, 0.0
        %v2057 = vmax.f32 %v1800, 0.0
        %v2058 = vmax.f32 %v1802, 0.0
        %v2059 = vmax.f32 %v1804, 0.0
        %v2060 = vmax.f32 %v1808, 0.0
        %v2061 = vmax.f32 %v1810, 0.0
        %v2062 = vmax.f32 %v1812, 0.0
        %v2063 = vmax.f32 %v1814, 0.0
        %v2064 = vmax.f32 %v1818, 0.0
        %v2065 = vmax.f32 %v1820, 0.0
        %v2066 = vmax.f32 %v1822, 0.0
        %v2067 = vmax.f32 %v1824, 0.0
        %v2068 = vmax.f32 %v1828, 0.0
        %v2069 = vmax.f32 %v1830, 0.0
        %v2070 = vmax.f32 %v1832, 0.0
        %v2071 = vmax.f32 %v1834, 0.0
        %v2072 = vmax.f32 %v1838, 0.0
        %v2073 = vmax.f32 %v1840, 0.0
        %v2074 = vmax.f32 %v1842, 0.0
        %v2075 = vmax.f32 %v1844, 0.0
        %v2076 = vmax.f32 %v1848, 0.0
        %v2077 = vmax.f32 %v1850, 0.0
        %v2078 = vmax.f32 %v1852, 0.0
        %v2079 = vmax.f32 %v1854, 0.0
        %v2080 = vmax.f32 %v1858, 0.0
        %v2081 = vmax.f32 %v1860, 0.0
        %v2082 = vmax.f32 %v1862, 0.0
        %v2083 = vmax.f32 %v1864, 0.0
        %v2084 = vmax.f32 %v1868, 0.0
        %v2085 = vmax.f32 %v1870, 0.0
        %v2086 = vmax.f32 %v1872, 0.0
        %v2087 = vmax.f32 %v1874, 0.0
        %v2088 = vmax.f32 %v1878, 0.0
        %v2089 = vmax.f32 %v1880, 0.0
        %v2090 = vmax.f32 %v1882, 0.0
        %v2091 = vmax.f32 %v1884, 0.0
        %v2092 = vmax.f32 %v1888, 0.0
        %v2093 = vmax.f32 %v1890, 0.0
        %v2094 = vmax.f32 %v1892, 0.0
        %v2095 = vmax.f32 %v1894, 0.0
        %v2096 = vmax.f32 %v1898, 0.0
        %v2097 = vmax.f32 %v1900, 0.0
        %v2098 = vmax.f32 %v1902, 0.0
        %v2099 = vmax.f32 %v1904, 0.0
        %v2100 = vmax.f32 %v1908, 0.0
        %v2101 = vmax.f32 %v1910, 0.0
        %v2102 = vmax.f32 %v1912, 0.0
        %v2103 = vmax.f32 %v1914, 0.0
        %v2104 = vmax.f32 %v1918, 0.0
        %v2105 = vmax.f32 %v1920, 0.0
        %v2106 = vmax.f32 %v1922, 0.0
        %v2107 = vmax.f32 %v1924, 0.0
        %v2108 = vmax.f32 %v1928, 0.0
        %v2109 = vmax.f32 %v1930, 0.0
        %v2110 = vmax.f32 %v1932, 0.0
        %v2111 = vmax.f32 %v1934, 0.0
        %v2112 = vmax.f32 %v1938, 0.0
        %v2113 = vmax.f32 %v1940, 0.0
        %v2114 = vmax.f32 %v1942, 0.0
        %v2115 = vmax.f32 %v1944, 0.0
        %v2116 = vmax.f32 %v1948, 0.0
        %v2117 = vmax.f32 %v1950, 0.0
        %v2118 = vmax.f32 %v1952, 0.0
        %v2119 = vmax.f32 %v1954, 0.0
        %v2120 = vmax.f32 %v1958, 0.0
        %v2121 = vmax.f32 %v1960, 0.0
        %v2122 = vmax.f32 %v1962, 0.0
        %v2123 = vmax.f32 %v1964, 0.0
        %v2124 = vmax.f32 %v1968, 0.0
        %v2125 = vmax.f32 %v1970, 0.0
        %v2126 = vmax.f32 %v1972, 0.0
        %v2127 = vmax.f32 %v1974, 0.0
        %v2128 = vmax.f32 %v1978, 0.0
        %v2129 = vmax.f32 %v1980, 0.0
        %v2130 = vmax.f32 %v1982, 0.0
        %v2131 = vmax.f32 %v1984, 0.0
        %v2132 = vmax.f32 %v1988, 0.0
        %v2133 = vmax.f32 %v1990, 0.0
        %v2134 = vmax.f32 %v1992, 0.0
        %v2135 = vmax.f32 %v1994, 0.0
        %v2136 = vmax.f32 %v1998, 0.0
        %v2137 = vmax.f32 %v2000, 0.0
        %v2138 = vmax.f32 %v2002, 0.0
        %v2139 = vmax.f32 %v2004, 0.0
        %v2140 = vmax.f32 %v2008, 0.0
        %v2141 = vmax.f32 %v2010, 0.0
        %v2142 = vmax.f32 %v2012, 0.0
        %v2143 = vmax.f32 %v2014, 0.0
        %v2144 = vpack.c.bf16 %v2018, %v2016
        %v2145 = vpack.c.bf16 %v2019, %v2017
        %v2146 = vpack.c.bf16 %v2022, %v2020
        %v2147 = vpack.c.bf16 %v2023, %v2021
        %v2148 = vpack.c.bf16 %v2026, %v2024
        %v2149 = vpack.c.bf16 %v2027, %v2025
        %v2150 = vpack.c.bf16 %v2030, %v2028
        %v2151 = vpack.c.bf16 %v2031, %v2029
        %v2152 = vpack.c.bf16 %v2034, %v2032
        %v2153 = vpack.c.bf16 %v2035, %v2033
        %v2154 = vpack.c.bf16 %v2038, %v2036
        %v2155 = vpack.c.bf16 %v2039, %v2037
        %v2156 = vpack.c.bf16 %v2042, %v2040
        %v2157 = vpack.c.bf16 %v2043, %v2041
        %v2158 = vpack.c.bf16 %v2046, %v2044
        %v2159 = vpack.c.bf16 %v2047, %v2045
        %v2160 = vpack.c.bf16 %v2050, %v2048
        %v2161 = vpack.c.bf16 %v2051, %v2049
        %v2162 = vpack.c.bf16 %v2054, %v2052
        %v2163 = vpack.c.bf16 %v2055, %v2053
        %v2164 = vpack.c.bf16 %v2058, %v2056
        %v2165 = vpack.c.bf16 %v2059, %v2057
        %v2166 = vpack.c.bf16 %v2062, %v2060
        %v2167 = vpack.c.bf16 %v2063, %v2061
        %v2168 = vpack.c.bf16 %v2066, %v2064
        %v2169 = vpack.c.bf16 %v2067, %v2065
        %v2170 = vpack.c.bf16 %v2070, %v2068
        %v2171 = vpack.c.bf16 %v2071, %v2069
        %v2172 = vpack.c.bf16 %v2074, %v2072
        %v2173 = vpack.c.bf16 %v2075, %v2073
        %v2174 = vpack.c.bf16 %v2078, %v2076
        %v2175 = vpack.c.bf16 %v2079, %v2077
        %v2176 = vpack.c.bf16 %v2082, %v2080
        %v2177 = vpack.c.bf16 %v2083, %v2081
        %v2178 = vpack.c.bf16 %v2086, %v2084
        %v2179 = vpack.c.bf16 %v2087, %v2085
        %v2180 = vpack.c.bf16 %v2090, %v2088
        %v2181 = vpack.c.bf16 %v2091, %v2089
        %v2182 = vpack.c.bf16 %v2094, %v2092
        %v2183 = vpack.c.bf16 %v2095, %v2093
        %v2184 = vpack.c.bf16 %v2098, %v2096
        %v2185 = vpack.c.bf16 %v2099, %v2097
        %v2186 = vpack.c.bf16 %v2102, %v2100
        %v2187 = vpack.c.bf16 %v2103, %v2101
        %v2188 = vpack.c.bf16 %v2106, %v2104
        %v2189 = vpack.c.bf16 %v2107, %v2105
        %v2190 = vpack.c.bf16 %v2110, %v2108
        %v2191 = vpack.c.bf16 %v2111, %v2109
        %v2192 = vpack.c.bf16 %v2114, %v2112
        %v2193 = vpack.c.bf16 %v2115, %v2113
        %v2194 = vpack.c.bf16 %v2118, %v2116
        %v2195 = vpack.c.bf16 %v2119, %v2117
        %v2196 = vpack.c.bf16 %v2122, %v2120
        %v2197 = vpack.c.bf16 %v2123, %v2121
        %v2198 = vpack.c.bf16 %v2126, %v2124
        %v2199 = vpack.c.bf16 %v2127, %v2125
        %v2200 = vpack.c.bf16 %v2130, %v2128
        %v2201 = vpack.c.bf16 %v2131, %v2129
        %v2202 = vpack.c.bf16 %v2134, %v2132
        %v2203 = vpack.c.bf16 %v2135, %v2133
        %v2204 = vpack.c.bf16 %v2138, %v2136
        %v2205 = vpack.c.bf16 %v2139, %v2137
        %v2206 = vpack.c.bf16 %v2142, %v2140
        %v2207 = vpack.c.bf16 %v2143, %v2141
        %v2208 = vld [vmem:[%s3] sm:$0xf]
        %v2209 = vld [vmem:[%s3 + $0x4] sm:$0xf]
        %v2210 = vld [vmem:[%s3 + $0x8] sm:$0xf]
        %v2211 = vld [vmem:[%s3 + $0xc] sm:$0xf]
        %v2212 = vld [vmem:[%s3 + $0x10] sm:$0xf]
        %v2213 = vld [vmem:[%s3 + $0x14] sm:$0xf]
        %v2214 = vld [vmem:[%s3 + $0x18] sm:$0xf]
        %v2215 = vld [vmem:[%s3 + $0x1c] sm:$0xf]
        %v2216 = vld [vmem:[%s3 + $0x20] sm:$0xf]
        %v2217 = vld [vmem:[%s3 + $0x24] sm:$0xf]
        %v2218 = vld [vmem:[%s3 + $0x28] sm:$0xf]
        %v2219 = vld [vmem:[%s3 + $0x2c] sm:$0xf]
        %v2220 = vld [vmem:[%s3 + $0x30] sm:$0xf]
        %v2221 = vld [vmem:[%s3 + $0x34] sm:$0xf]
        %v2222 = vld [vmem:[%s3 + $0x38] sm:$0xf]
        %v2223 = vld [vmem:[%s3 + $0x3c] sm:$0xf]
        %v2224 = vld [vmem:[%s3 + $0x40] sm:$0xf]
        %v2225 = vld [vmem:[%s3 + $0x44] sm:$0xf]
        %v2226 = vld [vmem:[%s3 + $0x48] sm:$0xf]
        %v2227 = vld [vmem:[%s3 + $0x4c] sm:$0xf]
        %v2228 = vld [vmem:[%s3 + $0x50] sm:$0xf]
        %v2229 = vld [vmem:[%s3 + $0x54] sm:$0xf]
        %v2230 = vld [vmem:[%s3 + $0x58] sm:$0xf]
        %v2231 = vld [vmem:[%s3 + $0x5c] sm:$0xf]
        %v2232 = vld [vmem:[%s3 + $0x60] sm:$0xf]
        %v2233 = vld [vmem:[%s3 + $0x64] sm:$0xf]
        %v2234 = vld [vmem:[%s3 + $0x68] sm:$0xf]
        %v2235 = vld [vmem:[%s3 + $0x6c] sm:$0xf]
        %v2236 = vld [vmem:[%s3 + $0x70] sm:$0xf]
        %v2237 = vld [vmem:[%s3 + $0x74] sm:$0xf]
        %v2238 = vld [vmem:[%s3 + $0x78] sm:$0xf]
        %v2239 = vld [vmem:[%s3 + $0x7c] sm:$0xf]
        %v2240 = vld [vmem:[#allocation8] sm:$0x1]
        %v2242 = vlaneseq
        %v2243 = vshrl.u32 %v2242, 7
        %v2244 = vsub.s32 0, %v2243
        %v2245 = vrot.slane %v2240, %v2244
        %v2279 = vunpack.c.l.b16 %v2208
        %v2280 = vunpack.c.l.b16 %v2209
        %v2281 = vunpack.c.l.b16 %v2210
        %v2282 = vunpack.c.l.b16 %v2211
        %v2283 = vunpack.c.l.b16 %v2212
        %v2284 = vunpack.c.l.b16 %v2213
        %v2285 = vunpack.c.l.b16 %v2214
        %v2286 = vunpack.c.l.b16 %v2215
        %v2287 = vunpack.c.l.b16 %v2216
        %v2288 = vunpack.c.l.b16 %v2217
        %v2289 = vunpack.c.l.b16 %v2218
        %v2290 = vunpack.c.l.b16 %v2219
        %v2291 = vunpack.c.l.b16 %v2220
        %v2292 = vunpack.c.l.b16 %v2221
        %v2293 = vunpack.c.l.b16 %v2222
        %v2294 = vunpack.c.l.b16 %v2223
        %v2295 = vunpack.c.l.b16 %v2224
        %v2296 = vunpack.c.l.b16 %v2225
        %v2297 = vunpack.c.l.b16 %v2226
        %v2298 = vunpack.c.l.b16 %v2227
        %v2299 = vunpack.c.l.b16 %v2228
        %v2300 = vunpack.c.l.b16 %v2229
        %v2301 = vunpack.c.l.b16 %v2230
        %v2302 = vunpack.c.l.b16 %v2231
        %v2303 = vunpack.c.l.b16 %v2232
        %v2304 = vunpack.c.l.b16 %v2233
        %v2305 = vunpack.c.l.b16 %v2234
        %v2306 = vunpack.c.l.b16 %v2235
        %v2307 = vunpack.c.l.b16 %v2236
        %v2308 = vunpack.c.l.b16 %v2237
        %v2309 = vunpack.c.l.b16 %v2238
        %v2310 = vunpack.c.l.b16 %v2239
        %v2311 = vpack.c.b16 %v2280, %v2279
        %v2312 = vpack.c.b16 %v2282, %v2281
        %v2313 = vpack.c.b16 %v2284, %v2283
        %v2314 = vpack.c.b16 %v2286, %v2285
        %v2315 = vpack.c.b16 %v2288, %v2287
        %v2316 = vpack.c.b16 %v2290, %v2289
        %v2317 = vpack.c.b16 %v2292, %v2291
        %v2318 = vpack.c.b16 %v2294, %v2293
        %v2319 = vpack.c.b16 %v2296, %v2295
        %v2320 = vpack.c.b16 %v2298, %v2297
        %v2321 = vpack.c.b16 %v2300, %v2299
        %v2322 = vpack.c.b16 %v2302, %v2301
        %v2323 = vpack.c.b16 %v2304, %v2303
        %v2324 = vpack.c.b16 %v2306, %v2305
        %v2325 = vpack.c.b16 %v2308, %v2307
        %v2326 = vpack.c.b16 %v2310, %v2309
        %2343 = vmatprep.subr.bf16.mxu0 0
        %2344 = vmatpush1.bf16.msra.mxu0 %v2318
        %2345 = vmatprep.subr.bf16.mxu0 0
        %2346 = vmatpush1.bf16.msra.mxu0 %v2317
        %2347 = vmatprep.subr.bf16.mxu0 0
        %2348 = vmatpush1.bf16.msra.mxu0 %v2316
        %2349 = vmatprep.subr.bf16.mxu0 0
        %2350 = vmatpush1.bf16.msra.mxu0 %v2315
        %2351 = vmatprep.subr.bf16.mxu0 0
        %2352 = vmatpush1.bf16.msra.mxu0 %v2314
        %2353 = vmatprep.subr.bf16.mxu0 0
        %2354 = vmatpush1.bf16.msra.mxu0 %v2313
        %2355 = vmatprep.subr.bf16.mxu0 0
        %2356 = vmatpush1.bf16.msra.mxu0 %v2312
        %2357 = vmatprep.subr.bf16.mxu0 0
        %2358 = vmatpush1.bf16.msra.mxu0 %v2311
        %2359 = vmatprep.subr.bf16.mxu0 0
        %2360 = vmatpush2.bf16.msra.mxu0 %v2326
        %2361 = vmatprep.subr.bf16.mxu0 0
        %2362 = vmatpush2.bf16.msra.mxu0 %v2325
        %2363 = vmatprep.subr.bf16.mxu0 0
        %2364 = vmatpush2.bf16.msra.mxu0 %v2324
        %2365 = vmatprep.subr.bf16.mxu0 0
        %2366 = vmatpush2.bf16.msra.mxu0 %v2323
        %2367 = vmatprep.subr.bf16.mxu0 0
        %2368 = vmatpush2.bf16.msra.mxu0 %v2322
        %2369 = vmatprep.subr.bf16.mxu0 0
        %2370 = vmatpush2.bf16.msra.mxu0 %v2321
        %2371 = vmatprep.subr.bf16.mxu0 0
        %2372 = vmatpush2.bf16.msra.mxu0 %v2320
        %2373 = vmatprep.subr.bf16.mxu0 0
        %2374 = vmatpush2.bf16.msra.mxu0 %v2319
        %2375 = vmatprep.mubr.bf16.mxu0 %v2145
        %2376 = vmatmul.mubr.bf16.gmra.mxu0 %v2144
        %v2377 = vpop.f32.mrf.mxu0
        %v2378 = vadd.f32 %v2245, %v2377
        %v2379 = vpop.f32.mrf.mxu0
        %v2380 = vpop.f32.mrf.mxu0
        %v2381 = vadd.f32 %v2245, %v2380
        %v2382 = vpop.f32.mrf.mxu0
        %2383 = vmatprep.mubr.bf16.mxu0 %v2147
        %2384 = vmatmul.mubr.bf16.gmra.mxu0 %v2146
        %v2385 = vpop.f32.mrf.mxu0
        %v2386 = vadd.f32 %v2245, %v2385
        %v2387 = vpop.f32.mrf.mxu0
        %v2388 = vpop.f32.mrf.mxu0
        %v2389 = vadd.f32 %v2245, %v2388
        %v2390 = vpop.f32.mrf.mxu0
        %2391 = vmatprep.mubr.bf16.mxu0 %v2149
        %2392 = vmatmul.mubr.bf16.gmra.mxu0 %v2148
        %v2393 = vpop.f32.mrf.mxu0
        %v2394 = vadd.f32 %v2245, %v2393
        %v2395 = vpop.f32.mrf.mxu0
        %v2396 = vpop.f32.mrf.mxu0
        %v2397 = vadd.f32 %v2245, %v2396
        %v2398 = vpop.f32.mrf.mxu0
        %2399 = vmatprep.mubr.bf16.mxu0 %v2151
        %2400 = vmatmul.mubr.bf16.gmra.mxu0 %v2150
        %v2401 = vpop.f32.mrf.mxu0
        %v2402 = vadd.f32 %v2245, %v2401
        %v2403 = vpop.f32.mrf.mxu0
        %v2404 = vpop.f32.mrf.mxu0
        %v2405 = vadd.f32 %v2245, %v2404
        %v2406 = vpop.f32.mrf.mxu0
        %2407 = vmatprep.mubr.bf16.mxu0 %v2153
        %2408 = vmatmul.mubr.bf16.gmra.mxu0 %v2152
        %v2409 = vpop.f32.mrf.mxu0
        %v2410 = vadd.f32 %v2245, %v2409
        %v2411 = vpop.f32.mrf.mxu0
        %v2412 = vpop.f32.mrf.mxu0
        %v2413 = vadd.f32 %v2245, %v2412
        %v2414 = vpop.f32.mrf.mxu0
        %2415 = vmatprep.mubr.bf16.mxu0 %v2155
        %2416 = vmatmul.mubr.bf16.gmra.mxu0 %v2154
        %v2417 = vpop.f32.mrf.mxu0
        %v2418 = vadd.f32 %v2245, %v2417
        %v2419 = vpop.f32.mrf.mxu0
        %v2420 = vpop.f32.mrf.mxu0
        %v2421 = vadd.f32 %v2245, %v2420
        %v2422 = vpop.f32.mrf.mxu0
        %2423 = vmatprep.mubr.bf16.mxu0 %v2157
        %2424 = vmatmul.mubr.bf16.gmra.mxu0 %v2156
        %v2425 = vpop.f32.mrf.mxu0
        %v2426 = vadd.f32 %v2245, %v2425
        %v2427 = vpop.f32.mrf.mxu0
        %v2428 = vpop.f32.mrf.mxu0
        %v2429 = vadd.f32 %v2245, %v2428
        %v2430 = vpop.f32.mrf.mxu0
        %2431 = vmatprep.mubr.bf16.mxu0 %v2159
        %2432 = vmatmul.mubr.bf16.gmra.mxu0 %v2158
        %v2433 = vpop.f32.mrf.mxu0
        %v2434 = vadd.f32 %v2245, %v2433
        %v2435 = vpop.f32.mrf.mxu0
        %v2436 = vpop.f32.mrf.mxu0
        %v2437 = vadd.f32 %v2245, %v2436
        %v2438 = vpop.f32.mrf.mxu0
        %2439 = vmatprep.mubr.bf16.mxu0 %v2161
        %2440 = vmatmul.mubr.bf16.gmra.mxu0 %v2160
        %v2441 = vpop.f32.mrf.mxu0
        %v2442 = vadd.f32 %v2245, %v2441
        %v2443 = vpop.f32.mrf.mxu0
        %v2444 = vpop.f32.mrf.mxu0
        %v2445 = vadd.f32 %v2245, %v2444
        %v2446 = vpop.f32.mrf.mxu0
        %2447 = vmatprep.mubr.bf16.mxu0 %v2163
        %2448 = vmatmul.mubr.bf16.gmra.mxu0 %v2162
        %v2449 = vpop.f32.mrf.mxu0
        %v2450 = vadd.f32 %v2245, %v2449
        %v2451 = vpop.f32.mrf.mxu0
        %v2452 = vpop.f32.mrf.mxu0
        %v2453 = vadd.f32 %v2245, %v2452
        %v2454 = vpop.f32.mrf.mxu0
        %2455 = vmatprep.mubr.bf16.mxu0 %v2165
        %2456 = vmatmul.mubr.bf16.gmra.mxu0 %v2164
        %v2457 = vpop.f32.mrf.mxu0
        %v2458 = vadd.f32 %v2245, %v2457
        %v2459 = vpop.f32.mrf.mxu0
        %v2460 = vpop.f32.mrf.mxu0
        %v2461 = vadd.f32 %v2245, %v2460
        %v2462 = vpop.f32.mrf.mxu0
        %2463 = vmatprep.mubr.bf16.mxu0 %v2167
        %2464 = vmatmul.mubr.bf16.gmra.mxu0 %v2166
        %v2465 = vpop.f32.mrf.mxu0
        %v2466 = vadd.f32 %v2245, %v2465
        %v2467 = vpop.f32.mrf.mxu0
        %v2468 = vpop.f32.mrf.mxu0
        %v2469 = vadd.f32 %v2245, %v2468
        %v2470 = vpop.f32.mrf.mxu0
        %2471 = vmatprep.mubr.bf16.mxu0 %v2169
        %2472 = vmatmul.mubr.bf16.gmra.mxu0 %v2168
        %v2473 = vpop.f32.mrf.mxu0
        %v2474 = vadd.f32 %v2245, %v2473
        %v2475 = vpop.f32.mrf.mxu0
        %v2476 = vpop.f32.mrf.mxu0
        %v2477 = vadd.f32 %v2245, %v2476
        %v2478 = vpop.f32.mrf.mxu0
        %2479 = vmatprep.mubr.bf16.mxu0 %v2171
        %2480 = vmatmul.mubr.bf16.gmra.mxu0 %v2170
        %v2481 = vpop.f32.mrf.mxu0
        %v2482 = vadd.f32 %v2245, %v2481
        %v2483 = vpop.f32.mrf.mxu0
        %v2484 = vpop.f32.mrf.mxu0
        %v2485 = vadd.f32 %v2245, %v2484
        %v2486 = vpop.f32.mrf.mxu0
        %2487 = vmatprep.mubr.bf16.mxu0 %v2173
        %2488 = vmatmul.mubr.bf16.gmra.mxu0 %v2172
        %v2489 = vpop.f32.mrf.mxu0
        %v2490 = vadd.f32 %v2245, %v2489
        %v2491 = vpop.f32.mrf.mxu0
        %v2492 = vpop.f32.mrf.mxu0
        %v2493 = vadd.f32 %v2245, %v2492
        %v2494 = vpop.f32.mrf.mxu0
        %2495 = vmatprep.mubr.bf16.mxu0 %v2175
        %2496 = vmatmul.mubr.bf16.gmra.mxu0 %v2174
        %v2497 = vpop.f32.mrf.mxu0
        %v2498 = vadd.f32 %v2245, %v2497
        %v2499 = vpop.f32.mrf.mxu0
        %v2500 = vpop.f32.mrf.mxu0
        %v2501 = vadd.f32 %v2245, %v2500
        %v2502 = vpop.f32.mrf.mxu0
        %2503 = vmatprep.mubr.bf16.mxu0 %v2177
        %2504 = vmatmul.mubr.bf16.gmra.mxu0 %v2176
        %v2505 = vpop.f32.mrf.mxu0
        %v2506 = vadd.f32 %v2245, %v2505
        %v2507 = vpop.f32.mrf.mxu0
        %v2508 = vpop.f32.mrf.mxu0
        %v2509 = vadd.f32 %v2245, %v2508
        %v2510 = vpop.f32.mrf.mxu0
        %2511 = vmatprep.mubr.bf16.mxu0 %v2179
        %2512 = vmatmul.mubr.bf16.gmra.mxu0 %v2178
        %v2513 = vpop.f32.mrf.mxu0
        %v2514 = vadd.f32 %v2245, %v2513
        %v2515 = vpop.f32.mrf.mxu0
        %v2516 = vpop.f32.mrf.mxu0
        %v2517 = vadd.f32 %v2245, %v2516
        %v2518 = vpop.f32.mrf.mxu0
        %2519 = vmatprep.mubr.bf16.mxu0 %v2181
        %2520 = vmatmul.mubr.bf16.gmra.mxu0 %v2180
        %v2521 = vpop.f32.mrf.mxu0
        %v2522 = vadd.f32 %v2245, %v2521
        %v2523 = vpop.f32.mrf.mxu0
        %v2524 = vpop.f32.mrf.mxu0
        %v2525 = vadd.f32 %v2245, %v2524
        %v2526 = vpop.f32.mrf.mxu0
        %2527 = vmatprep.mubr.bf16.mxu0 %v2183
        %2528 = vmatmul.mubr.bf16.gmra.mxu0 %v2182
        %v2529 = vpop.f32.mrf.mxu0
        %v2530 = vadd.f32 %v2245, %v2529
        %v2531 = vpop.f32.mrf.mxu0
        %v2532 = vpop.f32.mrf.mxu0
        %v2533 = vadd.f32 %v2245, %v2532
        %v2534 = vpop.f32.mrf.mxu0
        %2535 = vmatprep.mubr.bf16.mxu0 %v2185
        %2536 = vmatmul.mubr.bf16.gmra.mxu0 %v2184
        %v2537 = vpop.f32.mrf.mxu0
        %v2538 = vadd.f32 %v2245, %v2537
        %v2539 = vpop.f32.mrf.mxu0
        %v2540 = vpop.f32.mrf.mxu0
        %v2541 = vadd.f32 %v2245, %v2540
        %v2542 = vpop.f32.mrf.mxu0
        %2543 = vmatprep.mubr.bf16.mxu0 %v2187
        %2544 = vmatmul.mubr.bf16.gmra.mxu0 %v2186
        %v2545 = vpop.f32.mrf.mxu0
        %v2546 = vadd.f32 %v2245, %v2545
        %v2547 = vpop.f32.mrf.mxu0
        %v2548 = vpop.f32.mrf.mxu0
        %v2549 = vadd.f32 %v2245, %v2548
        %v2550 = vpop.f32.mrf.mxu0
        %2551 = vmatprep.mubr.bf16.mxu0 %v2189
        %2552 = vmatmul.mubr.bf16.gmra.mxu0 %v2188
        %v2553 = vpop.f32.mrf.mxu0
        %v2554 = vadd.f32 %v2245, %v2553
        %v2555 = vpop.f32.mrf.mxu0
        %v2556 = vpop.f32.mrf.mxu0
        %v2557 = vadd.f32 %v2245, %v2556
        %v2558 = vpop.f32.mrf.mxu0
        %2559 = vmatprep.mubr.bf16.mxu0 %v2191
        %2560 = vmatmul.mubr.bf16.gmra.mxu0 %v2190
        %v2561 = vpop.f32.mrf.mxu0
        %v2562 = vadd.f32 %v2245, %v2561
        %v2563 = vpop.f32.mrf.mxu0
        %v2564 = vpop.f32.mrf.mxu0
        %v2565 = vadd.f32 %v2245, %v2564
        %v2566 = vpop.f32.mrf.mxu0
        %2567 = vmatprep.mubr.bf16.mxu0 %v2193
        %2568 = vmatmul.mubr.bf16.gmra.mxu0 %v2192
        %v2569 = vpop.f32.mrf.mxu0
        %v2570 = vadd.f32 %v2245, %v2569
        %v2571 = vpop.f32.mrf.mxu0
        %v2572 = vpop.f32.mrf.mxu0
        %v2573 = vadd.f32 %v2245, %v2572
        %v2574 = vpop.f32.mrf.mxu0
        %2575 = vmatprep.mubr.bf16.mxu0 %v2195
        %2576 = vmatmul.mubr.bf16.gmra.mxu0 %v2194
        %v2577 = vpop.f32.mrf.mxu0
        %v2578 = vadd.f32 %v2245, %v2577
        %v2579 = vpop.f32.mrf.mxu0
        %v2580 = vpop.f32.mrf.mxu0
        %v2581 = vadd.f32 %v2245, %v2580
        %v2582 = vpop.f32.mrf.mxu0
        %2583 = vmatprep.mubr.bf16.mxu0 %v2197
        %2584 = vmatmul.mubr.bf16.gmra.mxu0 %v2196
        %v2585 = vpop.f32.mrf.mxu0
        %v2586 = vadd.f32 %v2245, %v2585
        %v2587 = vpop.f32.mrf.mxu0
        %v2588 = vpop.f32.mrf.mxu0
        %v2589 = vadd.f32 %v2245, %v2588
        %v2590 = vpop.f32.mrf.mxu0
        %2591 = vmatprep.mubr.bf16.mxu0 %v2199
        %2592 = vmatmul.mubr.bf16.gmra.mxu0 %v2198
        %v2593 = vpop.f32.mrf.mxu0
        %v2594 = vadd.f32 %v2245, %v2593
        %v2595 = vpop.f32.mrf.mxu0
        %v2596 = vpop.f32.mrf.mxu0
        %v2597 = vadd.f32 %v2245, %v2596
        %v2598 = vpop.f32.mrf.mxu0
        %2599 = vmatprep.mubr.bf16.mxu0 %v2201
        %2600 = vmatmul.mubr.bf16.gmra.mxu0 %v2200
        %v2601 = vpop.f32.mrf.mxu0
        %v2602 = vadd.f32 %v2245, %v2601
        %v2603 = vpop.f32.mrf.mxu0
        %v2604 = vpop.f32.mrf.mxu0
        %v2605 = vadd.f32 %v2245, %v2604
        %v2606 = vpop.f32.mrf.mxu0
        %2607 = vmatprep.mubr.bf16.mxu0 %v2203
        %2608 = vmatmul.mubr.bf16.gmra.mxu0 %v2202
        %v2609 = vpop.f32.mrf.mxu0
        %v2610 = vadd.f32 %v2245, %v2609
        %v2611 = vpop.f32.mrf.mxu0
        %v2612 = vpop.f32.mrf.mxu0
        %v2613 = vadd.f32 %v2245, %v2612
        %v2614 = vpop.f32.mrf.mxu0
        %2615 = vmatprep.mubr.bf16.mxu0 %v2205
        %2616 = vmatmul.mubr.bf16.gmra.mxu0 %v2204
        %v2617 = vpop.f32.mrf.mxu0
        %v2618 = vadd.f32 %v2245, %v2617
        %v2619 = vpop.f32.mrf.mxu0
        %v2620 = vpop.f32.mrf.mxu0
        %v2621 = vadd.f32 %v2245, %v2620
        %v2622 = vpop.f32.mrf.mxu0
        %2623 = vmatprep.mubr.bf16.mxu0 %v2207
        %2624 = vmatmul.mubr.bf16.gmra.mxu0 %v2206
        %v2625 = vpop.f32.mrf.mxu0
        %v2626 = vadd.f32 %v2245, %v2625
        %v2627 = vpop.f32.mrf.mxu0
        %v2628 = vpop.f32.mrf.mxu0
        %v2629 = vadd.f32 %v2245, %v2628
        %v2630 = vpop.f32.mrf.mxu0
        %2631 = vdwg.mxu0
        %v2632 = vmax.f32 %v2378, 0.0
        %v2633 = vmax.f32 %v2381, 0.0
        %v2634 = vmax.f32 %v2386, 0.0
        %v2635 = vmax.f32 %v2389, 0.0
        %v2636 = vmax.f32 %v2394, 0.0
        %v2637 = vmax.f32 %v2397, 0.0
        %v2638 = vmax.f32 %v2402, 0.0
        %v2639 = vmax.f32 %v2405, 0.0
        %v2640 = vmax.f32 %v2410, 0.0
        %v2641 = vmax.f32 %v2413, 0.0
        %v2642 = vmax.f32 %v2418, 0.0
        %v2643 = vmax.f32 %v2421, 0.0
        %v2644 = vmax.f32 %v2426, 0.0
        %v2645 = vmax.f32 %v2429, 0.0
        %v2646 = vmax.f32 %v2434, 0.0
        %v2647 = vmax.f32 %v2437, 0.0
        %v2648 = vmax.f32 %v2442, 0.0
        %v2649 = vmax.f32 %v2445, 0.0
        %v2650 = vmax.f32 %v2450, 0.0
        %v2651 = vmax.f32 %v2453, 0.0
        %v2652 = vmax.f32 %v2458, 0.0
        %v2653 = vmax.f32 %v2461, 0.0
        %v2654 = vmax.f32 %v2466, 0.0
        %v2655 = vmax.f32 %v2469, 0.0
        %v2656 = vmax.f32 %v2474, 0.0
        %v2657 = vmax.f32 %v2477, 0.0
        %v2658 = vmax.f32 %v2482, 0.0
        %v2659 = vmax.f32 %v2485, 0.0
        %v2660 = vmax.f32 %v2490, 0.0
        %v2661 = vmax.f32 %v2493, 0.0
        %v2662 = vmax.f32 %v2498, 0.0
        %v2663 = vmax.f32 %v2501, 0.0
        %v2664 = vmax.f32 %v2506, 0.0
        %v2665 = vmax.f32 %v2509, 0.0
        %v2666 = vmax.f32 %v2514, 0.0
        %v2667 = vmax.f32 %v2517, 0.0
        %v2668 = vmax.f32 %v2522, 0.0
        %v2669 = vmax.f32 %v2525, 0.0
        %v2670 = vmax.f32 %v2530, 0.0
        %v2671 = vmax.f32 %v2533, 0.0
        %v2672 = vmax.f32 %v2538, 0.0
        %v2673 = vmax.f32 %v2541, 0.0
        %v2674 = vmax.f32 %v2546, 0.0
        %v2675 = vmax.f32 %v2549, 0.0
        %v2676 = vmax.f32 %v2554, 0.0
        %v2677 = vmax.f32 %v2557, 0.0
        %v2678 = vmax.f32 %v2562, 0.0
        %v2679 = vmax.f32 %v2565, 0.0
        %v2680 = vmax.f32 %v2570, 0.0
        %v2681 = vmax.f32 %v2573, 0.0
        %v2682 = vmax.f32 %v2578, 0.0
        %v2683 = vmax.f32 %v2581, 0.0
        %v2684 = vmax.f32 %v2586, 0.0
        %v2685 = vmax.f32 %v2589, 0.0
        %v2686 = vmax.f32 %v2594, 0.0
        %v2687 = vmax.f32 %v2597, 0.0
        %v2688 = vmax.f32 %v2602, 0.0
        %v2689 = vmax.f32 %v2605, 0.0
        %v2690 = vmax.f32 %v2610, 0.0
        %v2691 = vmax.f32 %v2613, 0.0
        %v2692 = vmax.f32 %v2618, 0.0
        %v2693 = vmax.f32 %v2621, 0.0
        %v2694 = vmax.f32 %v2626, 0.0
        %v2695 = vmax.f32 %v2629, 0.0
        %v2696 = vpack.c.bf16 %v2633, %v2632
        %v2697 = vpack.c.bf16 %v2635, %v2634
        %v2698 = vpack.c.bf16 %v2637, %v2636
        %v2699 = vpack.c.bf16 %v2639, %v2638
        %v2700 = vpack.c.bf16 %v2641, %v2640
        %v2701 = vpack.c.bf16 %v2643, %v2642
        %v2702 = vpack.c.bf16 %v2645, %v2644
        %v2703 = vpack.c.bf16 %v2647, %v2646
        %v2704 = vpack.c.bf16 %v2649, %v2648
        %v2705 = vpack.c.bf16 %v2651, %v2650
        %v2706 = vpack.c.bf16 %v2653, %v2652
        %v2707 = vpack.c.bf16 %v2655, %v2654
        %v2708 = vpack.c.bf16 %v2657, %v2656
        %v2709 = vpack.c.bf16 %v2659, %v2658
        %v2710 = vpack.c.bf16 %v2661, %v2660
        %v2711 = vpack.c.bf16 %v2663, %v2662
        %v2712 = vpack.c.bf16 %v2665, %v2664
        %v2713 = vpack.c.bf16 %v2667, %v2666
        %v2714 = vpack.c.bf16 %v2669, %v2668
        %v2715 = vpack.c.bf16 %v2671, %v2670
        %v2716 = vpack.c.bf16 %v2673, %v2672
        %v2717 = vpack.c.bf16 %v2675, %v2674
        %v2718 = vpack.c.bf16 %v2677, %v2676
        %v2719 = vpack.c.bf16 %v2679, %v2678
        %v2720 = vpack.c.bf16 %v2681, %v2680
        %v2721 = vpack.c.bf16 %v2683, %v2682
        %v2722 = vpack.c.bf16 %v2685, %v2684
        %v2723 = vpack.c.bf16 %v2687, %v2686
        %v2724 = vpack.c.bf16 %v2689, %v2688
        %v2725 = vpack.c.bf16 %v2691, %v2690
        %v2726 = vpack.c.bf16 %v2693, %v2692
        %v2727 = vpack.c.bf16 %v2695, %v2694
        %v2728 = vld [vmem:[#allocation10] sm:$0xf]
        %v2729 = vld [vmem:[#allocation10 + $0x4] sm:$0xf]
        %v2730 = vld [vmem:[#allocation10 + $0x8] sm:$0xf]
        %v2731 = vld [vmem:[#allocation10 + $0xc] sm:$0xf]
        %v2732 = vld [vmem:[#allocation10 + $0x10] sm:$0xf]
        %v2733 = vld [vmem:[#allocation10 + $0x14] sm:$0xf]
        %v2734 = vld [vmem:[#allocation10 + $0x18] sm:$0xf]
        %v2735 = vld [vmem:[#allocation10 + $0x1c] sm:$0xf]
        %v2736 = vld [vmem:[#allocation11] sm:$0x1]
        %v2738 = vlaneseq
        %v2739 = vshrl.u32 %v2738, 7
        %v2740 = vsub.s32 0, %v2739
        %v2741 = vrot.slane %v2736, %v2740
        %v2751 = vunpack.c.l.b16 %v2728
        %v2752 = vunpack.c.l.b16 %v2729
        %v2753 = vunpack.c.l.b16 %v2730
        %v2754 = vunpack.c.l.b16 %v2731
        %v2755 = vunpack.c.l.b16 %v2732
        %v2756 = vunpack.c.l.b16 %v2733
        %v2757 = vunpack.c.l.b16 %v2734
        %v2758 = vunpack.c.l.b16 %v2735
        %v2759 = vpack.c.b16 %v2752, %v2751
        %v2760 = vpack.c.b16 %v2754, %v2753
        %v2761 = vpack.c.b16 %v2756, %v2755
        %v2762 = vpack.c.b16 %v2758, %v2757
        %vm2767 = vcmask 523264
        %v2769 = vsel %vm2767, %v2696, 0
        %v2772 = vsel %vm2767, %v2697, 0
        %v2775 = vsel %vm2767, %v2698, 0
        %v2778 = vsel %vm2767, %v2699, 0
        %v2781 = vsel %vm2767, %v2700, 0
        %v2784 = vsel %vm2767, %v2701, 0
        %v2787 = vsel %vm2767, %v2702, 0
        %v2790 = vsel %vm2767, %v2703, 0
        %v2793 = vsel %vm2767, %v2704, 0
        %v2796 = vsel %vm2767, %v2705, 0
        %v2799 = vsel %vm2767, %v2706, 0
        %v2802 = vsel %vm2767, %v2707, 0
        %v2805 = vsel %vm2767, %v2708, 0
        %v2808 = vsel %vm2767, %v2709, 0
        %v2811 = vsel %vm2767, %v2710, 0
        %v2814 = vsel %vm2767, %v2711, 0
        %v2817 = vsel %vm2767, %v2712, 0
        %v2820 = vsel %vm2767, %v2713, 0
        %v2823 = vsel %vm2767, %v2714, 0
        %v2826 = vsel %vm2767, %v2715, 0
        %v2829 = vsel %vm2767, %v2716, 0
        %v2832 = vsel %vm2767, %v2717, 0
        %v2835 = vsel %vm2767, %v2718, 0
        %v2838 = vsel %vm2767, %v2719, 0
        %v2841 = vsel %vm2767, %v2720, 0
        %v2844 = vsel %vm2767, %v2721, 0
        %v2847 = vsel %vm2767, %v2722, 0
        %v2850 = vsel %vm2767, %v2723, 0
        %v2853 = vsel %vm2767, %v2724, 0
        %v2856 = vsel %vm2767, %v2725, 0
        %v2859 = vsel %vm2767, %v2726, 0
        %v2862 = vsel %vm2767, %v2727, 0
        %2864 = vmatprep.subr.bf16.mxu0 0
        %2865 = vmatpush1.bf16.msra.mxu0 0
        %2866 = vmatprep.subr.bf16.mxu0 0
        %2867 = vmatpush1.bf16.msra.mxu0 0
        %2868 = vmatprep.subr.bf16.mxu0 0
        %2869 = vmatpush1.bf16.msra.mxu0 0
        %2870 = vmatprep.subr.bf16.mxu0 0
        %2871 = vmatpush1.bf16.msra.mxu0 0
        %2872 = vmatprep.subr.bf16.mxu0 0
        %2873 = vmatpush1.bf16.msra.mxu0 %v2762
        %2874 = vmatprep.subr.bf16.mxu0 0
        %2875 = vmatpush1.bf16.msra.mxu0 %v2761
        %2876 = vmatprep.subr.bf16.mxu0 0
        %2877 = vmatpush1.bf16.msra.mxu0 %v2760
        %2878 = vmatprep.subr.bf16.mxu0 0
        %2879 = vmatpush1.bf16.msra.mxu0 %v2759
        %2880 = vmatprep.subr.bf16.mxu0 0
        %2881 = vmatpush2.bf16.msra.mxu0 0
        %2882 = vmatprep.subr.bf16.mxu0 0
        %2883 = vmatpush2.bf16.msra.mxu0 0
        %2884 = vmatprep.subr.bf16.mxu0 0
        %2885 = vmatpush2.bf16.msra.mxu0 0
        %2886 = vmatprep.subr.bf16.mxu0 0
        %2887 = vmatpush2.bf16.msra.mxu0 0
        %2888 = vmatprep.subr.bf16.mxu0 0
        %2889 = vmatpush2.bf16.msra.mxu0 0
        %2890 = vmatprep.subr.bf16.mxu0 0
        %2891 = vmatpush2.bf16.msra.mxu0 0
        %2892 = vmatprep.subr.bf16.mxu0 0
        %2893 = vmatpush2.bf16.msra.mxu0 0
        %2894 = vmatprep.subr.bf16.mxu0 0
        %2895 = vmatpush2.bf16.msra.mxu0 0
        %2896 = vmatprep.mubr.bf16.mxu0 0
        %2897 = vmatmul.mubr.bf16.gmra.mxu0 %v2769
        %v2898 = vpop.f32.mrf.mxu0
        %v2899 = vadd.f32 %v2741, %v2898
        %v2900 = vpop.f32.mrf.mxu0
        %v2901 = vpop.f32.mrf.mxu0
        %v2902 = vadd.f32 %v2741, %v2901
        %v2903 = vpop.f32.mrf.mxu0
        %2904 = vmatprep.mubr.bf16.mxu0 0
        %2905 = vmatmul.mubr.bf16.gmra.mxu0 %v2772
        %v2906 = vpop.f32.mrf.mxu0
        %v2907 = vadd.f32 %v2741, %v2906
        %v2908 = vpop.f32.mrf.mxu0
        %v2909 = vpop.f32.mrf.mxu0
        %v2910 = vadd.f32 %v2741, %v2909
        %v2911 = vpop.f32.mrf.mxu0
        %2912 = vmatprep.mubr.bf16.mxu0 0
        %2913 = vmatmul.mubr.bf16.gmra.mxu0 %v2775
        %v2914 = vpop.f32.mrf.mxu0
        %v2915 = vadd.f32 %v2741, %v2914
        %v2916 = vpop.f32.mrf.mxu0
        %v2917 = vpop.f32.mrf.mxu0
        %v2918 = vadd.f32 %v2741, %v2917
        %v2919 = vpop.f32.mrf.mxu0
        %2920 = vmatprep.mubr.bf16.mxu0 0
        %2921 = vmatmul.mubr.bf16.gmra.mxu0 %v2778
        %v2922 = vpop.f32.mrf.mxu0
        %v2923 = vadd.f32 %v2741, %v2922
        %v2924 = vpop.f32.mrf.mxu0
        %v2925 = vpop.f32.mrf.mxu0
        %v2926 = vadd.f32 %v2741, %v2925
        %v2927 = vpop.f32.mrf.mxu0
        %2928 = vmatprep.mubr.bf16.mxu0 0
        %2929 = vmatmul.mubr.bf16.gmra.mxu0 %v2781
        %v2930 = vpop.f32.mrf.mxu0
        %v2931 = vadd.f32 %v2741, %v2930
        %v2932 = vpop.f32.mrf.mxu0
        %v2933 = vpop.f32.mrf.mxu0
        %v2934 = vadd.f32 %v2741, %v2933
        %v2935 = vpop.f32.mrf.mxu0
        %2936 = vmatprep.mubr.bf16.mxu0 0
        %2937 = vmatmul.mubr.bf16.gmra.mxu0 %v2784
        %v2938 = vpop.f32.mrf.mxu0
        %v2939 = vadd.f32 %v2741, %v2938
        %v2940 = vpop.f32.mrf.mxu0
        %v2941 = vpop.f32.mrf.mxu0
        %v2942 = vadd.f32 %v2741, %v2941
        %v2943 = vpop.f32.mrf.mxu0
        %2944 = vmatprep.mubr.bf16.mxu0 0
        %2945 = vmatmul.mubr.bf16.gmra.mxu0 %v2787
        %v2946 = vpop.f32.mrf.mxu0
        %v2947 = vadd.f32 %v2741, %v2946
        %v2948 = vpop.f32.mrf.mxu0
        %v2949 = vpop.f32.mrf.mxu0
        %v2950 = vadd.f32 %v2741, %v2949
        %v2951 = vpop.f32.mrf.mxu0
        %2952 = vmatprep.mubr.bf16.mxu0 0
        %2953 = vmatmul.mubr.bf16.gmra.mxu0 %v2790
        %v2954 = vpop.f32.mrf.mxu0
        %v2955 = vadd.f32 %v2741, %v2954
        %v2956 = vpop.f32.mrf.mxu0
        %v2957 = vpop.f32.mrf.mxu0
        %v2958 = vadd.f32 %v2741, %v2957
        %v2959 = vpop.f32.mrf.mxu0
        %2960 = vmatprep.mubr.bf16.mxu0 0
        %2961 = vmatmul.mubr.bf16.gmra.mxu0 %v2793
        %v2962 = vpop.f32.mrf.mxu0
        %v2963 = vadd.f32 %v2741, %v2962
        %v2964 = vpop.f32.mrf.mxu0
        %v2965 = vpop.f32.mrf.mxu0
        %v2966 = vadd.f32 %v2741, %v2965
        %v2967 = vpop.f32.mrf.mxu0
        %2968 = vmatprep.mubr.bf16.mxu0 0
        %2969 = vmatmul.mubr.bf16.gmra.mxu0 %v2796
        %v2970 = vpop.f32.mrf.mxu0
        %v2971 = vadd.f32 %v2741, %v2970
        %v2972 = vpop.f32.mrf.mxu0
        %v2973 = vpop.f32.mrf.mxu0
        %v2974 = vadd.f32 %v2741, %v2973
        %v2975 = vpop.f32.mrf.mxu0
        %2976 = vmatprep.mubr.bf16.mxu0 0
        %2977 = vmatmul.mubr.bf16.gmra.mxu0 %v2799
        %v2978 = vpop.f32.mrf.mxu0
        %v2979 = vadd.f32 %v2741, %v2978
        %v2980 = vpop.f32.mrf.mxu0
        %v2981 = vpop.f32.mrf.mxu0
        %v2982 = vadd.f32 %v2741, %v2981
        %v2983 = vpop.f32.mrf.mxu0
        %2984 = vmatprep.mubr.bf16.mxu0 0
        %2985 = vmatmul.mubr.bf16.gmra.mxu0 %v2802
        %v2986 = vpop.f32.mrf.mxu0
        %v2987 = vadd.f32 %v2741, %v2986
        %v2988 = vpop.f32.mrf.mxu0
        %v2989 = vpop.f32.mrf.mxu0
        %v2990 = vadd.f32 %v2741, %v2989
        %v2991 = vpop.f32.mrf.mxu0
        %2992 = vmatprep.mubr.bf16.mxu0 0
        %2993 = vmatmul.mubr.bf16.gmra.mxu0 %v2805
        %v2994 = vpop.f32.mrf.mxu0
        %v2995 = vadd.f32 %v2741, %v2994
        %v2996 = vpop.f32.mrf.mxu0
        %v2997 = vpop.f32.mrf.mxu0
        %v2998 = vadd.f32 %v2741, %v2997
        %v2999 = vpop.f32.mrf.mxu0
        %3000 = vmatprep.mubr.bf16.mxu0 0
        %3001 = vmatmul.mubr.bf16.gmra.mxu0 %v2808
        %v3002 = vpop.f32.mrf.mxu0
        %v3003 = vadd.f32 %v2741, %v3002
        %v3004 = vpop.f32.mrf.mxu0
        %v3005 = vpop.f32.mrf.mxu0
        %v3006 = vadd.f32 %v2741, %v3005
        %v3007 = vpop.f32.mrf.mxu0
        %3008 = vmatprep.mubr.bf16.mxu0 0
        %3009 = vmatmul.mubr.bf16.gmra.mxu0 %v2811
        %v3010 = vpop.f32.mrf.mxu0
        %v3011 = vadd.f32 %v2741, %v3010
        %v3012 = vpop.f32.mrf.mxu0
        %v3013 = vpop.f32.mrf.mxu0
        %v3014 = vadd.f32 %v2741, %v3013
        %v3015 = vpop.f32.mrf.mxu0
        %3016 = vmatprep.mubr.bf16.mxu0 0
        %3017 = vmatmul.mubr.bf16.gmra.mxu0 %v2814
        %v3018 = vpop.f32.mrf.mxu0
        %v3019 = vadd.f32 %v2741, %v3018
        %v3020 = vpop.f32.mrf.mxu0
        %v3021 = vpop.f32.mrf.mxu0
        %v3022 = vadd.f32 %v2741, %v3021
        %v3023 = vpop.f32.mrf.mxu0
        %3024 = vmatprep.mubr.bf16.mxu0 0
        %3025 = vmatmul.mubr.bf16.gmra.mxu0 %v2817
        %v3026 = vpop.f32.mrf.mxu0
        %v3027 = vadd.f32 %v2741, %v3026
        %v3028 = vpop.f32.mrf.mxu0
        %v3029 = vpop.f32.mrf.mxu0
        %v3030 = vadd.f32 %v2741, %v3029
        %v3031 = vpop.f32.mrf.mxu0
        %3032 = vmatprep.mubr.bf16.mxu0 0
        %3033 = vmatmul.mubr.bf16.gmra.mxu0 %v2820
        %v3034 = vpop.f32.mrf.mxu0
        %v3035 = vadd.f32 %v2741, %v3034
        %v3036 = vpop.f32.mrf.mxu0
        %v3037 = vpop.f32.mrf.mxu0
        %v3038 = vadd.f32 %v2741, %v3037
        %v3039 = vpop.f32.mrf.mxu0
        %3040 = vmatprep.mubr.bf16.mxu0 0
        %3041 = vmatmul.mubr.bf16.gmra.mxu0 %v2823
        %v3042 = vpop.f32.mrf.mxu0
        %v3043 = vadd.f32 %v2741, %v3042
        %v3044 = vpop.f32.mrf.mxu0
        %v3045 = vpop.f32.mrf.mxu0
        %v3046 = vadd.f32 %v2741, %v3045
        %v3047 = vpop.f32.mrf.mxu0
        %3048 = vmatprep.mubr.bf16.mxu0 0
        %3049 = vmatmul.mubr.bf16.gmra.mxu0 %v2826
        %v3050 = vpop.f32.mrf.mxu0
        %v3051 = vadd.f32 %v2741, %v3050
        %v3052 = vpop.f32.mrf.mxu0
        %v3053 = vpop.f32.mrf.mxu0
        %v3054 = vadd.f32 %v2741, %v3053
        %v3055 = vpop.f32.mrf.mxu0
        %3056 = vmatprep.mubr.bf16.mxu0 0
        %3057 = vmatmul.mubr.bf16.gmra.mxu0 %v2829
        %v3058 = vpop.f32.mrf.mxu0
        %v3059 = vadd.f32 %v2741, %v3058
        %v3060 = vpop.f32.mrf.mxu0
        %v3061 = vpop.f32.mrf.mxu0
        %v3062 = vadd.f32 %v2741, %v3061
        %v3063 = vpop.f32.mrf.mxu0
        %3064 = vmatprep.mubr.bf16.mxu0 0
        %3065 = vmatmul.mubr.bf16.gmra.mxu0 %v2832
        %v3066 = vpop.f32.mrf.mxu0
        %v3067 = vadd.f32 %v2741, %v3066
        %v3068 = vpop.f32.mrf.mxu0
        %v3069 = vpop.f32.mrf.mxu0
        %v3070 = vadd.f32 %v2741, %v3069
        %v3071 = vpop.f32.mrf.mxu0
        %3072 = vmatprep.mubr.bf16.mxu0 0
        %3073 = vmatmul.mubr.bf16.gmra.mxu0 %v2835
        %v3074 = vpop.f32.mrf.mxu0
        %v3075 = vadd.f32 %v2741, %v3074
        %v3076 = vpop.f32.mrf.mxu0
        %v3077 = vpop.f32.mrf.mxu0
        %v3078 = vadd.f32 %v2741, %v3077
        %v3079 = vpop.f32.mrf.mxu0
        %3080 = vmatprep.mubr.bf16.mxu0 0
        %3081 = vmatmul.mubr.bf16.gmra.mxu0 %v2838
        %v3082 = vpop.f32.mrf.mxu0
        %v3083 = vadd.f32 %v2741, %v3082
        %v3084 = vpop.f32.mrf.mxu0
        %v3085 = vpop.f32.mrf.mxu0
        %v3086 = vadd.f32 %v2741, %v3085
        %v3087 = vpop.f32.mrf.mxu0
        %3088 = vmatprep.mubr.bf16.mxu0 0
        %3089 = vmatmul.mubr.bf16.gmra.mxu0 %v2841
        %v3090 = vpop.f32.mrf.mxu0
        %v3091 = vadd.f32 %v2741, %v3090
        %v3092 = vpop.f32.mrf.mxu0
        %v3093 = vpop.f32.mrf.mxu0
        %v3094 = vadd.f32 %v2741, %v3093
        %v3095 = vpop.f32.mrf.mxu0
        %3096 = vmatprep.mubr.bf16.mxu0 0
        %3097 = vmatmul.mubr.bf16.gmra.mxu0 %v2844
        %v3098 = vpop.f32.mrf.mxu0
        %v3099 = vadd.f32 %v2741, %v3098
        %v3100 = vpop.f32.mrf.mxu0
        %v3101 = vpop.f32.mrf.mxu0
        %v3102 = vadd.f32 %v2741, %v3101
        %v3103 = vpop.f32.mrf.mxu0
        %3104 = vmatprep.mubr.bf16.mxu0 0
        %3105 = vmatmul.mubr.bf16.gmra.mxu0 %v2847
        %v3106 = vpop.f32.mrf.mxu0
        %v3107 = vadd.f32 %v2741, %v3106
        %v3108 = vpop.f32.mrf.mxu0
        %v3109 = vpop.f32.mrf.mxu0
        %v3110 = vadd.f32 %v2741, %v3109
        %v3111 = vpop.f32.mrf.mxu0
        %3112 = vmatprep.mubr.bf16.mxu0 0
        %3113 = vmatmul.mubr.bf16.gmra.mxu0 %v2850
        %v3114 = vpop.f32.mrf.mxu0
        %v3115 = vadd.f32 %v2741, %v3114
        %v3116 = vpop.f32.mrf.mxu0
        %v3117 = vpop.f32.mrf.mxu0
        %v3118 = vadd.f32 %v2741, %v3117
        %v3119 = vpop.f32.mrf.mxu0
        %3120 = vmatprep.mubr.bf16.mxu0 0
        %3121 = vmatmul.mubr.bf16.gmra.mxu0 %v2853
        %v3122 = vpop.f32.mrf.mxu0
        %v3123 = vadd.f32 %v2741, %v3122
        %v3124 = vpop.f32.mrf.mxu0
        %v3125 = vpop.f32.mrf.mxu0
        %v3126 = vadd.f32 %v2741, %v3125
        %v3127 = vpop.f32.mrf.mxu0
        %3128 = vmatprep.mubr.bf16.mxu0 0
        %3129 = vmatmul.mubr.bf16.gmra.mxu0 %v2856
        %v3130 = vpop.f32.mrf.mxu0
        %v3131 = vadd.f32 %v2741, %v3130
        %v3132 = vpop.f32.mrf.mxu0
        %v3133 = vpop.f32.mrf.mxu0
        %v3134 = vadd.f32 %v2741, %v3133
        %v3135 = vpop.f32.mrf.mxu0
        %3136 = vmatprep.mubr.bf16.mxu0 0
        %3137 = vmatmul.mubr.bf16.gmra.mxu0 %v2859
        %v3138 = vpop.f32.mrf.mxu0
        %v3139 = vadd.f32 %v2741, %v3138
        %v3140 = vpop.f32.mrf.mxu0
        %v3141 = vpop.f32.mrf.mxu0
        %v3142 = vadd.f32 %v2741, %v3141
        %v3143 = vpop.f32.mrf.mxu0
        %3144 = vmatprep.mubr.bf16.mxu0 0
        %3145 = vmatmul.mubr.bf16.gmra.mxu0 %v2862
        %v3146 = vpop.f32.mrf.mxu0
        %v3147 = vadd.f32 %v2741, %v3146
        %v3148 = vpop.f32.mrf.mxu0
        %v3149 = vpop.f32.mrf.mxu0
        %v3150 = vadd.f32 %v2741, %v3149
        %v3151 = vpop.f32.mrf.mxu0
        %3152 = vdwg.mxu0
        %v3153 = vmax.f32 %v2899, 0.0
        %v3154 = vmax.f32 %v2902, 0.0
        %v3155 = vmax.f32 %v2907, 0.0
        %v3156 = vmax.f32 %v2910, 0.0
        %v3157 = vmax.f32 %v2915, 0.0
        %v3158 = vmax.f32 %v2918, 0.0
        %v3159 = vmax.f32 %v2923, 0.0
        %v3160 = vmax.f32 %v2926, 0.0
        %v3161 = vmax.f32 %v2931, 0.0
        %v3162 = vmax.f32 %v2934, 0.0
        %v3163 = vmax.f32 %v2939, 0.0
        %v3164 = vmax.f32 %v2942, 0.0
        %v3165 = vmax.f32 %v2947, 0.0
        %v3166 = vmax.f32 %v2950, 0.0
        %v3167 = vmax.f32 %v2955, 0.0
        %v3168 = vmax.f32 %v2958, 0.0
        %v3169 = vmax.f32 %v2963, 0.0
        %v3170 = vmax.f32 %v2966, 0.0
        %v3171 = vmax.f32 %v2971, 0.0
        %v3172 = vmax.f32 %v2974, 0.0
        %v3173 = vmax.f32 %v2979, 0.0
        %v3174 = vmax.f32 %v2982, 0.0
        %v3175 = vmax.f32 %v2987, 0.0
        %v3176 = vmax.f32 %v2990, 0.0
        %v3177 = vmax.f32 %v2995, 0.0
        %v3178 = vmax.f32 %v2998, 0.0
        %v3179 = vmax.f32 %v3003, 0.0
        %v3180 = vmax.f32 %v3006, 0.0
        %v3181 = vmax.f32 %v3011, 0.0
        %v3182 = vmax.f32 %v3014, 0.0
        %v3183 = vmax.f32 %v3019, 0.0
        %v3184 = vmax.f32 %v3022, 0.0
        %v3185 = vmax.f32 %v3027, 0.0
        %v3186 = vmax.f32 %v3030, 0.0
        %v3187 = vmax.f32 %v3035, 0.0
        %v3188 = vmax.f32 %v3038, 0.0
        %v3189 = vmax.f32 %v3043, 0.0
        %v3190 = vmax.f32 %v3046, 0.0
        %v3191 = vmax.f32 %v3051, 0.0
        %v3192 = vmax.f32 %v3054, 0.0
        %v3193 = vmax.f32 %v3059, 0.0
        %v3194 = vmax.f32 %v3062, 0.0
        %v3195 = vmax.f32 %v3067, 0.0
        %v3196 = vmax.f32 %v3070, 0.0
        %v3197 = vmax.f32 %v3075, 0.0
        %v3198 = vmax.f32 %v3078, 0.0
        %v3199 = vmax.f32 %v3083, 0.0
        %v3200 = vmax.f32 %v3086, 0.0
        %v3201 = vmax.f32 %v3091, 0.0
        %v3202 = vmax.f32 %v3094, 0.0
        %v3203 = vmax.f32 %v3099, 0.0
        %v3204 = vmax.f32 %v3102, 0.0
        %v3205 = vmax.f32 %v3107, 0.0
        %v3206 = vmax.f32 %v3110, 0.0
        %v3207 = vmax.f32 %v3115, 0.0
        %v3208 = vmax.f32 %v3118, 0.0
        %v3209 = vmax.f32 %v3123, 0.0
        %v3210 = vmax.f32 %v3126, 0.0
        %v3211 = vmax.f32 %v3131, 0.0
        %v3212 = vmax.f32 %v3134, 0.0
        %v3213 = vmax.f32 %v3139, 0.0
        %v3214 = vmax.f32 %v3142, 0.0
        %v3215 = vmax.f32 %v3147, 0.0
        %v3216 = vmax.f32 %v3150, 0.0
        %v3217 = vpack.c.bf16 %v3154, %v3153
        %v3218 = vpack.c.bf16 %v3156, %v3155
        %v3219 = vpack.c.bf16 %v3158, %v3157
        %v3220 = vpack.c.bf16 %v3160, %v3159
        %v3221 = vpack.c.bf16 %v3162, %v3161
        %v3222 = vpack.c.bf16 %v3164, %v3163
        %v3223 = vpack.c.bf16 %v3166, %v3165
        %v3224 = vpack.c.bf16 %v3168, %v3167
        %v3225 = vpack.c.bf16 %v3170, %v3169
        %v3226 = vpack.c.bf16 %v3172, %v3171
        %v3227 = vpack.c.bf16 %v3174, %v3173
        %v3228 = vpack.c.bf16 %v3176, %v3175
        %v3229 = vpack.c.bf16 %v3178, %v3177
        %v3230 = vpack.c.bf16 %v3180, %v3179
        %v3231 = vpack.c.bf16 %v3182, %v3181
        %v3232 = vpack.c.bf16 %v3184, %v3183
        %v3233 = vpack.c.bf16 %v3186, %v3185
        %v3234 = vpack.c.bf16 %v3188, %v3187
        %v3235 = vpack.c.bf16 %v3190, %v3189
        %v3236 = vpack.c.bf16 %v3192, %v3191
        %v3237 = vpack.c.bf16 %v3194, %v3193
        %v3238 = vpack.c.bf16 %v3196, %v3195
        %v3239 = vpack.c.bf16 %v3198, %v3197
        %v3240 = vpack.c.bf16 %v3200, %v3199
        %v3241 = vpack.c.bf16 %v3202, %v3201
        %v3242 = vpack.c.bf16 %v3204, %v3203
        %v3243 = vpack.c.bf16 %v3206, %v3205
        %v3244 = vpack.c.bf16 %v3208, %v3207
        %v3245 = vpack.c.bf16 %v3210, %v3209
        %v3246 = vpack.c.bf16 %v3212, %v3211
        %v3247 = vpack.c.bf16 %v3214, %v3213
        %v3248 = vpack.c.bf16 %v3216, %v3215
        %v3249 = vld [vmem:[#allocation13] sm:$0xff]
        %v3250 = vld [vmem:[#allocation13 + $0x8] sm:$0xff]
        %v3251 = vld [vmem:[#allocation13 + $0x10] sm:$0xff]
        %v3252 = vld [vmem:[#allocation13 + $0x18] sm:$0xff]
        %v3253 = vld [vmem:[#allocation13 + $0x20] sm:$0xff]
        %v3254 = vld [vmem:[#allocation13 + $0x28] sm:$0xff]
        %v3255 = vld [vmem:[#allocation13 + $0x30] sm:$0xff]
        %v3256 = vld [vmem:[#allocation13 + $0x38] sm:$0xff]
        %v3257 = vld [vmem:[#allocation14] sm:$0x3]
        %v3259 = vlaneseq
        %v3260 = vshrl.u32 %v3259, 7
        %v3261 = vsub.s32 0, %v3260
        %v3262 = vrot.slane %v3257, %v3261
        %v3263 = vlaneseq
        %v3264 = vshrl.u32 %v3263, 7
        %v3265 = vsub.s32 1, %v3264
        %v3266 = vrot.slane %v3257, %v3265
        %v3277 = vunpack.c.l.b16 %v3249
        %v3278 = vunpack.c.h.b16 %v3249
        %v3279 = vunpack.c.l.b16 %v3250
        %v3280 = vunpack.c.h.b16 %v3250
        %v3281 = vunpack.c.l.b16 %v3251
        %v3282 = vunpack.c.h.b16 %v3251
        %v3283 = vunpack.c.l.b16 %v3252
        %v3284 = vunpack.c.h.b16 %v3252
        %v3285 = vunpack.c.l.b16 %v3253
        %v3286 = vunpack.c.h.b16 %v3253
        %v3287 = vunpack.c.l.b16 %v3254
        %v3288 = vunpack.c.h.b16 %v3254
        %v3289 = vunpack.c.l.b16 %v3255
        %v3290 = vunpack.c.h.b16 %v3255
        %v3291 = vunpack.c.l.b16 %v3256
        %v3292 = vunpack.c.h.b16 %v3256
        %v3293 = vpack.c.b16 %v3279, %v3277
        %v3294 = vpack.c.b16 %v3280, %v3278
        %v3295 = vpack.c.b16 %v3283, %v3281
        %v3296 = vpack.c.b16 %v3284, %v3282
        %v3297 = vpack.c.b16 %v3287, %v3285
        %v3298 = vpack.c.b16 %v3288, %v3286
        %v3299 = vpack.c.b16 %v3291, %v3289
        %v3300 = vpack.c.b16 %v3292, %v3290
        %v3310 = vsel %vm2767, %v3217, 0
        %v3313 = vsel %vm2767, %v3218, 0
        %v3316 = vsel %vm2767, %v3219, 0
        %v3319 = vsel %vm2767, %v3220, 0
        %v3322 = vsel %vm2767, %v3221, 0
        %v3325 = vsel %vm2767, %v3222, 0
        %v3328 = vsel %vm2767, %v3223, 0
        %v3331 = vsel %vm2767, %v3224, 0
        %v3334 = vsel %vm2767, %v3225, 0
        %v3337 = vsel %vm2767, %v3226, 0
        %v3340 = vsel %vm2767, %v3227, 0
        %v3343 = vsel %vm2767, %v3228, 0
        %v3346 = vsel %vm2767, %v3229, 0
        %v3349 = vsel %vm2767, %v3230, 0
        %v3352 = vsel %vm2767, %v3231, 0
        %v3355 = vsel %vm2767, %v3232, 0
        %v3358 = vsel %vm2767, %v3233, 0
        %v3361 = vsel %vm2767, %v3234, 0
        %v3364 = vsel %vm2767, %v3235, 0
        %v3367 = vsel %vm2767, %v3236, 0
        %v3370 = vsel %vm2767, %v3237, 0
        %v3373 = vsel %vm2767, %v3238, 0
        %v3376 = vsel %vm2767, %v3239, 0
        %v3379 = vsel %vm2767, %v3240, 0
        %v3382 = vsel %vm2767, %v3241, 0
        %v3385 = vsel %vm2767, %v3242, 0
        %v3388 = vsel %vm2767, %v3243, 0
        %v3391 = vsel %vm2767, %v3244, 0
        %v3394 = vsel %vm2767, %v3245, 0
        %v3397 = vsel %vm2767, %v3246, 0
        %v3400 = vsel %vm2767, %v3247, 0
        %v3403 = vsel %vm2767, %v3248, 0
        %3405 = vmatprep.subr.bf16.mxu0 0
        %3406 = vmatpush1.bf16.msra.mxu0 0
        %3407 = vmatprep.subr.bf16.mxu0 0
        %3408 = vmatpush1.bf16.msra.mxu0 0
        %3409 = vmatprep.subr.bf16.mxu0 0
        %3410 = vmatpush1.bf16.msra.mxu0 0
        %3411 = vmatprep.subr.bf16.mxu0 0
        %3412 = vmatpush1.bf16.msra.mxu0 0
        %3413 = vmatprep.subr.bf16.mxu0 %v3300
        %3414 = vmatpush1.bf16.msra.mxu0 %v3299
        %3415 = vmatprep.subr.bf16.mxu0 %v3298
        %3416 = vmatpush1.bf16.msra.mxu0 %v3297
        %3417 = vmatprep.subr.bf16.mxu0 %v3296
        %3418 = vmatpush1.bf16.msra.mxu0 %v3295
        %3419 = vmatprep.subr.bf16.mxu0 %v3294
        %3420 = vmatpush1.bf16.msra.mxu0 %v3293
        %3421 = vmatprep.subr.bf16.mxu0 0
        %3422 = vmatpush2.bf16.msra.mxu0 0
        %3423 = vmatprep.subr.bf16.mxu0 0
        %3424 = vmatpush2.bf16.msra.mxu0 0
        %3425 = vmatprep.subr.bf16.mxu0 0
        %3426 = vmatpush2.bf16.msra.mxu0 0
        %3427 = vmatprep.subr.bf16.mxu0 0
        %3428 = vmatpush2.bf16.msra.mxu0 0
        %3429 = vmatprep.subr.bf16.mxu0 0
        %3430 = vmatpush2.bf16.msra.mxu0 0
        %3431 = vmatprep.subr.bf16.mxu0 0
        %3432 = vmatpush2.bf16.msra.mxu0 0
        %3433 = vmatprep.subr.bf16.mxu0 0
        %3434 = vmatpush2.bf16.msra.mxu0 0
        %3435 = vmatprep.subr.bf16.mxu0 0
        %3436 = vmatpush2.bf16.msra.mxu0 0
        %3437 = vmatprep.mubr.bf16.mxu0 0
        %3438 = vmatmul.mubr.bf16.gmra.mxu0 %v3310
        %v3439 = vpop.f32.mrf.mxu0
        %v3440 = vadd.f32 %v3262, %v3439
        %v3441 = vpop.f32.mrf.mxu0
        %v3442 = vadd.f32 %v3266, %v3441
        %v3443 = vpop.f32.mrf.mxu0
        %v3444 = vadd.f32 %v3262, %v3443
        %v3445 = vpop.f32.mrf.mxu0
        %v3446 = vadd.f32 %v3266, %v3445
        %3447 = vmatprep.mubr.bf16.mxu0 0
        %3448 = vmatmul.mubr.bf16.gmra.mxu0 %v3313
        %v3449 = vpop.f32.mrf.mxu0
        %v3450 = vadd.f32 %v3262, %v3449
        %v3451 = vpop.f32.mrf.mxu0
        %v3452 = vadd.f32 %v3266, %v3451
        %v3453 = vpop.f32.mrf.mxu0
        %v3454 = vadd.f32 %v3262, %v3453
        %v3455 = vpop.f32.mrf.mxu0
        %v3456 = vadd.f32 %v3266, %v3455
        %3457 = vmatprep.mubr.bf16.mxu0 0
        %3458 = vmatmul.mubr.bf16.gmra.mxu0 %v3316
        %v3459 = vpop.f32.mrf.mxu0
        %v3460 = vadd.f32 %v3262, %v3459
        %v3461 = vpop.f32.mrf.mxu0
        %v3462 = vadd.f32 %v3266, %v3461
        %v3463 = vpop.f32.mrf.mxu0
        %v3464 = vadd.f32 %v3262, %v3463
        %v3465 = vpop.f32.mrf.mxu0
        %v3466 = vadd.f32 %v3266, %v3465
        %3467 = vmatprep.mubr.bf16.mxu0 0
        %3468 = vmatmul.mubr.bf16.gmra.mxu0 %v3319
        %v3469 = vpop.f32.mrf.mxu0
        %v3470 = vadd.f32 %v3262, %v3469
        %v3471 = vpop.f32.mrf.mxu0
        %v3472 = vadd.f32 %v3266, %v3471
        %v3473 = vpop.f32.mrf.mxu0
        %v3474 = vadd.f32 %v3262, %v3473
        %v3475 = vpop.f32.mrf.mxu0
        %v3476 = vadd.f32 %v3266, %v3475
        %3477 = vmatprep.mubr.bf16.mxu0 0
        %3478 = vmatmul.mubr.bf16.gmra.mxu0 %v3322
        %v3479 = vpop.f32.mrf.mxu0
        %v3480 = vadd.f32 %v3262, %v3479
        %v3481 = vpop.f32.mrf.mxu0
        %v3482 = vadd.f32 %v3266, %v3481
        %v3483 = vpop.f32.mrf.mxu0
        %v3484 = vadd.f32 %v3262, %v3483
        %v3485 = vpop.f32.mrf.mxu0
        %v3486 = vadd.f32 %v3266, %v3485
        %3487 = vmatprep.mubr.bf16.mxu0 0
        %3488 = vmatmul.mubr.bf16.gmra.mxu0 %v3325
        %v3489 = vpop.f32.mrf.mxu0
        %v3490 = vadd.f32 %v3262, %v3489
        %v3491 = vpop.f32.mrf.mxu0
        %v3492 = vadd.f32 %v3266, %v3491
        %v3493 = vpop.f32.mrf.mxu0
        %v3494 = vadd.f32 %v3262, %v3493
        %v3495 = vpop.f32.mrf.mxu0
        %v3496 = vadd.f32 %v3266, %v3495
        %3497 = vmatprep.mubr.bf16.mxu0 0
        %3498 = vmatmul.mubr.bf16.gmra.mxu0 %v3328
        %v3499 = vpop.f32.mrf.mxu0
        %v3500 = vadd.f32 %v3262, %v3499
        %v3501 = vpop.f32.mrf.mxu0
        %v3502 = vadd.f32 %v3266, %v3501
        %v3503 = vpop.f32.mrf.mxu0
        %v3504 = vadd.f32 %v3262, %v3503
        %v3505 = vpop.f32.mrf.mxu0
        %v3506 = vadd.f32 %v3266, %v3505
        %3507 = vmatprep.mubr.bf16.mxu0 0
        %3508 = vmatmul.mubr.bf16.gmra.mxu0 %v3331
        %v3509 = vpop.f32.mrf.mxu0
        %v3510 = vadd.f32 %v3262, %v3509
        %v3511 = vpop.f32.mrf.mxu0
        %v3512 = vadd.f32 %v3266, %v3511
        %v3513 = vpop.f32.mrf.mxu0
        %v3514 = vadd.f32 %v3262, %v3513
        %v3515 = vpop.f32.mrf.mxu0
        %v3516 = vadd.f32 %v3266, %v3515
        %3517 = vmatprep.mubr.bf16.mxu0 0
        %3518 = vmatmul.mubr.bf16.gmra.mxu0 %v3334
        %v3519 = vpop.f32.mrf.mxu0
        %v3520 = vadd.f32 %v3262, %v3519
        %v3521 = vpop.f32.mrf.mxu0
        %v3522 = vadd.f32 %v3266, %v3521
        %v3523 = vpop.f32.mrf.mxu0
        %v3524 = vadd.f32 %v3262, %v3523
        %v3525 = vpop.f32.mrf.mxu0
        %v3526 = vadd.f32 %v3266, %v3525
        %3527 = vmatprep.mubr.bf16.mxu0 0
        %3528 = vmatmul.mubr.bf16.gmra.mxu0 %v3337
        %v3529 = vpop.f32.mrf.mxu0
        %v3530 = vadd.f32 %v3262, %v3529
        %v3531 = vpop.f32.mrf.mxu0
        %v3532 = vadd.f32 %v3266, %v3531
        %v3533 = vpop.f32.mrf.mxu0
        %v3534 = vadd.f32 %v3262, %v3533
        %v3535 = vpop.f32.mrf.mxu0
        %v3536 = vadd.f32 %v3266, %v3535
        %3537 = vmatprep.mubr.bf16.mxu0 0
        %3538 = vmatmul.mubr.bf16.gmra.mxu0 %v3340
        %v3539 = vpop.f32.mrf.mxu0
        %v3540 = vadd.f32 %v3262, %v3539
        %v3541 = vpop.f32.mrf.mxu0
        %v3542 = vadd.f32 %v3266, %v3541
        %v3543 = vpop.f32.mrf.mxu0
        %v3544 = vadd.f32 %v3262, %v3543
        %v3545 = vpop.f32.mrf.mxu0
        %v3546 = vadd.f32 %v3266, %v3545
        %3547 = vmatprep.mubr.bf16.mxu0 0
        %3548 = vmatmul.mubr.bf16.gmra.mxu0 %v3343
        %v3549 = vpop.f32.mrf.mxu0
        %v3550 = vadd.f32 %v3262, %v3549
        %v3551 = vpop.f32.mrf.mxu0
        %v3552 = vadd.f32 %v3266, %v3551
        %v3553 = vpop.f32.mrf.mxu0
        %v3554 = vadd.f32 %v3262, %v3553
        %v3555 = vpop.f32.mrf.mxu0
        %v3556 = vadd.f32 %v3266, %v3555
        %3557 = vmatprep.mubr.bf16.mxu0 0
        %3558 = vmatmul.mubr.bf16.gmra.mxu0 %v3346
        %v3559 = vpop.f32.mrf.mxu0
        %v3560 = vadd.f32 %v3262, %v3559
        %v3561 = vpop.f32.mrf.mxu0
        %v3562 = vadd.f32 %v3266, %v3561
        %v3563 = vpop.f32.mrf.mxu0
        %v3564 = vadd.f32 %v3262, %v3563
        %v3565 = vpop.f32.mrf.mxu0
        %v3566 = vadd.f32 %v3266, %v3565
        %3567 = vmatprep.mubr.bf16.mxu0 0
        %3568 = vmatmul.mubr.bf16.gmra.mxu0 %v3349
        %v3569 = vpop.f32.mrf.mxu0
        %v3570 = vadd.f32 %v3262, %v3569
        %v3571 = vpop.f32.mrf.mxu0
        %v3572 = vadd.f32 %v3266, %v3571
        %v3573 = vpop.f32.mrf.mxu0
        %v3574 = vadd.f32 %v3262, %v3573
        %v3575 = vpop.f32.mrf.mxu0
        %v3576 = vadd.f32 %v3266, %v3575
        %3577 = vmatprep.mubr.bf16.mxu0 0
        %3578 = vmatmul.mubr.bf16.gmra.mxu0 %v3352
        %v3579 = vpop.f32.mrf.mxu0
        %v3580 = vadd.f32 %v3262, %v3579
        %v3581 = vpop.f32.mrf.mxu0
        %v3582 = vadd.f32 %v3266, %v3581
        %v3583 = vpop.f32.mrf.mxu0
        %v3584 = vadd.f32 %v3262, %v3583
        %v3585 = vpop.f32.mrf.mxu0
        %v3586 = vadd.f32 %v3266, %v3585
        %3587 = vmatprep.mubr.bf16.mxu0 0
        %3588 = vmatmul.mubr.bf16.gmra.mxu0 %v3355
        %v3589 = vpop.f32.mrf.mxu0
        %v3590 = vadd.f32 %v3262, %v3589
        %v3591 = vpop.f32.mrf.mxu0
        %v3592 = vadd.f32 %v3266, %v3591
        %v3593 = vpop.f32.mrf.mxu0
        %v3594 = vadd.f32 %v3262, %v3593
        %v3595 = vpop.f32.mrf.mxu0
        %v3596 = vadd.f32 %v3266, %v3595
        %3597 = vmatprep.mubr.bf16.mxu0 0
        %3598 = vmatmul.mubr.bf16.gmra.mxu0 %v3358
        %v3599 = vpop.f32.mrf.mxu0
        %v3600 = vadd.f32 %v3262, %v3599
        %v3601 = vpop.f32.mrf.mxu0
        %v3602 = vadd.f32 %v3266, %v3601
        %v3603 = vpop.f32.mrf.mxu0
        %v3604 = vadd.f32 %v3262, %v3603
        %v3605 = vpop.f32.mrf.mxu0
        %v3606 = vadd.f32 %v3266, %v3605
        %3607 = vmatprep.mubr.bf16.mxu0 0
        %3608 = vmatmul.mubr.bf16.gmra.mxu0 %v3361
        %v3609 = vpop.f32.mrf.mxu0
        %v3610 = vadd.f32 %v3262, %v3609
        %v3611 = vpop.f32.mrf.mxu0
        %v3612 = vadd.f32 %v3266, %v3611
        %v3613 = vpop.f32.mrf.mxu0
        %v3614 = vadd.f32 %v3262, %v3613
        %v3615 = vpop.f32.mrf.mxu0
        %v3616 = vadd.f32 %v3266, %v3615
        %3617 = vmatprep.mubr.bf16.mxu0 0
        %3618 = vmatmul.mubr.bf16.gmra.mxu0 %v3364
        %v3619 = vpop.f32.mrf.mxu0
        %v3620 = vadd.f32 %v3262, %v3619
        %v3621 = vpop.f32.mrf.mxu0
        %v3622 = vadd.f32 %v3266, %v3621
        %v3623 = vpop.f32.mrf.mxu0
        %v3624 = vadd.f32 %v3262, %v3623
        %v3625 = vpop.f32.mrf.mxu0
        %v3626 = vadd.f32 %v3266, %v3625
        %3627 = vmatprep.mubr.bf16.mxu0 0
        %3628 = vmatmul.mubr.bf16.gmra.mxu0 %v3367
        %v3629 = vpop.f32.mrf.mxu0
        %v3630 = vadd.f32 %v3262, %v3629
        %v3631 = vpop.f32.mrf.mxu0
        %v3632 = vadd.f32 %v3266, %v3631
        %v3633 = vpop.f32.mrf.mxu0
        %v3634 = vadd.f32 %v3262, %v3633
        %v3635 = vpop.f32.mrf.mxu0
        %v3636 = vadd.f32 %v3266, %v3635
        %3637 = vmatprep.mubr.bf16.mxu0 0
        %3638 = vmatmul.mubr.bf16.gmra.mxu0 %v3370
        %v3639 = vpop.f32.mrf.mxu0
        %v3640 = vadd.f32 %v3262, %v3639
        %v3641 = vpop.f32.mrf.mxu0
        %v3642 = vadd.f32 %v3266, %v3641
        %v3643 = vpop.f32.mrf.mxu0
        %v3644 = vadd.f32 %v3262, %v3643
        %v3645 = vpop.f32.mrf.mxu0
        %v3646 = vadd.f32 %v3266, %v3645
        %3647 = vmatprep.mubr.bf16.mxu0 0
        %3648 = vmatmul.mubr.bf16.gmra.mxu0 %v3373
        %v3649 = vpop.f32.mrf.mxu0
        %v3650 = vadd.f32 %v3262, %v3649
        %v3651 = vpop.f32.mrf.mxu0
        %v3652 = vadd.f32 %v3266, %v3651
        %v3653 = vpop.f32.mrf.mxu0
        %v3654 = vadd.f32 %v3262, %v3653
        %v3655 = vpop.f32.mrf.mxu0
        %v3656 = vadd.f32 %v3266, %v3655
        %3657 = vmatprep.mubr.bf16.mxu0 0
        %3658 = vmatmul.mubr.bf16.gmra.mxu0 %v3376
        %v3659 = vpop.f32.mrf.mxu0
        %v3660 = vadd.f32 %v3262, %v3659
        %v3661 = vpop.f32.mrf.mxu0
        %v3662 = vadd.f32 %v3266, %v3661
        %v3663 = vpop.f32.mrf.mxu0
        %v3664 = vadd.f32 %v3262, %v3663
        %v3665 = vpop.f32.mrf.mxu0
        %v3666 = vadd.f32 %v3266, %v3665
        %3667 = vmatprep.mubr.bf16.mxu0 0
        %3668 = vmatmul.mubr.bf16.gmra.mxu0 %v3379
        %v3669 = vpop.f32.mrf.mxu0
        %v3670 = vadd.f32 %v3262, %v3669
        %v3671 = vpop.f32.mrf.mxu0
        %v3672 = vadd.f32 %v3266, %v3671
        %v3673 = vpop.f32.mrf.mxu0
        %v3674 = vadd.f32 %v3262, %v3673
        %v3675 = vpop.f32.mrf.mxu0
        %v3676 = vadd.f32 %v3266, %v3675
        %3677 = vmatprep.mubr.bf16.mxu0 0
        %3678 = vmatmul.mubr.bf16.gmra.mxu0 %v3382
        %v3679 = vpop.f32.mrf.mxu0
        %v3680 = vadd.f32 %v3262, %v3679
        %v3681 = vpop.f32.mrf.mxu0
        %v3682 = vadd.f32 %v3266, %v3681
        %v3683 = vpop.f32.mrf.mxu0
        %v3684 = vadd.f32 %v3262, %v3683
        %v3685 = vpop.f32.mrf.mxu0
        %v3686 = vadd.f32 %v3266, %v3685
        %3687 = vmatprep.mubr.bf16.mxu0 0
        %3688 = vmatmul.mubr.bf16.gmra.mxu0 %v3385
        %v3689 = vpop.f32.mrf.mxu0
        %v3690 = vadd.f32 %v3262, %v3689
        %v3691 = vpop.f32.mrf.mxu0
        %v3692 = vadd.f32 %v3266, %v3691
        %v3693 = vpop.f32.mrf.mxu0
        %v3694 = vadd.f32 %v3262, %v3693
        %v3695 = vpop.f32.mrf.mxu0
        %v3696 = vadd.f32 %v3266, %v3695
        %3697 = vmatprep.mubr.bf16.mxu0 0
        %3698 = vmatmul.mubr.bf16.gmra.mxu0 %v3388
        %v3699 = vpop.f32.mrf.mxu0
        %v3700 = vadd.f32 %v3262, %v3699
        %v3701 = vpop.f32.mrf.mxu0
        %v3702 = vadd.f32 %v3266, %v3701
        %v3703 = vpop.f32.mrf.mxu0
        %v3704 = vadd.f32 %v3262, %v3703
        %v3705 = vpop.f32.mrf.mxu0
        %v3706 = vadd.f32 %v3266, %v3705
        %3707 = vmatprep.mubr.bf16.mxu0 0
        %3708 = vmatmul.mubr.bf16.gmra.mxu0 %v3391
        %v3709 = vpop.f32.mrf.mxu0
        %v3710 = vadd.f32 %v3262, %v3709
        %v3711 = vpop.f32.mrf.mxu0
        %v3712 = vadd.f32 %v3266, %v3711
        %v3713 = vpop.f32.mrf.mxu0
        %v3714 = vadd.f32 %v3262, %v3713
        %v3715 = vpop.f32.mrf.mxu0
        %v3716 = vadd.f32 %v3266, %v3715
        %3717 = vmatprep.mubr.bf16.mxu0 0
        %3718 = vmatmul.mubr.bf16.gmra.mxu0 %v3394
        %v3719 = vpop.f32.mrf.mxu0
        %v3720 = vadd.f32 %v3262, %v3719
        %v3721 = vpop.f32.mrf.mxu0
        %v3722 = vadd.f32 %v3266, %v3721
        %v3723 = vpop.f32.mrf.mxu0
        %v3724 = vadd.f32 %v3262, %v3723
        %v3725 = vpop.f32.mrf.mxu0
        %v3726 = vadd.f32 %v3266, %v3725
        %3727 = vmatprep.mubr.bf16.mxu0 0
        %3728 = vmatmul.mubr.bf16.gmra.mxu0 %v3397
        %v3729 = vpop.f32.mrf.mxu0
        %v3730 = vadd.f32 %v3262, %v3729
        %v3731 = vpop.f32.mrf.mxu0
        %v3732 = vadd.f32 %v3266, %v3731
        %v3733 = vpop.f32.mrf.mxu0
        %v3734 = vadd.f32 %v3262, %v3733
        %v3735 = vpop.f32.mrf.mxu0
        %v3736 = vadd.f32 %v3266, %v3735
        %3737 = vmatprep.mubr.bf16.mxu0 0
        %3738 = vmatmul.mubr.bf16.gmra.mxu0 %v3400
        %v3739 = vpop.f32.mrf.mxu0
        %v3740 = vadd.f32 %v3262, %v3739
        %v3741 = vpop.f32.mrf.mxu0
        %v3742 = vadd.f32 %v3266, %v3741
        %v3743 = vpop.f32.mrf.mxu0
        %v3744 = vadd.f32 %v3262, %v3743
        %v3745 = vpop.f32.mrf.mxu0
        %v3746 = vadd.f32 %v3266, %v3745
        %3747 = vmatprep.mubr.bf16.mxu0 0
        %3748 = vmatmul.mubr.bf16.gmra.mxu0 %v3403
        %v3749 = vpop.f32.mrf.mxu0
        %v3750 = vadd.f32 %v3262, %v3749
        %v3751 = vpop.f32.mrf.mxu0
        %v3752 = vadd.f32 %v3266, %v3751
        %v3753 = vpop.f32.mrf.mxu0
        %v3754 = vadd.f32 %v3262, %v3753
        %v3755 = vpop.f32.mrf.mxu0
        %v3756 = vadd.f32 %v3266, %v3755
        %3757 = vdwg.mxu0
        %v3758 = vmax.f32 %v3440, 0.0
        %v3759 = vmax.f32 %v3442, 0.0
        %v3760 = vmax.f32 %v3444, 0.0
        %v3761 = vmax.f32 %v3446, 0.0
        %v3762 = vmax.f32 %v3450, 0.0
        %v3763 = vmax.f32 %v3452, 0.0
        %v3764 = vmax.f32 %v3454, 0.0
        %v3765 = vmax.f32 %v3456, 0.0
        %v3766 = vmax.f32 %v3460, 0.0
        %v3767 = vmax.f32 %v3462, 0.0
        %v3768 = vmax.f32 %v3464, 0.0
        %v3769 = vmax.f32 %v3466, 0.0
        %v3770 = vmax.f32 %v3470, 0.0
        %v3771 = vmax.f32 %v3472, 0.0
        %v3772 = vmax.f32 %v3474, 0.0
        %v3773 = vmax.f32 %v3476, 0.0
        %v3774 = vmax.f32 %v3480, 0.0
        %v3775 = vmax.f32 %v3482, 0.0
        %v3776 = vmax.f32 %v3484, 0.0
        %v3777 = vmax.f32 %v3486, 0.0
        %v3778 = vmax.f32 %v3490, 0.0
        %v3779 = vmax.f32 %v3492, 0.0
        %v3780 = vmax.f32 %v3494, 0.0
        %v3781 = vmax.f32 %v3496, 0.0
        %v3782 = vmax.f32 %v3500, 0.0
        %v3783 = vmax.f32 %v3502, 0.0
        %v3784 = vmax.f32 %v3504, 0.0
        %v3785 = vmax.f32 %v3506, 0.0
        %v3786 = vmax.f32 %v3510, 0.0
        %v3787 = vmax.f32 %v3512, 0.0
        %v3788 = vmax.f32 %v3514, 0.0
        %v3789 = vmax.f32 %v3516, 0.0
        %v3790 = vmax.f32 %v3520, 0.0
        %v3791 = vmax.f32 %v3522, 0.0
        %v3792 = vmax.f32 %v3524, 0.0
        %v3793 = vmax.f32 %v3526, 0.0
        %v3794 = vmax.f32 %v3530, 0.0
        %v3795 = vmax.f32 %v3532, 0.0
        %v3796 = vmax.f32 %v3534, 0.0
        %v3797 = vmax.f32 %v3536, 0.0
        %v3798 = vmax.f32 %v3540, 0.0
        %v3799 = vmax.f32 %v3542, 0.0
        %v3800 = vmax.f32 %v3544, 0.0
        %v3801 = vmax.f32 %v3546, 0.0
        %v3802 = vmax.f32 %v3550, 0.0
        %v3803 = vmax.f32 %v3552, 0.0
        %v3804 = vmax.f32 %v3554, 0.0
        %v3805 = vmax.f32 %v3556, 0.0
        %v3806 = vmax.f32 %v3560, 0.0
        %v3807 = vmax.f32 %v3562, 0.0
        %v3808 = vmax.f32 %v3564, 0.0
        %v3809 = vmax.f32 %v3566, 0.0
        %v3810 = vmax.f32 %v3570, 0.0
        %v3811 = vmax.f32 %v3572, 0.0
        %v3812 = vmax.f32 %v3574, 0.0
        %v3813 = vmax.f32 %v3576, 0.0
        %v3814 = vmax.f32 %v3580, 0.0
        %v3815 = vmax.f32 %v3582, 0.0
        %v3816 = vmax.f32 %v3584, 0.0
        %v3817 = vmax.f32 %v3586, 0.0
        %v3818 = vmax.f32 %v3590, 0.0
        %v3819 = vmax.f32 %v3592, 0.0
        %v3820 = vmax.f32 %v3594, 0.0
        %v3821 = vmax.f32 %v3596, 0.0
        %v3822 = vmax.f32 %v3600, 0.0
        %v3823 = vmax.f32 %v3602, 0.0
        %v3824 = vmax.f32 %v3604, 0.0
        %v3825 = vmax.f32 %v3606, 0.0
        %v3826 = vmax.f32 %v3610, 0.0
        %v3827 = vmax.f32 %v3612, 0.0
        %v3828 = vmax.f32 %v3614, 0.0
        %v3829 = vmax.f32 %v3616, 0.0
        %v3830 = vmax.f32 %v3620, 0.0
        %v3831 = vmax.f32 %v3622, 0.0
        %v3832 = vmax.f32 %v3624, 0.0
        %v3833 = vmax.f32 %v3626, 0.0
        %v3834 = vmax.f32 %v3630, 0.0
        %v3835 = vmax.f32 %v3632, 0.0
        %v3836 = vmax.f32 %v3634, 0.0
        %v3837 = vmax.f32 %v3636, 0.0
        %v3838 = vmax.f32 %v3640, 0.0
        %v3839 = vmax.f32 %v3642, 0.0
        %v3840 = vmax.f32 %v3644, 0.0
        %v3841 = vmax.f32 %v3646, 0.0
        %v3842 = vmax.f32 %v3650, 0.0
        %v3843 = vmax.f32 %v3652, 0.0
        %v3844 = vmax.f32 %v3654, 0.0
        %v3845 = vmax.f32 %v3656, 0.0
        %v3846 = vmax.f32 %v3660, 0.0
        %v3847 = vmax.f32 %v3662, 0.0
        %v3848 = vmax.f32 %v3664, 0.0
        %v3849 = vmax.f32 %v3666, 0.0
        %v3850 = vmax.f32 %v3670, 0.0
        %v3851 = vmax.f32 %v3672, 0.0
        %v3852 = vmax.f32 %v3674, 0.0
        %v3853 = vmax.f32 %v3676, 0.0
        %v3854 = vmax.f32 %v3680, 0.0
        %v3855 = vmax.f32 %v3682, 0.0
        %v3856 = vmax.f32 %v3684, 0.0
        %v3857 = vmax.f32 %v3686, 0.0
        %v3858 = vmax.f32 %v3690, 0.0
        %v3859 = vmax.f32 %v3692, 0.0
        %v3860 = vmax.f32 %v3694, 0.0
        %v3861 = vmax.f32 %v3696, 0.0
        %v3862 = vmax.f32 %v3700, 0.0
        %v3863 = vmax.f32 %v3702, 0.0
        %v3864 = vmax.f32 %v3704, 0.0
        %v3865 = vmax.f32 %v3706, 0.0
        %v3866 = vmax.f32 %v3710, 0.0
        %v3867 = vmax.f32 %v3712, 0.0
        %v3868 = vmax.f32 %v3714, 0.0
        %v3869 = vmax.f32 %v3716, 0.0
        %v3870 = vmax.f32 %v3720, 0.0
        %v3871 = vmax.f32 %v3722, 0.0
        %v3872 = vmax.f32 %v3724, 0.0
        %v3873 = vmax.f32 %v3726, 0.0
        %v3874 = vmax.f32 %v3730, 0.0
        %v3875 = vmax.f32 %v3732, 0.0
        %v3876 = vmax.f32 %v3734, 0.0
        %v3877 = vmax.f32 %v3736, 0.0
        %v3878 = vmax.f32 %v3740, 0.0
        %v3879 = vmax.f32 %v3742, 0.0
        %v3880 = vmax.f32 %v3744, 0.0
        %v3881 = vmax.f32 %v3746, 0.0
        %v3882 = vmax.f32 %v3750, 0.0
        %v3883 = vmax.f32 %v3752, 0.0
        %v3884 = vmax.f32 %v3754, 0.0
        %v3885 = vmax.f32 %v3756, 0.0
        %v3886 = vpack.c.bf16 %v3760, %v3758
        %v3887 = vpack.c.bf16 %v3761, %v3759
        %v3888 = vpack.c.bf16 %v3764, %v3762
        %v3889 = vpack.c.bf16 %v3765, %v3763
        %v3890 = vpack.c.bf16 %v3768, %v3766
        %v3891 = vpack.c.bf16 %v3769, %v3767
        %v3892 = vpack.c.bf16 %v3772, %v3770
        %v3893 = vpack.c.bf16 %v3773, %v3771
        %v3894 = vpack.c.bf16 %v3776, %v3774
        %v3895 = vpack.c.bf16 %v3777, %v3775
        %v3896 = vpack.c.bf16 %v3780, %v3778
        %v3897 = vpack.c.bf16 %v3781, %v3779
        %v3898 = vpack.c.bf16 %v3784, %v3782
        %v3899 = vpack.c.bf16 %v3785, %v3783
        %v3900 = vpack.c.bf16 %v3788, %v3786
        %v3901 = vpack.c.bf16 %v3789, %v3787
        %v3902 = vpack.c.bf16 %v3792, %v3790
        %v3903 = vpack.c.bf16 %v3793, %v3791
        %v3904 = vpack.c.bf16 %v3796, %v3794
        %v3905 = vpack.c.bf16 %v3797, %v3795
        %v3906 = vpack.c.bf16 %v3800, %v3798
        %v3907 = vpack.c.bf16 %v3801, %v3799
        %v3908 = vpack.c.bf16 %v3804, %v3802
        %v3909 = vpack.c.bf16 %v3805, %v3803
        %v3910 = vpack.c.bf16 %v3808, %v3806
        %v3911 = vpack.c.bf16 %v3809, %v3807
        %v3912 = vpack.c.bf16 %v3812, %v3810
        %v3913 = vpack.c.bf16 %v3813, %v3811
        %v3914 = vpack.c.bf16 %v3816, %v3814
        %v3915 = vpack.c.bf16 %v3817, %v3815
        %v3916 = vpack.c.bf16 %v3820, %v3818
        %v3917 = vpack.c.bf16 %v3821, %v3819
        %v3918 = vpack.c.bf16 %v3824, %v3822
        %v3919 = vpack.c.bf16 %v3825, %v3823
        %v3920 = vpack.c.bf16 %v3828, %v3826
        %v3921 = vpack.c.bf16 %v3829, %v3827
        %v3922 = vpack.c.bf16 %v3832, %v3830
        %v3923 = vpack.c.bf16 %v3833, %v3831
        %v3924 = vpack.c.bf16 %v3836, %v3834
        %v3925 = vpack.c.bf16 %v3837, %v3835
        %v3926 = vpack.c.bf16 %v3840, %v3838
        %v3927 = vpack.c.bf16 %v3841, %v3839
        %v3928 = vpack.c.bf16 %v3844, %v3842
        %v3929 = vpack.c.bf16 %v3845, %v3843
        %v3930 = vpack.c.bf16 %v3848, %v3846
        %v3931 = vpack.c.bf16 %v3849, %v3847
        %v3932 = vpack.c.bf16 %v3852, %v3850
        %v3933 = vpack.c.bf16 %v3853, %v3851
        %v3934 = vpack.c.bf16 %v3856, %v3854
        %v3935 = vpack.c.bf16 %v3857, %v3855
        %v3936 = vpack.c.bf16 %v3860, %v3858
        %v3937 = vpack.c.bf16 %v3861, %v3859
        %v3938 = vpack.c.bf16 %v3864, %v3862
        %v3939 = vpack.c.bf16 %v3865, %v3863
        %v3940 = vpack.c.bf16 %v3868, %v3866
        %v3941 = vpack.c.bf16 %v3869, %v3867
        %v3942 = vpack.c.bf16 %v3872, %v3870
        %v3943 = vpack.c.bf16 %v3873, %v3871
        %v3944 = vpack.c.bf16 %v3876, %v3874
        %v3945 = vpack.c.bf16 %v3877, %v3875
        %v3946 = vpack.c.bf16 %v3880, %v3878
        %v3947 = vpack.c.bf16 %v3881, %v3879
        %v3948 = vpack.c.bf16 %v3884, %v3882
        %v3949 = vpack.c.bf16 %v3885, %v3883
        %v3950 = vld [vmem:[#allocation16] sm:$0xff]
        %v3951 = vld [vmem:[#allocation16 + $0x8] sm:$0xff]
        %v3952 = vld [vmem:[#allocation16 + $0x10] sm:$0xff]
        %v3953 = vld [vmem:[#allocation16 + $0x18] sm:$0xff]
        %v3954 = vld [vmem:[#allocation16 + $0x20] sm:$0xff]
        %v3955 = vld [vmem:[#allocation16 + $0x28] sm:$0xff]
        %v3956 = vld [vmem:[#allocation16 + $0x30] sm:$0xff]
        %v3957 = vld [vmem:[#allocation16 + $0x38] sm:$0xff]
        %v3958 = vld [vmem:[#allocation16 + $0x40] sm:$0xff]
        %v3959 = vld [vmem:[#allocation16 + $0x48] sm:$0xff]
        %v3960 = vld [vmem:[#allocation16 + $0x50] sm:$0xff]
        %v3961 = vld [vmem:[#allocation16 + $0x58] sm:$0xff]
        %v3962 = vld [vmem:[#allocation16 + $0x60] sm:$0xff]
        %v3963 = vld [vmem:[#allocation16 + $0x68] sm:$0xff]
        %v3964 = vld [vmem:[#allocation16 + $0x70] sm:$0xff]
        %v3965 = vld [vmem:[#allocation16 + $0x78] sm:$0xff]
        %v3966 = vld [vmem:[#allocation16 + $0x80] sm:$0xff]
        %v3967 = vld [vmem:[#allocation16 + $0x88] sm:$0xff]
        %v3968 = vld [vmem:[#allocation16 + $0x90] sm:$0xff]
        %v3969 = vld [vmem:[#allocation16 + $0x98] sm:$0xff]
        %v3970 = vld [vmem:[#allocation16 + $0xa0] sm:$0xff]
        %v3971 = vld [vmem:[#allocation16 + $0xa8] sm:$0xff]
        %v3972 = vld [vmem:[#allocation16 + $0xb0] sm:$0xff]
        %v3973 = vld [vmem:[#allocation16 + $0xb8] sm:$0xff]
        %v3974 = vld [vmem:[#allocation16 + $0xc0] sm:$0xff]
        %v3975 = vld [vmem:[#allocation16 + $0xc8] sm:$0xff]
        %v3976 = vld [vmem:[#allocation16 + $0xd0] sm:$0xff]
        %v3977 = vld [vmem:[#allocation16 + $0xd8] sm:$0xff]
        %v3978 = vld [vmem:[#allocation16 + $0xe0] sm:$0xff]
        %v3979 = vld [vmem:[#allocation16 + $0xe8] sm:$0xff]
        %v3980 = vld [vmem:[#allocation16 + $0xf0] sm:$0xff]
        %v3981 = vld [vmem:[#allocation16 + $0xf8] sm:$0xff]
        %v3982 = vld [vmem:[#allocation16 + $0x100] sm:$0xff]
        %v3983 = vld [vmem:[#allocation16 + $0x108] sm:$0xff]
        %v3984 = vld [vmem:[#allocation16 + $0x110] sm:$0xff]
        %v3985 = vld [vmem:[#allocation16 + $0x118] sm:$0xff]
        %v3986 = vld [vmem:[#allocation16 + $0x120] sm:$0xff]
        %v3987 = vld [vmem:[#allocation16 + $0x128] sm:$0xff]
        %v3988 = vld [vmem:[#allocation16 + $0x130] sm:$0xff]
        %v3989 = vld [vmem:[#allocation16 + $0x138] sm:$0xff]
        %v3990 = vld [vmem:[#allocation16 + $0x140] sm:$0xff]
        %v3991 = vld [vmem:[#allocation16 + $0x148] sm:$0xff]
        %v3992 = vld [vmem:[#allocation16 + $0x150] sm:$0xff]
        %v3993 = vld [vmem:[#allocation16 + $0x158] sm:$0xff]
        %v3994 = vld [vmem:[#allocation16 + $0x160] sm:$0xff]
        %v3995 = vld [vmem:[#allocation16 + $0x168] sm:$0xff]
        %v3996 = vld [vmem:[#allocation16 + $0x170] sm:$0xff]
        %v3997 = vld [vmem:[#allocation16 + $0x178] sm:$0xff]
        %v3998 = vld [vmem:[#allocation16 + $0x180] sm:$0xff]
        %v3999 = vld [vmem:[#allocation16 + $0x188] sm:$0xff]
        %v4000 = vld [vmem:[#allocation16 + $0x190] sm:$0xff]
        %v4001 = vld [vmem:[#allocation16 + $0x198] sm:$0xff]
        %v4002 = vld [vmem:[#allocation16 + $0x1a0] sm:$0xff]
        %v4003 = vld [vmem:[#allocation16 + $0x1a8] sm:$0xff]
        %v4004 = vld [vmem:[#allocation16 + $0x1b0] sm:$0xff]
        %v4005 = vld [vmem:[#allocation16 + $0x1b8] sm:$0xff]
        %v4006 = vld [vmem:[#allocation16 + $0x1c0] sm:$0xff]
        %v4007 = vld [vmem:[#allocation16 + $0x1c8] sm:$0xff]
        %v4008 = vld [vmem:[#allocation16 + $0x1d0] sm:$0xff]
        %v4009 = vld [vmem:[#allocation16 + $0x1d8] sm:$0xff]
        %v4010 = vld [vmem:[#allocation16 + $0x1e0] sm:$0xff]
        %v4011 = vld [vmem:[#allocation16 + $0x1e8] sm:$0xff]
        %v4012 = vld [vmem:[#allocation16 + $0x1f0] sm:$0xff]
        %v4013 = vld [vmem:[#allocation16 + $0x1f8] sm:$0xff]
        %v4014 = vld [vmem:[#allocation17] sm:$0xf]
        %v4016 = vlaneseq
        %v4017 = vshrl.u32 %v4016, 7
        %v4018 = vsub.s32 0, %v4017
        %v4019 = vrot.slane %v4014, %v4018
        %v4020 = vlaneseq
        %v4021 = vshrl.u32 %v4020, 7
        %v4022 = vsub.s32 1, %v4021
        %v4023 = vrot.slane %v4014, %v4022
        %v4024 = vlaneseq
        %v4025 = vshrl.u32 %v4024, 7
        %v4026 = vsub.s32 2, %v4025
        %v4027 = vrot.slane %v4014, %v4026
        %v4028 = vlaneseq
        %v4029 = vshrl.u32 %v4028, 7
        %v4030 = vsub.s32 3, %v4029
        %v4031 = vrot.slane %v4014, %v4030
        %v4100 = vunpack.c.l.b16 %v3950
        %v4101 = vunpack.c.h.b16 %v3950
        %v4102 = vunpack.c.l.b16 %v3951
        %v4103 = vunpack.c.h.b16 %v3951
        %v4104 = vunpack.c.l.b16 %v3952
        %v4105 = vunpack.c.h.b16 %v3952
        %v4106 = vunpack.c.l.b16 %v3953
        %v4107 = vunpack.c.h.b16 %v3953
        %v4108 = vunpack.c.l.b16 %v3954
        %v4109 = vunpack.c.h.b16 %v3954
        %v4110 = vunpack.c.l.b16 %v3955
        %v4111 = vunpack.c.h.b16 %v3955
        %v4112 = vunpack.c.l.b16 %v3956
        %v4113 = vunpack.c.h.b16 %v3956
        %v4114 = vunpack.c.l.b16 %v3957
        %v4115 = vunpack.c.h.b16 %v3957
        %v4116 = vunpack.c.l.b16 %v3958
        %v4117 = vunpack.c.h.b16 %v3958
        %v4118 = vunpack.c.l.b16 %v3959
        %v4119 = vunpack.c.h.b16 %v3959
        %v4120 = vunpack.c.l.b16 %v3960
        %v4121 = vunpack.c.h.b16 %v3960
        %v4122 = vunpack.c.l.b16 %v3961
        %v4123 = vunpack.c.h.b16 %v3961
        %v4124 = vunpack.c.l.b16 %v3962
        %v4125 = vunpack.c.h.b16 %v3962
        %v4126 = vunpack.c.l.b16 %v3963
        %v4127 = vunpack.c.h.b16 %v3963
        %v4128 = vunpack.c.l.b16 %v3964
        %v4129 = vunpack.c.h.b16 %v3964
        %v4130 = vunpack.c.l.b16 %v3965
        %v4131 = vunpack.c.h.b16 %v3965
        %v4132 = vunpack.c.l.b16 %v3966
        %v4133 = vunpack.c.h.b16 %v3966
        %v4134 = vunpack.c.l.b16 %v3967
        %v4135 = vunpack.c.h.b16 %v3967
        %v4136 = vunpack.c.l.b16 %v3968
        %v4137 = vunpack.c.h.b16 %v3968
        %v4138 = vunpack.c.l.b16 %v3969
        %v4139 = vunpack.c.h.b16 %v3969
        %v4140 = vunpack.c.l.b16 %v3970
        %v4141 = vunpack.c.h.b16 %v3970
        %v4142 = vunpack.c.l.b16 %v3971
        %v4143 = vunpack.c.h.b16 %v3971
        %v4144 = vunpack.c.l.b16 %v3972
        %v4145 = vunpack.c.h.b16 %v3972
        %v4146 = vunpack.c.l.b16 %v3973
        %v4147 = vunpack.c.h.b16 %v3973
        %v4148 = vunpack.c.l.b16 %v3974
        %v4149 = vunpack.c.h.b16 %v3974
        %v4150 = vunpack.c.l.b16 %v3975
        %v4151 = vunpack.c.h.b16 %v3975
        %v4152 = vunpack.c.l.b16 %v3976
        %v4153 = vunpack.c.h.b16 %v3976
        %v4154 = vunpack.c.l.b16 %v3977
        %v4155 = vunpack.c.h.b16 %v3977
        %v4156 = vunpack.c.l.b16 %v3978
        %v4157 = vunpack.c.h.b16 %v3978
        %v4158 = vunpack.c.l.b16 %v3979
        %v4159 = vunpack.c.h.b16 %v3979
        %v4160 = vunpack.c.l.b16 %v3980
        %v4161 = vunpack.c.h.b16 %v3980
        %v4162 = vunpack.c.l.b16 %v3981
        %v4163 = vunpack.c.h.b16 %v3981
        %v4164 = vunpack.c.l.b16 %v3982
        %v4165 = vunpack.c.h.b16 %v3982
        %v4166 = vunpack.c.l.b16 %v3983
        %v4167 = vunpack.c.h.b16 %v3983
        %v4168 = vunpack.c.l.b16 %v3984
        %v4169 = vunpack.c.h.b16 %v3984
        %v4170 = vunpack.c.l.b16 %v3985
        %v4171 = vunpack.c.h.b16 %v3985
        %v4172 = vunpack.c.l.b16 %v3986
        %v4173 = vunpack.c.h.b16 %v3986
        %v4174 = vunpack.c.l.b16 %v3987
        %v4175 = vunpack.c.h.b16 %v3987
        %v4176 = vunpack.c.l.b16 %v3988
        %v4177 = vunpack.c.h.b16 %v3988
        %v4178 = vunpack.c.l.b16 %v3989
        %v4179 = vunpack.c.h.b16 %v3989
        %v4180 = vunpack.c.l.b16 %v3990
        %v4181 = vunpack.c.h.b16 %v3990
        %v4182 = vunpack.c.l.b16 %v3991
        %v4183 = vunpack.c.h.b16 %v3991
        %v4184 = vunpack.c.l.b16 %v3992
        %v4185 = vunpack.c.h.b16 %v3992
        %v4186 = vunpack.c.l.b16 %v3993
        %v4187 = vunpack.c.h.b16 %v3993
        %v4188 = vunpack.c.l.b16 %v3994
        %v4189 = vunpack.c.h.b16 %v3994
        %v4190 = vunpack.c.l.b16 %v3995
        %v4191 = vunpack.c.h.b16 %v3995
        %v4192 = vunpack.c.l.b16 %v3996
        %v4193 = vunpack.c.h.b16 %v3996
        %v4194 = vunpack.c.l.b16 %v3997
        %v4195 = vunpack.c.h.b16 %v3997
        %v4196 = vunpack.c.l.b16 %v3998
        %v4197 = vunpack.c.h.b16 %v3998
        %v4198 = vunpack.c.l.b16 %v3999
        %v4199 = vunpack.c.h.b16 %v3999
        %v4200 = vunpack.c.l.b16 %v4000
        %v4201 = vunpack.c.h.b16 %v4000
        %v4202 = vunpack.c.l.b16 %v4001
        %v4203 = vunpack.c.h.b16 %v4001
        %v4204 = vunpack.c.l.b16 %v4002
        %v4205 = vunpack.c.h.b16 %v4002
        %v4206 = vunpack.c.l.b16 %v4003
        %v4207 = vunpack.c.h.b16 %v4003
        %v4208 = vunpack.c.l.b16 %v4004
        %v4209 = vunpack.c.h.b16 %v4004
        %v4210 = vunpack.c.l.b16 %v4005
        %v4211 = vunpack.c.h.b16 %v4005
        %v4212 = vunpack.c.l.b16 %v4006
        %v4213 = vunpack.c.h.b16 %v4006
        %v4214 = vunpack.c.l.b16 %v4007
        %v4215 = vunpack.c.h.b16 %v4007
        %v4216 = vunpack.c.l.b16 %v4008
        %v4217 = vunpack.c.h.b16 %v4008
        %v4218 = vunpack.c.l.b16 %v4009
        %v4219 = vunpack.c.h.b16 %v4009
        %v4220 = vunpack.c.l.b16 %v4010
        %v4221 = vunpack.c.h.b16 %v4010
        %v4222 = vunpack.c.l.b16 %v4011
        %v4223 = vunpack.c.h.b16 %v4011
        %v4224 = vunpack.c.l.b16 %v4012
        %v4225 = vunpack.c.h.b16 %v4012
        %v4226 = vunpack.c.l.b16 %v4013
        %v4227 = vunpack.c.h.b16 %v4013
        %v4228 = vpack.c.b16 %v4104, %v4100
        %v4229 = vpack.c.b16 %v4105, %v4101
        %v4230 = vpack.c.b16 %v4106, %v4102
        %v4231 = vpack.c.b16 %v4107, %v4103
        %v4232 = vpack.c.b16 %v4112, %v4108
        %v4233 = vpack.c.b16 %v4113, %v4109
        %v4234 = vpack.c.b16 %v4114, %v4110
        %v4235 = vpack.c.b16 %v4115, %v4111
        %v4236 = vpack.c.b16 %v4120, %v4116
        %v4237 = vpack.c.b16 %v4121, %v4117
        %v4238 = vpack.c.b16 %v4122, %v4118
        %v4239 = vpack.c.b16 %v4123, %v4119
        %v4240 = vpack.c.b16 %v4128, %v4124
        %v4241 = vpack.c.b16 %v4129, %v4125
        %v4242 = vpack.c.b16 %v4130, %v4126
        %v4243 = vpack.c.b16 %v4131, %v4127
        %v4244 = vpack.c.b16 %v4136, %v4132
        %v4245 = vpack.c.b16 %v4137, %v4133
        %v4246 = vpack.c.b16 %v4138, %v4134
        %v4247 = vpack.c.b16 %v4139, %v4135
        %v4248 = vpack.c.b16 %v4144, %v4140
        %v4249 = vpack.c.b16 %v4145, %v4141
        %v4250 = vpack.c.b16 %v4146, %v4142
        %v4251 = vpack.c.b16 %v4147, %v4143
        %v4252 = vpack.c.b16 %v4152, %v4148
        %v4253 = vpack.c.b16 %v4153, %v4149
        %v4254 = vpack.c.b16 %v4154, %v4150
        %v4255 = vpack.c.b16 %v4155, %v4151
        %v4256 = vpack.c.b16 %v4160, %v4156
        %v4257 = vpack.c.b16 %v4161, %v4157
        %v4258 = vpack.c.b16 %v4162, %v4158
        %v4259 = vpack.c.b16 %v4163, %v4159
        %v4260 = vpack.c.b16 %v4168, %v4164
        %v4261 = vpack.c.b16 %v4169, %v4165
        %v4262 = vpack.c.b16 %v4170, %v4166
        %v4263 = vpack.c.b16 %v4171, %v4167
        %v4264 = vpack.c.b16 %v4176, %v4172
        %v4265 = vpack.c.b16 %v4177, %v4173
        %v4266 = vpack.c.b16 %v4178, %v4174
        %v4267 = vpack.c.b16 %v4179, %v4175
        %v4268 = vpack.c.b16 %v4184, %v4180
        %v4269 = vpack.c.b16 %v4185, %v4181
        %v4270 = vpack.c.b16 %v4186, %v4182
        %v4271 = vpack.c.b16 %v4187, %v4183
        %v4272 = vpack.c.b16 %v4192, %v4188
        %v4273 = vpack.c.b16 %v4193, %v4189
        %v4274 = vpack.c.b16 %v4194, %v4190
        %v4275 = vpack.c.b16 %v4195, %v4191
        %v4276 = vpack.c.b16 %v4200, %v4196
        %v4277 = vpack.c.b16 %v4201, %v4197
        %v4278 = vpack.c.b16 %v4202, %v4198
        %v4279 = vpack.c.b16 %v4203, %v4199
        %v4280 = vpack.c.b16 %v4208, %v4204
        %v4281 = vpack.c.b16 %v4209, %v4205
        %v4282 = vpack.c.b16 %v4210, %v4206
        %v4283 = vpack.c.b16 %v4211, %v4207
        %v4284 = vpack.c.b16 %v4216, %v4212
        %v4285 = vpack.c.b16 %v4217, %v4213
        %v4286 = vpack.c.b16 %v4218, %v4214
        %v4287 = vpack.c.b16 %v4219, %v4215
        %v4288 = vpack.c.b16 %v4224, %v4220
        %v4289 = vpack.c.b16 %v4225, %v4221
        %v4290 = vpack.c.b16 %v4226, %v4222
        %v4291 = vpack.c.b16 %v4227, %v4223
        %4356 = vmatprep.subr.bf16.mxu0 %v4257
        %4357 = vmatpush1.bf16.msra.mxu0 %v4256
        %4358 = vmatprep.subr.bf16.mxu0 %v4253
        %4359 = vmatpush1.bf16.msra.mxu0 %v4252
        %4360 = vmatprep.subr.bf16.mxu0 %v4249
        %4361 = vmatpush1.bf16.msra.mxu0 %v4248
        %4362 = vmatprep.subr.bf16.mxu0 %v4245
        %4363 = vmatpush1.bf16.msra.mxu0 %v4244
        %4364 = vmatprep.subr.bf16.mxu0 %v4241
        %4365 = vmatpush1.bf16.msra.mxu0 %v4240
        %4366 = vmatprep.subr.bf16.mxu0 %v4237
        %4367 = vmatpush1.bf16.msra.mxu0 %v4236
        %4368 = vmatprep.subr.bf16.mxu0 %v4233
        %4369 = vmatpush1.bf16.msra.mxu0 %v4232
        %4370 = vmatprep.subr.bf16.mxu0 %v4229
        %4371 = vmatpush1.bf16.msra.mxu0 %v4228
        %4372 = vmatprep.subr.bf16.mxu0 %v4289
        %4373 = vmatpush2.bf16.msra.mxu0 %v4288
        %4374 = vmatprep.subr.bf16.mxu0 %v4285
        %4375 = vmatpush2.bf16.msra.mxu0 %v4284
        %4376 = vmatprep.subr.bf16.mxu0 %v4281
        %4377 = vmatpush2.bf16.msra.mxu0 %v4280
        %4378 = vmatprep.subr.bf16.mxu0 %v4277
        %4379 = vmatpush2.bf16.msra.mxu0 %v4276
        %4380 = vmatprep.subr.bf16.mxu0 %v4273
        %4381 = vmatpush2.bf16.msra.mxu0 %v4272
        %4382 = vmatprep.subr.bf16.mxu0 %v4269
        %4383 = vmatpush2.bf16.msra.mxu0 %v4268
        %4384 = vmatprep.subr.bf16.mxu0 %v4265
        %4385 = vmatpush2.bf16.msra.mxu0 %v4264
        %4386 = vmatprep.subr.bf16.mxu0 %v4261
        %4387 = vmatpush2.bf16.msra.mxu0 %v4260
        %4388 = vmatprep.mubr.bf16.mxu0 %v3887
        %4389 = vmatmul.mubr.bf16.gmra.mxu0 %v3886
        %v4390 = vpop.f32.mrf.mxu0
        %v4391 = vadd.f32 %v4019, %v4390
        %v4392 = vpop.f32.mrf.mxu0
        %v4393 = vadd.f32 %v4023, %v4392
        %v4394 = vpop.f32.mrf.mxu0
        %v4395 = vadd.f32 %v4019, %v4394
        %v4396 = vpop.f32.mrf.mxu0
        %v4397 = vadd.f32 %v4023, %v4396
        %4398 = vmatprep.mubr.bf16.mxu0 %v3889
        %4399 = vmatmul.mubr.bf16.gmra.mxu0 %v3888
        %v4400 = vpop.f32.mrf.mxu0
        %v4401 = vadd.f32 %v4019, %v4400
        %v4402 = vpop.f32.mrf.mxu0
        %v4403 = vadd.f32 %v4023, %v4402
        %v4404 = vpop.f32.mrf.mxu0
        %v4405 = vadd.f32 %v4019, %v4404
        %v4406 = vpop.f32.mrf.mxu0
        %v4407 = vadd.f32 %v4023, %v4406
        %4408 = vmatprep.mubr.bf16.mxu0 %v3891
        %4409 = vmatmul.mubr.bf16.gmra.mxu0 %v3890
        %v4410 = vpop.f32.mrf.mxu0
        %v4411 = vadd.f32 %v4019, %v4410
        %v4412 = vpop.f32.mrf.mxu0
        %v4413 = vadd.f32 %v4023, %v4412
        %v4414 = vpop.f32.mrf.mxu0
        %v4415 = vadd.f32 %v4019, %v4414
        %v4416 = vpop.f32.mrf.mxu0
        %v4417 = vadd.f32 %v4023, %v4416
        %4418 = vmatprep.mubr.bf16.mxu0 %v3893
        %4419 = vmatmul.mubr.bf16.gmra.mxu0 %v3892
        %v4420 = vpop.f32.mrf.mxu0
        %v4421 = vadd.f32 %v4019, %v4420
        %v4422 = vpop.f32.mrf.mxu0
        %v4423 = vadd.f32 %v4023, %v4422
        %v4424 = vpop.f32.mrf.mxu0
        %v4425 = vadd.f32 %v4019, %v4424
        %v4426 = vpop.f32.mrf.mxu0
        %v4427 = vadd.f32 %v4023, %v4426
        %4428 = vmatprep.mubr.bf16.mxu0 %v3895
        %4429 = vmatmul.mubr.bf16.gmra.mxu0 %v3894
        %v4430 = vpop.f32.mrf.mxu0
        %v4431 = vadd.f32 %v4019, %v4430
        %v4432 = vpop.f32.mrf.mxu0
        %v4433 = vadd.f32 %v4023, %v4432
        %v4434 = vpop.f32.mrf.mxu0
        %v4435 = vadd.f32 %v4019, %v4434
        %v4436 = vpop.f32.mrf.mxu0
        %v4437 = vadd.f32 %v4023, %v4436
        %4438 = vmatprep.mubr.bf16.mxu0 %v3897
        %4439 = vmatmul.mubr.bf16.gmra.mxu0 %v3896
        %v4440 = vpop.f32.mrf.mxu0
        %v4441 = vadd.f32 %v4019, %v4440
        %v4442 = vpop.f32.mrf.mxu0
        %v4443 = vadd.f32 %v4023, %v4442
        %v4444 = vpop.f32.mrf.mxu0
        %v4445 = vadd.f32 %v4019, %v4444
        %v4446 = vpop.f32.mrf.mxu0
        %v4447 = vadd.f32 %v4023, %v4446
        %4448 = vmatprep.mubr.bf16.mxu0 %v3899
        %4449 = vmatmul.mubr.bf16.gmra.mxu0 %v3898
        %v4450 = vpop.f32.mrf.mxu0
        %v4451 = vadd.f32 %v4019, %v4450
        %v4452 = vpop.f32.mrf.mxu0
        %v4453 = vadd.f32 %v4023, %v4452
        %v4454 = vpop.f32.mrf.mxu0
        %v4455 = vadd.f32 %v4019, %v4454
        %v4456 = vpop.f32.mrf.mxu0
        %v4457 = vadd.f32 %v4023, %v4456
        %4458 = vmatprep.mubr.bf16.mxu0 %v3901
        %4459 = vmatmul.mubr.bf16.gmra.mxu0 %v3900
        %v4460 = vpop.f32.mrf.mxu0
        %v4461 = vadd.f32 %v4019, %v4460
        %v4462 = vpop.f32.mrf.mxu0
        %v4463 = vadd.f32 %v4023, %v4462
        %v4464 = vpop.f32.mrf.mxu0
        %v4465 = vadd.f32 %v4019, %v4464
        %v4466 = vpop.f32.mrf.mxu0
        %v4467 = vadd.f32 %v4023, %v4466
        %4468 = vmatprep.mubr.bf16.mxu0 %v3903
        %4469 = vmatmul.mubr.bf16.gmra.mxu0 %v3902
        %v4470 = vpop.f32.mrf.mxu0
        %v4471 = vadd.f32 %v4019, %v4470
        %v4472 = vpop.f32.mrf.mxu0
        %v4473 = vadd.f32 %v4023, %v4472
        %v4474 = vpop.f32.mrf.mxu0
        %v4475 = vadd.f32 %v4019, %v4474
        %v4476 = vpop.f32.mrf.mxu0
        %v4477 = vadd.f32 %v4023, %v4476
        %4478 = vmatprep.mubr.bf16.mxu0 %v3905
        %4479 = vmatmul.mubr.bf16.gmra.mxu0 %v3904
        %v4480 = vpop.f32.mrf.mxu0
        %v4481 = vadd.f32 %v4019, %v4480
        %v4482 = vpop.f32.mrf.mxu0
        %v4483 = vadd.f32 %v4023, %v4482
        %v4484 = vpop.f32.mrf.mxu0
        %v4485 = vadd.f32 %v4019, %v4484
        %v4486 = vpop.f32.mrf.mxu0
        %v4487 = vadd.f32 %v4023, %v4486
        %4488 = vmatprep.mubr.bf16.mxu0 %v3907
        %4489 = vmatmul.mubr.bf16.gmra.mxu0 %v3906
        %v4490 = vpop.f32.mrf.mxu0
        %v4491 = vadd.f32 %v4019, %v4490
        %v4492 = vpop.f32.mrf.mxu0
        %v4493 = vadd.f32 %v4023, %v4492
        %v4494 = vpop.f32.mrf.mxu0
        %v4495 = vadd.f32 %v4019, %v4494
        %v4496 = vpop.f32.mrf.mxu0
        %v4497 = vadd.f32 %v4023, %v4496
        %4498 = vmatprep.mubr.bf16.mxu0 %v3909
        %4499 = vmatmul.mubr.bf16.gmra.mxu0 %v3908
        %v4500 = vpop.f32.mrf.mxu0
        %v4501 = vadd.f32 %v4019, %v4500
        %v4502 = vpop.f32.mrf.mxu0
        %v4503 = vadd.f32 %v4023, %v4502
        %v4504 = vpop.f32.mrf.mxu0
        %v4505 = vadd.f32 %v4019, %v4504
        %v4506 = vpop.f32.mrf.mxu0
        %v4507 = vadd.f32 %v4023, %v4506
        %4508 = vmatprep.mubr.bf16.mxu0 %v3911
        %4509 = vmatmul.mubr.bf16.gmra.mxu0 %v3910
        %v4510 = vpop.f32.mrf.mxu0
        %v4511 = vadd.f32 %v4019, %v4510
        %v4512 = vpop.f32.mrf.mxu0
        %v4513 = vadd.f32 %v4023, %v4512
        %v4514 = vpop.f32.mrf.mxu0
        %v4515 = vadd.f32 %v4019, %v4514
        %v4516 = vpop.f32.mrf.mxu0
        %v4517 = vadd.f32 %v4023, %v4516
        %4518 = vmatprep.mubr.bf16.mxu0 %v3913
        %4519 = vmatmul.mubr.bf16.gmra.mxu0 %v3912
        %v4520 = vpop.f32.mrf.mxu0
        %v4521 = vadd.f32 %v4019, %v4520
        %v4522 = vpop.f32.mrf.mxu0
        %v4523 = vadd.f32 %v4023, %v4522
        %v4524 = vpop.f32.mrf.mxu0
        %v4525 = vadd.f32 %v4019, %v4524
        %v4526 = vpop.f32.mrf.mxu0
        %v4527 = vadd.f32 %v4023, %v4526
        %4528 = vmatprep.mubr.bf16.mxu0 %v3915
        %4529 = vmatmul.mubr.bf16.gmra.mxu0 %v3914
        %v4530 = vpop.f32.mrf.mxu0
        %v4531 = vadd.f32 %v4019, %v4530
        %v4532 = vpop.f32.mrf.mxu0
        %v4533 = vadd.f32 %v4023, %v4532
        %v4534 = vpop.f32.mrf.mxu0
        %v4535 = vadd.f32 %v4019, %v4534
        %v4536 = vpop.f32.mrf.mxu0
        %v4537 = vadd.f32 %v4023, %v4536
        %4538 = vmatprep.mubr.bf16.mxu0 %v3917
        %4539 = vmatmul.mubr.bf16.gmra.mxu0 %v3916
        %v4540 = vpop.f32.mrf.mxu0
        %v4541 = vadd.f32 %v4019, %v4540
        %v4542 = vpop.f32.mrf.mxu0
        %v4543 = vadd.f32 %v4023, %v4542
        %v4544 = vpop.f32.mrf.mxu0
        %v4545 = vadd.f32 %v4019, %v4544
        %v4546 = vpop.f32.mrf.mxu0
        %v4547 = vadd.f32 %v4023, %v4546
        %4548 = vmatprep.mubr.bf16.mxu0 %v3919
        %4549 = vmatmul.mubr.bf16.gmra.mxu0 %v3918
        %v4550 = vpop.f32.mrf.mxu0
        %v4551 = vadd.f32 %v4019, %v4550
        %v4552 = vpop.f32.mrf.mxu0
        %v4553 = vadd.f32 %v4023, %v4552
        %v4554 = vpop.f32.mrf.mxu0
        %v4555 = vadd.f32 %v4019, %v4554
        %v4556 = vpop.f32.mrf.mxu0
        %v4557 = vadd.f32 %v4023, %v4556
        %4558 = vmatprep.mubr.bf16.mxu0 %v3921
        %4559 = vmatmul.mubr.bf16.gmra.mxu0 %v3920
        %v4560 = vpop.f32.mrf.mxu0
        %v4561 = vadd.f32 %v4019, %v4560
        %v4562 = vpop.f32.mrf.mxu0
        %v4563 = vadd.f32 %v4023, %v4562
        %v4564 = vpop.f32.mrf.mxu0
        %v4565 = vadd.f32 %v4019, %v4564
        %v4566 = vpop.f32.mrf.mxu0
        %v4567 = vadd.f32 %v4023, %v4566
        %4568 = vmatprep.mubr.bf16.mxu0 %v3923
        %4569 = vmatmul.mubr.bf16.gmra.mxu0 %v3922
        %v4570 = vpop.f32.mrf.mxu0
        %v4571 = vadd.f32 %v4019, %v4570
        %v4572 = vpop.f32.mrf.mxu0
        %v4573 = vadd.f32 %v4023, %v4572
        %v4574 = vpop.f32.mrf.mxu0
        %v4575 = vadd.f32 %v4019, %v4574
        %v4576 = vpop.f32.mrf.mxu0
        %v4577 = vadd.f32 %v4023, %v4576
        %4578 = vmatprep.mubr.bf16.mxu0 %v3925
        %4579 = vmatmul.mubr.bf16.gmra.mxu0 %v3924
        %v4580 = vpop.f32.mrf.mxu0
        %v4581 = vadd.f32 %v4019, %v4580
        %v4582 = vpop.f32.mrf.mxu0
        %v4583 = vadd.f32 %v4023, %v4582
        %v4584 = vpop.f32.mrf.mxu0
        %v4585 = vadd.f32 %v4019, %v4584
        %v4586 = vpop.f32.mrf.mxu0
        %v4587 = vadd.f32 %v4023, %v4586
        %4588 = vmatprep.mubr.bf16.mxu0 %v3927
        %4589 = vmatmul.mubr.bf16.gmra.mxu0 %v3926
        %v4590 = vpop.f32.mrf.mxu0
        %v4591 = vadd.f32 %v4019, %v4590
        %v4592 = vpop.f32.mrf.mxu0
        %v4593 = vadd.f32 %v4023, %v4592
        %v4594 = vpop.f32.mrf.mxu0
        %v4595 = vadd.f32 %v4019, %v4594
        %v4596 = vpop.f32.mrf.mxu0
        %v4597 = vadd.f32 %v4023, %v4596
        %4598 = vmatprep.mubr.bf16.mxu0 %v3929
        %4599 = vmatmul.mubr.bf16.gmra.mxu0 %v3928
        %v4600 = vpop.f32.mrf.mxu0
        %v4601 = vadd.f32 %v4019, %v4600
        %v4602 = vpop.f32.mrf.mxu0
        %v4603 = vadd.f32 %v4023, %v4602
        %v4604 = vpop.f32.mrf.mxu0
        %v4605 = vadd.f32 %v4019, %v4604
        %v4606 = vpop.f32.mrf.mxu0
        %v4607 = vadd.f32 %v4023, %v4606
        %4608 = vmatprep.mubr.bf16.mxu0 %v3931
        %4609 = vmatmul.mubr.bf16.gmra.mxu0 %v3930
        %v4610 = vpop.f32.mrf.mxu0
        %v4611 = vadd.f32 %v4019, %v4610
        %v4612 = vpop.f32.mrf.mxu0
        %v4613 = vadd.f32 %v4023, %v4612
        %v4614 = vpop.f32.mrf.mxu0
        %v4615 = vadd.f32 %v4019, %v4614
        %v4616 = vpop.f32.mrf.mxu0
        %v4617 = vadd.f32 %v4023, %v4616
        %4618 = vmatprep.mubr.bf16.mxu0 %v3933
        %4619 = vmatmul.mubr.bf16.gmra.mxu0 %v3932
        %v4620 = vpop.f32.mrf.mxu0
        %v4621 = vadd.f32 %v4019, %v4620
        %v4622 = vpop.f32.mrf.mxu0
        %v4623 = vadd.f32 %v4023, %v4622
        %v4624 = vpop.f32.mrf.mxu0
        %v4625 = vadd.f32 %v4019, %v4624
        %v4626 = vpop.f32.mrf.mxu0
        %v4627 = vadd.f32 %v4023, %v4626
        %4628 = vmatprep.mubr.bf16.mxu0 %v3935
        %4629 = vmatmul.mubr.bf16.gmra.mxu0 %v3934
        %v4630 = vpop.f32.mrf.mxu0
        %v4631 = vadd.f32 %v4019, %v4630
        %v4632 = vpop.f32.mrf.mxu0
        %v4633 = vadd.f32 %v4023, %v4632
        %v4634 = vpop.f32.mrf.mxu0
        %v4635 = vadd.f32 %v4019, %v4634
        %v4636 = vpop.f32.mrf.mxu0
        %v4637 = vadd.f32 %v4023, %v4636
        %4638 = vmatprep.mubr.bf16.mxu0 %v3937
        %4639 = vmatmul.mubr.bf16.gmra.mxu0 %v3936
        %v4640 = vpop.f32.mrf.mxu0
        %v4641 = vadd.f32 %v4019, %v4640
        %v4642 = vpop.f32.mrf.mxu0
        %v4643 = vadd.f32 %v4023, %v4642
        %v4644 = vpop.f32.mrf.mxu0
        %v4645 = vadd.f32 %v4019, %v4644
        %v4646 = vpop.f32.mrf.mxu0
        %v4647 = vadd.f32 %v4023, %v4646
        %4648 = vmatprep.mubr.bf16.mxu0 %v3939
        %4649 = vmatmul.mubr.bf16.gmra.mxu0 %v3938
        %v4650 = vpop.f32.mrf.mxu0
        %v4651 = vadd.f32 %v4019, %v4650
        %v4652 = vpop.f32.mrf.mxu0
        %v4653 = vadd.f32 %v4023, %v4652
        %v4654 = vpop.f32.mrf.mxu0
        %v4655 = vadd.f32 %v4019, %v4654
        %v4656 = vpop.f32.mrf.mxu0
        %v4657 = vadd.f32 %v4023, %v4656
        %4658 = vmatprep.mubr.bf16.mxu0 %v3941
        %4659 = vmatmul.mubr.bf16.gmra.mxu0 %v3940
        %v4660 = vpop.f32.mrf.mxu0
        %v4661 = vadd.f32 %v4019, %v4660
        %v4662 = vpop.f32.mrf.mxu0
        %v4663 = vadd.f32 %v4023, %v4662
        %v4664 = vpop.f32.mrf.mxu0
        %v4665 = vadd.f32 %v4019, %v4664
        %v4666 = vpop.f32.mrf.mxu0
        %v4667 = vadd.f32 %v4023, %v4666
        %4668 = vmatprep.mubr.bf16.mxu0 %v3943
        %4669 = vmatmul.mubr.bf16.gmra.mxu0 %v3942
        %v4670 = vpop.f32.mrf.mxu0
        %v4671 = vadd.f32 %v4019, %v4670
        %v4672 = vpop.f32.mrf.mxu0
        %v4673 = vadd.f32 %v4023, %v4672
        %v4674 = vpop.f32.mrf.mxu0
        %v4675 = vadd.f32 %v4019, %v4674
        %v4676 = vpop.f32.mrf.mxu0
        %v4677 = vadd.f32 %v4023, %v4676
        %4678 = vmatprep.mubr.bf16.mxu0 %v3945
        %4679 = vmatmul.mubr.bf16.gmra.mxu0 %v3944
        %v4680 = vpop.f32.mrf.mxu0
        %v4681 = vadd.f32 %v4019, %v4680
        %v4682 = vpop.f32.mrf.mxu0
        %v4683 = vadd.f32 %v4023, %v4682
        %v4684 = vpop.f32.mrf.mxu0
        %v4685 = vadd.f32 %v4019, %v4684
        %v4686 = vpop.f32.mrf.mxu0
        %v4687 = vadd.f32 %v4023, %v4686
        %4688 = vmatprep.mubr.bf16.mxu0 %v3947
        %4689 = vmatmul.mubr.bf16.gmra.mxu0 %v3946
        %v4690 = vpop.f32.mrf.mxu0
        %v4691 = vadd.f32 %v4019, %v4690
        %v4692 = vpop.f32.mrf.mxu0
        %v4693 = vadd.f32 %v4023, %v4692
        %v4694 = vpop.f32.mrf.mxu0
        %v4695 = vadd.f32 %v4019, %v4694
        %v4696 = vpop.f32.mrf.mxu0
        %v4697 = vadd.f32 %v4023, %v4696
        %4698 = vmatprep.mubr.bf16.mxu0 %v3949
        %4699 = vmatmul.mubr.bf16.gmra.mxu0 %v3948
        %v4700 = vpop.f32.mrf.mxu0
        %v4701 = vadd.f32 %v4019, %v4700
        %v4702 = vpop.f32.mrf.mxu0
        %v4703 = vadd.f32 %v4023, %v4702
        %v4704 = vpop.f32.mrf.mxu0
        %v4705 = vadd.f32 %v4019, %v4704
        %v4706 = vpop.f32.mrf.mxu0
        %v4707 = vadd.f32 %v4023, %v4706
        %4708 = vdwg.mxu0
        %4709 = vmatprep.subr.bf16.mxu0 %v4259
        %4710 = vmatpush1.bf16.msra.mxu0 %v4258
        %4711 = vmatprep.subr.bf16.mxu0 %v4255
        %4712 = vmatpush1.bf16.msra.mxu0 %v4254
        %4713 = vmatprep.subr.bf16.mxu0 %v4251
        %4714 = vmatpush1.bf16.msra.mxu0 %v4250
        %4715 = vmatprep.subr.bf16.mxu0 %v4247
        %4716 = vmatpush1.bf16.msra.mxu0 %v4246
        %4717 = vmatprep.subr.bf16.mxu0 %v4243
        %4718 = vmatpush1.bf16.msra.mxu0 %v4242
        %4719 = vmatprep.subr.bf16.mxu0 %v4239
        %4720 = vmatpush1.bf16.msra.mxu0 %v4238
        %4721 = vmatprep.subr.bf16.mxu0 %v4235
        %4722 = vmatpush1.bf16.msra.mxu0 %v4234
        %4723 = vmatprep.subr.bf16.mxu0 %v4231
        %4724 = vmatpush1.bf16.msra.mxu0 %v4230
        %4725 = vmatprep.subr.bf16.mxu0 %v4291
        %4726 = vmatpush2.bf16.msra.mxu0 %v4290
        %4727 = vmatprep.subr.bf16.mxu0 %v4287
        %4728 = vmatpush2.bf16.msra.mxu0 %v4286
        %4729 = vmatprep.subr.bf16.mxu0 %v4283
        %4730 = vmatpush2.bf16.msra.mxu0 %v4282
        %4731 = vmatprep.subr.bf16.mxu0 %v4279
        %4732 = vmatpush2.bf16.msra.mxu0 %v4278
        %4733 = vmatprep.subr.bf16.mxu0 %v4275
        %4734 = vmatpush2.bf16.msra.mxu0 %v4274
        %4735 = vmatprep.subr.bf16.mxu0 %v4271
        %4736 = vmatpush2.bf16.msra.mxu0 %v4270
        %4737 = vmatprep.subr.bf16.mxu0 %v4267
        %4738 = vmatpush2.bf16.msra.mxu0 %v4266
        %4739 = vmatprep.subr.bf16.mxu0 %v4263
        %4740 = vmatpush2.bf16.msra.mxu0 %v4262
        %4741 = vmatprep.mubr.bf16.mxu0 %v3887
        %4742 = vmatmul.mubr.bf16.gmra.mxu0 %v3886
        %v4743 = vpop.f32.mrf.mxu0
        %v4744 = vadd.f32 %v4027, %v4743
        %v4745 = vpop.f32.mrf.mxu0
        %v4746 = vadd.f32 %v4031, %v4745
        %v4747 = vpop.f32.mrf.mxu0
        %v4748 = vadd.f32 %v4027, %v4747
        %v4749 = vpop.f32.mrf.mxu0
        %v4750 = vadd.f32 %v4031, %v4749
        %4751 = vmatprep.mubr.bf16.mxu0 %v3889
        %4752 = vmatmul.mubr.bf16.gmra.mxu0 %v3888
        %v4753 = vpop.f32.mrf.mxu0
        %v4754 = vadd.f32 %v4027, %v4753
        %v4755 = vpop.f32.mrf.mxu0
        %v4756 = vadd.f32 %v4031, %v4755
        %v4757 = vpop.f32.mrf.mxu0
        %v4758 = vadd.f32 %v4027, %v4757
        %v4759 = vpop.f32.mrf.mxu0
        %v4760 = vadd.f32 %v4031, %v4759
        %4761 = vmatprep.mubr.bf16.mxu0 %v3891
        %4762 = vmatmul.mubr.bf16.gmra.mxu0 %v3890
        %v4763 = vpop.f32.mrf.mxu0
        %v4764 = vadd.f32 %v4027, %v4763
        %v4765 = vpop.f32.mrf.mxu0
        %v4766 = vadd.f32 %v4031, %v4765
        %v4767 = vpop.f32.mrf.mxu0
        %v4768 = vadd.f32 %v4027, %v4767
        %v4769 = vpop.f32.mrf.mxu0
        %v4770 = vadd.f32 %v4031, %v4769
        %4771 = vmatprep.mubr.bf16.mxu0 %v3893
        %4772 = vmatmul.mubr.bf16.gmra.mxu0 %v3892
        %v4773 = vpop.f32.mrf.mxu0
        %v4774 = vadd.f32 %v4027, %v4773
        %v4775 = vpop.f32.mrf.mxu0
        %v4776 = vadd.f32 %v4031, %v4775
        %v4777 = vpop.f32.mrf.mxu0
        %v4778 = vadd.f32 %v4027, %v4777
        %v4779 = vpop.f32.mrf.mxu0
        %v4780 = vadd.f32 %v4031, %v4779
        %4781 = vmatprep.mubr.bf16.mxu0 %v3895
        %4782 = vmatmul.mubr.bf16.gmra.mxu0 %v3894
        %v4783 = vpop.f32.mrf.mxu0
        %v4784 = vadd.f32 %v4027, %v4783
        %v4785 = vpop.f32.mrf.mxu0
        %v4786 = vadd.f32 %v4031, %v4785
        %v4787 = vpop.f32.mrf.mxu0
        %v4788 = vadd.f32 %v4027, %v4787
        %v4789 = vpop.f32.mrf.mxu0
        %v4790 = vadd.f32 %v4031, %v4789
        %4791 = vmatprep.mubr.bf16.mxu0 %v3897
        %4792 = vmatmul.mubr.bf16.gmra.mxu0 %v3896
        %v4793 = vpop.f32.mrf.mxu0
        %v4794 = vadd.f32 %v4027, %v4793
        %v4795 = vpop.f32.mrf.mxu0
        %v4796 = vadd.f32 %v4031, %v4795
        %v4797 = vpop.f32.mrf.mxu0
        %v4798 = vadd.f32 %v4027, %v4797
        %v4799 = vpop.f32.mrf.mxu0
        %v4800 = vadd.f32 %v4031, %v4799
        %4801 = vmatprep.mubr.bf16.mxu0 %v3899
        %4802 = vmatmul.mubr.bf16.gmra.mxu0 %v3898
        %v4803 = vpop.f32.mrf.mxu0
        %v4804 = vadd.f32 %v4027, %v4803
        %v4805 = vpop.f32.mrf.mxu0
        %v4806 = vadd.f32 %v4031, %v4805
        %v4807 = vpop.f32.mrf.mxu0
        %v4808 = vadd.f32 %v4027, %v4807
        %v4809 = vpop.f32.mrf.mxu0
        %v4810 = vadd.f32 %v4031, %v4809
        %4811 = vmatprep.mubr.bf16.mxu0 %v3901
        %4812 = vmatmul.mubr.bf16.gmra.mxu0 %v3900
        %v4813 = vpop.f32.mrf.mxu0
        %v4814 = vadd.f32 %v4027, %v4813
        %v4815 = vpop.f32.mrf.mxu0
        %v4816 = vadd.f32 %v4031, %v4815
        %v4817 = vpop.f32.mrf.mxu0
        %v4818 = vadd.f32 %v4027, %v4817
        %v4819 = vpop.f32.mrf.mxu0
        %v4820 = vadd.f32 %v4031, %v4819
        %4821 = vmatprep.mubr.bf16.mxu0 %v3903
        %4822 = vmatmul.mubr.bf16.gmra.mxu0 %v3902
        %v4823 = vpop.f32.mrf.mxu0
        %v4824 = vadd.f32 %v4027, %v4823
        %v4825 = vpop.f32.mrf.mxu0
        %v4826 = vadd.f32 %v4031, %v4825
        %v4827 = vpop.f32.mrf.mxu0
        %v4828 = vadd.f32 %v4027, %v4827
        %v4829 = vpop.f32.mrf.mxu0
        %v4830 = vadd.f32 %v4031, %v4829
        %4831 = vmatprep.mubr.bf16.mxu0 %v3905
        %4832 = vmatmul.mubr.bf16.gmra.mxu0 %v3904
        %v4833 = vpop.f32.mrf.mxu0
        %v4834 = vadd.f32 %v4027, %v4833
        %v4835 = vpop.f32.mrf.mxu0
        %v4836 = vadd.f32 %v4031, %v4835
        %v4837 = vpop.f32.mrf.mxu0
        %v4838 = vadd.f32 %v4027, %v4837
        %v4839 = vpop.f32.mrf.mxu0
        %v4840 = vadd.f32 %v4031, %v4839
        %4841 = vmatprep.mubr.bf16.mxu0 %v3907
        %4842 = vmatmul.mubr.bf16.gmra.mxu0 %v3906
        %v4843 = vpop.f32.mrf.mxu0
        %v4844 = vadd.f32 %v4027, %v4843
        %v4845 = vpop.f32.mrf.mxu0
        %v4846 = vadd.f32 %v4031, %v4845
        %v4847 = vpop.f32.mrf.mxu0
        %v4848 = vadd.f32 %v4027, %v4847
        %v4849 = vpop.f32.mrf.mxu0
        %v4850 = vadd.f32 %v4031, %v4849
        %4851 = vmatprep.mubr.bf16.mxu0 %v3909
        %4852 = vmatmul.mubr.bf16.gmra.mxu0 %v3908
        %v4853 = vpop.f32.mrf.mxu0
        %v4854 = vadd.f32 %v4027, %v4853
        %v4855 = vpop.f32.mrf.mxu0
        %v4856 = vadd.f32 %v4031, %v4855
        %v4857 = vpop.f32.mrf.mxu0
        %v4858 = vadd.f32 %v4027, %v4857
        %v4859 = vpop.f32.mrf.mxu0
        %v4860 = vadd.f32 %v4031, %v4859
        %4861 = vmatprep.mubr.bf16.mxu0 %v3911
        %4862 = vmatmul.mubr.bf16.gmra.mxu0 %v3910
        %v4863 = vpop.f32.mrf.mxu0
        %v4864 = vadd.f32 %v4027, %v4863
        %v4865 = vpop.f32.mrf.mxu0
        %v4866 = vadd.f32 %v4031, %v4865
        %v4867 = vpop.f32.mrf.mxu0
        %v4868 = vadd.f32 %v4027, %v4867
        %v4869 = vpop.f32.mrf.mxu0
        %v4870 = vadd.f32 %v4031, %v4869
        %4871 = vmatprep.mubr.bf16.mxu0 %v3913
        %4872 = vmatmul.mubr.bf16.gmra.mxu0 %v3912
        %v4873 = vpop.f32.mrf.mxu0
        %v4874 = vadd.f32 %v4027, %v4873
        %v4875 = vpop.f32.mrf.mxu0
        %v4876 = vadd.f32 %v4031, %v4875
        %v4877 = vpop.f32.mrf.mxu0
        %v4878 = vadd.f32 %v4027, %v4877
        %v4879 = vpop.f32.mrf.mxu0
        %v4880 = vadd.f32 %v4031, %v4879
        %4881 = vmatprep.mubr.bf16.mxu0 %v3915
        %4882 = vmatmul.mubr.bf16.gmra.mxu0 %v3914
        %v4883 = vpop.f32.mrf.mxu0
        %v4884 = vadd.f32 %v4027, %v4883
        %v4885 = vpop.f32.mrf.mxu0
        %v4886 = vadd.f32 %v4031, %v4885
        %v4887 = vpop.f32.mrf.mxu0
        %v4888 = vadd.f32 %v4027, %v4887
        %v4889 = vpop.f32.mrf.mxu0
        %v4890 = vadd.f32 %v4031, %v4889
        %4891 = vmatprep.mubr.bf16.mxu0 %v3917
        %4892 = vmatmul.mubr.bf16.gmra.mxu0 %v3916
        %v4893 = vpop.f32.mrf.mxu0
        %v4894 = vadd.f32 %v4027, %v4893
        %v4895 = vpop.f32.mrf.mxu0
        %v4896 = vadd.f32 %v4031, %v4895
        %v4897 = vpop.f32.mrf.mxu0
        %v4898 = vadd.f32 %v4027, %v4897
        %v4899 = vpop.f32.mrf.mxu0
        %v4900 = vadd.f32 %v4031, %v4899
        %4901 = vmatprep.mubr.bf16.mxu0 %v3919
        %4902 = vmatmul.mubr.bf16.gmra.mxu0 %v3918
        %v4903 = vpop.f32.mrf.mxu0
        %v4904 = vadd.f32 %v4027, %v4903
        %v4905 = vpop.f32.mrf.mxu0
        %v4906 = vadd.f32 %v4031, %v4905
        %v4907 = vpop.f32.mrf.mxu0
        %v4908 = vadd.f32 %v4027, %v4907
        %v4909 = vpop.f32.mrf.mxu0
        %v4910 = vadd.f32 %v4031, %v4909
        %4911 = vmatprep.mubr.bf16.mxu0 %v3921
        %4912 = vmatmul.mubr.bf16.gmra.mxu0 %v3920
        %v4913 = vpop.f32.mrf.mxu0
        %v4914 = vadd.f32 %v4027, %v4913
        %v4915 = vpop.f32.mrf.mxu0
        %v4916 = vadd.f32 %v4031, %v4915
        %v4917 = vpop.f32.mrf.mxu0
        %v4918 = vadd.f32 %v4027, %v4917
        %v4919 = vpop.f32.mrf.mxu0
        %v4920 = vadd.f32 %v4031, %v4919
        %4921 = vmatprep.mubr.bf16.mxu0 %v3923
        %4922 = vmatmul.mubr.bf16.gmra.mxu0 %v3922
        %v4923 = vpop.f32.mrf.mxu0
        %v4924 = vadd.f32 %v4027, %v4923
        %v4925 = vpop.f32.mrf.mxu0
        %v4926 = vadd.f32 %v4031, %v4925
        %v4927 = vpop.f32.mrf.mxu0
        %v4928 = vadd.f32 %v4027, %v4927
        %v4929 = vpop.f32.mrf.mxu0
        %v4930 = vadd.f32 %v4031, %v4929
        %4931 = vmatprep.mubr.bf16.mxu0 %v3925
        %4932 = vmatmul.mubr.bf16.gmra.mxu0 %v3924
        %v4933 = vpop.f32.mrf.mxu0
        %v4934 = vadd.f32 %v4027, %v4933
        %v4935 = vpop.f32.mrf.mxu0
        %v4936 = vadd.f32 %v4031, %v4935
        %v4937 = vpop.f32.mrf.mxu0
        %v4938 = vadd.f32 %v4027, %v4937
        %v4939 = vpop.f32.mrf.mxu0
        %v4940 = vadd.f32 %v4031, %v4939
        %4941 = vmatprep.mubr.bf16.mxu0 %v3927
        %4942 = vmatmul.mubr.bf16.gmra.mxu0 %v3926
        %v4943 = vpop.f32.mrf.mxu0
        %v4944 = vadd.f32 %v4027, %v4943
        %v4945 = vpop.f32.mrf.mxu0
        %v4946 = vadd.f32 %v4031, %v4945
        %v4947 = vpop.f32.mrf.mxu0
        %v4948 = vadd.f32 %v4027, %v4947
        %v4949 = vpop.f32.mrf.mxu0
        %v4950 = vadd.f32 %v4031, %v4949
        %4951 = vmatprep.mubr.bf16.mxu0 %v3929
        %4952 = vmatmul.mubr.bf16.gmra.mxu0 %v3928
        %v4953 = vpop.f32.mrf.mxu0
        %v4954 = vadd.f32 %v4027, %v4953
        %v4955 = vpop.f32.mrf.mxu0
        %v4956 = vadd.f32 %v4031, %v4955
        %v4957 = vpop.f32.mrf.mxu0
        %v4958 = vadd.f32 %v4027, %v4957
        %v4959 = vpop.f32.mrf.mxu0
        %v4960 = vadd.f32 %v4031, %v4959
        %4961 = vmatprep.mubr.bf16.mxu0 %v3931
        %4962 = vmatmul.mubr.bf16.gmra.mxu0 %v3930
        %v4963 = vpop.f32.mrf.mxu0
        %v4964 = vadd.f32 %v4027, %v4963
        %v4965 = vpop.f32.mrf.mxu0
        %v4966 = vadd.f32 %v4031, %v4965
        %v4967 = vpop.f32.mrf.mxu0
        %v4968 = vadd.f32 %v4027, %v4967
        %v4969 = vpop.f32.mrf.mxu0
        %v4970 = vadd.f32 %v4031, %v4969
        %4971 = vmatprep.mubr.bf16.mxu0 %v3933
        %4972 = vmatmul.mubr.bf16.gmra.mxu0 %v3932
        %v4973 = vpop.f32.mrf.mxu0
        %v4974 = vadd.f32 %v4027, %v4973
        %v4975 = vpop.f32.mrf.mxu0
        %v4976 = vadd.f32 %v4031, %v4975
        %v4977 = vpop.f32.mrf.mxu0
        %v4978 = vadd.f32 %v4027, %v4977
        %v4979 = vpop.f32.mrf.mxu0
        %v4980 = vadd.f32 %v4031, %v4979
        %4981 = vmatprep.mubr.bf16.mxu0 %v3935
        %4982 = vmatmul.mubr.bf16.gmra.mxu0 %v3934
        %v4983 = vpop.f32.mrf.mxu0
        %v4984 = vadd.f32 %v4027, %v4983
        %v4985 = vpop.f32.mrf.mxu0
        %v4986 = vadd.f32 %v4031, %v4985
        %v4987 = vpop.f32.mrf.mxu0
        %v4988 = vadd.f32 %v4027, %v4987
        %v4989 = vpop.f32.mrf.mxu0
        %v4990 = vadd.f32 %v4031, %v4989
        %4991 = vmatprep.mubr.bf16.mxu0 %v3937
        %4992 = vmatmul.mubr.bf16.gmra.mxu0 %v3936
        %v4993 = vpop.f32.mrf.mxu0
        %v4994 = vadd.f32 %v4027, %v4993
        %v4995 = vpop.f32.mrf.mxu0
        %v4996 = vadd.f32 %v4031, %v4995
        %v4997 = vpop.f32.mrf.mxu0
        %v4998 = vadd.f32 %v4027, %v4997
        %v4999 = vpop.f32.mrf.mxu0
        %v5000 = vadd.f32 %v4031, %v4999
        %5001 = vmatprep.mubr.bf16.mxu0 %v3939
        %5002 = vmatmul.mubr.bf16.gmra.mxu0 %v3938
        %v5003 = vpop.f32.mrf.mxu0
        %v5004 = vadd.f32 %v4027, %v5003
        %v5005 = vpop.f32.mrf.mxu0
        %v5006 = vadd.f32 %v4031, %v5005
        %v5007 = vpop.f32.mrf.mxu0
        %v5008 = vadd.f32 %v4027, %v5007
        %v5009 = vpop.f32.mrf.mxu0
        %v5010 = vadd.f32 %v4031, %v5009
        %5011 = vmatprep.mubr.bf16.mxu0 %v3941
        %5012 = vmatmul.mubr.bf16.gmra.mxu0 %v3940
        %v5013 = vpop.f32.mrf.mxu0
        %v5014 = vadd.f32 %v4027, %v5013
        %v5015 = vpop.f32.mrf.mxu0
        %v5016 = vadd.f32 %v4031, %v5015
        %v5017 = vpop.f32.mrf.mxu0
        %v5018 = vadd.f32 %v4027, %v5017
        %v5019 = vpop.f32.mrf.mxu0
        %v5020 = vadd.f32 %v4031, %v5019
        %5021 = vmatprep.mubr.bf16.mxu0 %v3943
        %5022 = vmatmul.mubr.bf16.gmra.mxu0 %v3942
        %v5023 = vpop.f32.mrf.mxu0
        %v5024 = vadd.f32 %v4027, %v5023
        %v5025 = vpop.f32.mrf.mxu0
        %v5026 = vadd.f32 %v4031, %v5025
        %v5027 = vpop.f32.mrf.mxu0
        %v5028 = vadd.f32 %v4027, %v5027
        %v5029 = vpop.f32.mrf.mxu0
        %v5030 = vadd.f32 %v4031, %v5029
        %5031 = vmatprep.mubr.bf16.mxu0 %v3945
        %5032 = vmatmul.mubr.bf16.gmra.mxu0 %v3944
        %v5033 = vpop.f32.mrf.mxu0
        %v5034 = vadd.f32 %v4027, %v5033
        %v5035 = vpop.f32.mrf.mxu0
        %v5036 = vadd.f32 %v4031, %v5035
        %v5037 = vpop.f32.mrf.mxu0
        %v5038 = vadd.f32 %v4027, %v5037
        %v5039 = vpop.f32.mrf.mxu0
        %v5040 = vadd.f32 %v4031, %v5039
        %5041 = vmatprep.mubr.bf16.mxu0 %v3947
        %5042 = vmatmul.mubr.bf16.gmra.mxu0 %v3946
        %v5043 = vpop.f32.mrf.mxu0
        %v5044 = vadd.f32 %v4027, %v5043
        %v5045 = vpop.f32.mrf.mxu0
        %v5046 = vadd.f32 %v4031, %v5045
        %v5047 = vpop.f32.mrf.mxu0
        %v5048 = vadd.f32 %v4027, %v5047
        %v5049 = vpop.f32.mrf.mxu0
        %v5050 = vadd.f32 %v4031, %v5049
        %5051 = vmatprep.mubr.bf16.mxu0 %v3949
        %5052 = vmatmul.mubr.bf16.gmra.mxu0 %v3948
        %v5053 = vpop.f32.mrf.mxu0
        %v5054 = vadd.f32 %v4027, %v5053
        %v5055 = vpop.f32.mrf.mxu0
        %v5056 = vadd.f32 %v4031, %v5055
        %v5057 = vpop.f32.mrf.mxu0
        %v5058 = vadd.f32 %v4027, %v5057
        %v5059 = vpop.f32.mrf.mxu0
        %v5060 = vadd.f32 %v4031, %v5059
        %5061 = vdwg.mxu0
        %5062 = vst [vmem:[%s526] sm:$0xff] %v4391
        %5063 = vst [vmem:[%s526 + $0x8] sm:$0xff] %v4393
        %5064 = vst [vmem:[%s526 + $0x10] sm:$0xff] %v4744
        %5065 = vst [vmem:[%s526 + $0x18] sm:$0xff] %v4746
        %5066 = vst [vmem:[%s526 + $0x20] sm:$0xff] %v4395
        %5067 = vst [vmem:[%s526 + $0x28] sm:$0xff] %v4397
        %5068 = vst [vmem:[%s526 + $0x30] sm:$0xff] %v4748
        %5069 = vst [vmem:[%s526 + $0x38] sm:$0xff] %v4750
        %5070 = vst [vmem:[%s526 + $0x40] sm:$0xff] %v4401
        %5071 = vst [vmem:[%s526 + $0x48] sm:$0xff] %v4403
        %5072 = vst [vmem:[%s526 + $0x50] sm:$0xff] %v4754
        %5073 = vst [vmem:[%s526 + $0x58] sm:$0xff] %v4756
        %5074 = vst [vmem:[%s526 + $0x60] sm:$0xff] %v4405
        %5075 = vst [vmem:[%s526 + $0x68] sm:$0xff] %v4407
        %5076 = vst [vmem:[%s526 + $0x70] sm:$0xff] %v4758
        %5077 = vst [vmem:[%s526 + $0x78] sm:$0xff] %v4760
        %5078 = vst [vmem:[%s526 + $0x80] sm:$0xff] %v4411
        %5079 = vst [vmem:[%s526 + $0x88] sm:$0xff] %v4413
        %5080 = vst [vmem:[%s526 + $0x90] sm:$0xff] %v4764
        %5081 = vst [vmem:[%s526 + $0x98] sm:$0xff] %v4766
        %5082 = vst [vmem:[%s526 + $0xa0] sm:$0xff] %v4415
        %5083 = vst [vmem:[%s526 + $0xa8] sm:$0xff] %v4417
        %5084 = vst [vmem:[%s526 + $0xb0] sm:$0xff] %v4768
        %5085 = vst [vmem:[%s526 + $0xb8] sm:$0xff] %v4770
        %5086 = vst [vmem:[%s526 + $0xc0] sm:$0xff] %v4421
        %5087 = vst [vmem:[%s526 + $0xc8] sm:$0xff] %v4423
        %5088 = vst [vmem:[%s526 + $0xd0] sm:$0xff] %v4774
        %5089 = vst [vmem:[%s526 + $0xd8] sm:$0xff] %v4776
        %5090 = vst [vmem:[%s526 + $0xe0] sm:$0xff] %v4425
        %5091 = vst [vmem:[%s526 + $0xe8] sm:$0xff] %v4427
        %5092 = vst [vmem:[%s526 + $0xf0] sm:$0xff] %v4778
        %5093 = vst [vmem:[%s526 + $0xf8] sm:$0xff] %v4780
        %5094 = vst [vmem:[%s526 + $0x100] sm:$0xff] %v4431
        %5095 = vst [vmem:[%s526 + $0x108] sm:$0xff] %v4433
        %5096 = vst [vmem:[%s526 + $0x110] sm:$0xff] %v4784
        %5097 = vst [vmem:[%s526 + $0x118] sm:$0xff] %v4786
        %5098 = vst [vmem:[%s526 + $0x120] sm:$0xff] %v4435
        %5099 = vst [vmem:[%s526 + $0x128] sm:$0xff] %v4437
        %5100 = vst [vmem:[%s526 + $0x130] sm:$0xff] %v4788
        %5101 = vst [vmem:[%s526 + $0x138] sm:$0xff] %v4790
        %5102 = vst [vmem:[%s526 + $0x140] sm:$0xff] %v4441
        %5103 = vst [vmem:[%s526 + $0x148] sm:$0xff] %v4443
        %5104 = vst [vmem:[%s526 + $0x150] sm:$0xff] %v4794
        %5105 = vst [vmem:[%s526 + $0x158] sm:$0xff] %v4796
        %5106 = vst [vmem:[%s526 + $0x160] sm:$0xff] %v4445
        %5107 = vst [vmem:[%s526 + $0x168] sm:$0xff] %v4447
        %5108 = vst [vmem:[%s526 + $0x170] sm:$0xff] %v4798
        %5109 = vst [vmem:[%s526 + $0x178] sm:$0xff] %v4800
        %5110 = vst [vmem:[%s526 + $0x180] sm:$0xff] %v4451
        %5111 = vst [vmem:[%s526 + $0x188] sm:$0xff] %v4453
        %5112 = vst [vmem:[%s526 + $0x190] sm:$0xff] %v4804
        %5113 = vst [vmem:[%s526 + $0x198] sm:$0xff] %v4806
        %5114 = vst [vmem:[%s526 + $0x1a0] sm:$0xff] %v4455
        %5115 = vst [vmem:[%s526 + $0x1a8] sm:$0xff] %v4457
        %5116 = vst [vmem:[%s526 + $0x1b0] sm:$0xff] %v4808
        %5117 = vst [vmem:[%s526 + $0x1b8] sm:$0xff] %v4810
        %5118 = vst [vmem:[%s526 + $0x1c0] sm:$0xff] %v4461
        %5119 = vst [vmem:[%s526 + $0x1c8] sm:$0xff] %v4463
        %5120 = vst [vmem:[%s526 + $0x1d0] sm:$0xff] %v4814
        %5121 = vst [vmem:[%s526 + $0x1d8] sm:$0xff] %v4816
        %5122 = vst [vmem:[%s526 + $0x1e0] sm:$0xff] %v4465
        %5123 = vst [vmem:[%s526 + $0x1e8] sm:$0xff] %v4467
        %5124 = vst [vmem:[%s526 + $0x1f0] sm:$0xff] %v4818
        %5125 = vst [vmem:[%s526 + $0x1f8] sm:$0xff] %v4820
        %5126 = vst [vmem:[%s526 + $0x200] sm:$0xff] %v4471
        %5127 = vst [vmem:[%s526 + $0x208] sm:$0xff] %v4473
        %5128 = vst [vmem:[%s526 + $0x210] sm:$0xff] %v4824
        %5129 = vst [vmem:[%s526 + $0x218] sm:$0xff] %v4826
        %5130 = vst [vmem:[%s526 + $0x220] sm:$0xff] %v4475
        %5131 = vst [vmem:[%s526 + $0x228] sm:$0xff] %v4477
        %5132 = vst [vmem:[%s526 + $0x230] sm:$0xff] %v4828
        %5133 = vst [vmem:[%s526 + $0x238] sm:$0xff] %v4830
        %5134 = vst [vmem:[%s526 + $0x240] sm:$0xff] %v4481
        %5135 = vst [vmem:[%s526 + $0x248] sm:$0xff] %v4483
        %5136 = vst [vmem:[%s526 + $0x250] sm:$0xff] %v4834
        %5137 = vst [vmem:[%s526 + $0x258] sm:$0xff] %v4836
        %5138 = vst [vmem:[%s526 + $0x260] sm:$0xff] %v4485
        %5139 = vst [vmem:[%s526 + $0x268] sm:$0xff] %v4487
        %5140 = vst [vmem:[%s526 + $0x270] sm:$0xff] %v4838
        %5141 = vst [vmem:[%s526 + $0x278] sm:$0xff] %v4840
        %5142 = vst [vmem:[%s526 + $0x280] sm:$0xff] %v4491
        %5143 = vst [vmem:[%s526 + $0x288] sm:$0xff] %v4493
        %5144 = vst [vmem:[%s526 + $0x290] sm:$0xff] %v4844
        %5145 = vst [vmem:[%s526 + $0x298] sm:$0xff] %v4846
        %5146 = vst [vmem:[%s526 + $0x2a0] sm:$0xff] %v4495
        %5147 = vst [vmem:[%s526 + $0x2a8] sm:$0xff] %v4497
        %5148 = vst [vmem:[%s526 + $0x2b0] sm:$0xff] %v4848
        %5149 = vst [vmem:[%s526 + $0x2b8] sm:$0xff] %v4850
        %5150 = vst [vmem:[%s526 + $0x2c0] sm:$0xff] %v4501
        %5151 = vst [vmem:[%s526 + $0x2c8] sm:$0xff] %v4503
        %5152 = vst [vmem:[%s526 + $0x2d0] sm:$0xff] %v4854
        %5153 = vst [vmem:[%s526 + $0x2d8] sm:$0xff] %v4856
        %5154 = vst [vmem:[%s526 + $0x2e0] sm:$0xff] %v4505
        %5155 = vst [vmem:[%s526 + $0x2e8] sm:$0xff] %v4507
        %5156 = vst [vmem:[%s526 + $0x2f0] sm:$0xff] %v4858
        %5157 = vst [vmem:[%s526 + $0x2f8] sm:$0xff] %v4860
        %5158 = vst [vmem:[%s526 + $0x300] sm:$0xff] %v4511
        %5159 = vst [vmem:[%s526 + $0x308] sm:$0xff] %v4513
        %5160 = vst [vmem:[%s526 + $0x310] sm:$0xff] %v4864
        %5161 = vst [vmem:[%s526 + $0x318] sm:$0xff] %v4866
        %5162 = vst [vmem:[%s526 + $0x320] sm:$0xff] %v4515
        %5163 = vst [vmem:[%s526 + $0x328] sm:$0xff] %v4517
        %5164 = vst [vmem:[%s526 + $0x330] sm:$0xff] %v4868
        %5165 = vst [vmem:[%s526 + $0x338] sm:$0xff] %v4870
        %5166 = vst [vmem:[%s526 + $0x340] sm:$0xff] %v4521
        %5167 = vst [vmem:[%s526 + $0x348] sm:$0xff] %v4523
        %5168 = vst [vmem:[%s526 + $0x350] sm:$0xff] %v4874
        %5169 = vst [vmem:[%s526 + $0x358] sm:$0xff] %v4876
        %5170 = vst [vmem:[%s526 + $0x360] sm:$0xff] %v4525
        %5171 = vst [vmem:[%s526 + $0x368] sm:$0xff] %v4527
        %5172 = vst [vmem:[%s526 + $0x370] sm:$0xff] %v4878
        %5173 = vst [vmem:[%s526 + $0x378] sm:$0xff] %v4880
        %5174 = vst [vmem:[%s526 + $0x380] sm:$0xff] %v4531
        %5175 = vst [vmem:[%s526 + $0x388] sm:$0xff] %v4533
        %5176 = vst [vmem:[%s526 + $0x390] sm:$0xff] %v4884
        %5177 = vst [vmem:[%s526 + $0x398] sm:$0xff] %v4886
        %5178 = vst [vmem:[%s526 + $0x3a0] sm:$0xff] %v4535
        %5179 = vst [vmem:[%s526 + $0x3a8] sm:$0xff] %v4537
        %5180 = vst [vmem:[%s526 + $0x3b0] sm:$0xff] %v4888
        %5181 = vst [vmem:[%s526 + $0x3b8] sm:$0xff] %v4890
        %5182 = vst [vmem:[%s526 + $0x3c0] sm:$0xff] %v4541
        %5183 = vst [vmem:[%s526 + $0x3c8] sm:$0xff] %v4543
        %5184 = vst [vmem:[%s526 + $0x3d0] sm:$0xff] %v4894
        %5185 = vst [vmem:[%s526 + $0x3d8] sm:$0xff] %v4896
        %5186 = vst [vmem:[%s526 + $0x3e0] sm:$0xff] %v4545
        %5187 = vst [vmem:[%s526 + $0x3e8] sm:$0xff] %v4547
        %5188 = vst [vmem:[%s526 + $0x3f0] sm:$0xff] %v4898
        %5189 = vst [vmem:[%s526 + $0x3f8] sm:$0xff] %v4900
        %5190 = vst [vmem:[%s526 + $0x400] sm:$0xff] %v4551
        %5191 = vst [vmem:[%s526 + $0x408] sm:$0xff] %v4553
        %5192 = vst [vmem:[%s526 + $0x410] sm:$0xff] %v4904
        %5193 = vst [vmem:[%s526 + $0x418] sm:$0xff] %v4906
        %5194 = vst [vmem:[%s526 + $0x420] sm:$0xff] %v4555
        %5195 = vst [vmem:[%s526 + $0x428] sm:$0xff] %v4557
        %5196 = vst [vmem:[%s526 + $0x430] sm:$0xff] %v4908
        %5197 = vst [vmem:[%s526 + $0x438] sm:$0xff] %v4910
        %5198 = vst [vmem:[%s526 + $0x440] sm:$0xff] %v4561
        %5199 = vst [vmem:[%s526 + $0x448] sm:$0xff] %v4563
        %5200 = vst [vmem:[%s526 + $0x450] sm:$0xff] %v4914
        %5201 = vst [vmem:[%s526 + $0x458] sm:$0xff] %v4916
        %5202 = vst [vmem:[%s526 + $0x460] sm:$0xff] %v4565
        %5203 = vst [vmem:[%s526 + $0x468] sm:$0xff] %v4567
        %5204 = vst [vmem:[%s526 + $0x470] sm:$0xff] %v4918
        %5205 = vst [vmem:[%s526 + $0x478] sm:$0xff] %v4920
        %5206 = vst [vmem:[%s526 + $0x480] sm:$0xff] %v4571
        %5207 = vst [vmem:[%s526 + $0x488] sm:$0xff] %v4573
        %5208 = vst [vmem:[%s526 + $0x490] sm:$0xff] %v4924
        %5209 = vst [vmem:[%s526 + $0x498] sm:$0xff] %v4926
        %5210 = vst [vmem:[%s526 + $0x4a0] sm:$0xff] %v4575
        %5211 = vst [vmem:[%s526 + $0x4a8] sm:$0xff] %v4577
        %5212 = vst [vmem:[%s526 + $0x4b0] sm:$0xff] %v4928
        %5213 = vst [vmem:[%s526 + $0x4b8] sm:$0xff] %v4930
        %5214 = vst [vmem:[%s526 + $0x4c0] sm:$0xff] %v4581
        %5215 = vst [vmem:[%s526 + $0x4c8] sm:$0xff] %v4583
        %5216 = vst [vmem:[%s526 + $0x4d0] sm:$0xff] %v4934
        %5217 = vst [vmem:[%s526 + $0x4d8] sm:$0xff] %v4936
        %5218 = vst [vmem:[%s526 + $0x4e0] sm:$0xff] %v4585
        %5219 = vst [vmem:[%s526 + $0x4e8] sm:$0xff] %v4587
        %5220 = vst [vmem:[%s526 + $0x4f0] sm:$0xff] %v4938
        %5221 = vst [vmem:[%s526 + $0x4f8] sm:$0xff] %v4940
        %5222 = vst [vmem:[%s526 + $0x500] sm:$0xff] %v4591
        %5223 = vst [vmem:[%s526 + $0x508] sm:$0xff] %v4593
        %5224 = vst [vmem:[%s526 + $0x510] sm:$0xff] %v4944
        %5225 = vst [vmem:[%s526 + $0x518] sm:$0xff] %v4946
        %5226 = vst [vmem:[%s526 + $0x520] sm:$0xff] %v4595
        %5227 = vst [vmem:[%s526 + $0x528] sm:$0xff] %v4597
        %5228 = vst [vmem:[%s526 + $0x530] sm:$0xff] %v4948
        %5229 = vst [vmem:[%s526 + $0x538] sm:$0xff] %v4950
        %5230 = vst [vmem:[%s526 + $0x540] sm:$0xff] %v4601
        %5231 = vst [vmem:[%s526 + $0x548] sm:$0xff] %v4603
        %5232 = vst [vmem:[%s526 + $0x550] sm:$0xff] %v4954
        %5233 = vst [vmem:[%s526 + $0x558] sm:$0xff] %v4956
        %5234 = vst [vmem:[%s526 + $0x560] sm:$0xff] %v4605
        %5235 = vst [vmem:[%s526 + $0x568] sm:$0xff] %v4607
        %5236 = vst [vmem:[%s526 + $0x570] sm:$0xff] %v4958
        %5237 = vst [vmem:[%s526 + $0x578] sm:$0xff] %v4960
        %5238 = vst [vmem:[%s526 + $0x580] sm:$0xff] %v4611
        %5239 = vst [vmem:[%s526 + $0x588] sm:$0xff] %v4613
        %5240 = vst [vmem:[%s526 + $0x590] sm:$0xff] %v4964
        %5241 = vst [vmem:[%s526 + $0x598] sm:$0xff] %v4966
        %5242 = vst [vmem:[%s526 + $0x5a0] sm:$0xff] %v4615
        %5243 = vst [vmem:[%s526 + $0x5a8] sm:$0xff] %v4617
        %5244 = vst [vmem:[%s526 + $0x5b0] sm:$0xff] %v4968
        %5245 = vst [vmem:[%s526 + $0x5b8] sm:$0xff] %v4970
        %5246 = vst [vmem:[%s526 + $0x5c0] sm:$0xff] %v4621
        %5247 = vst [vmem:[%s526 + $0x5c8] sm:$0xff] %v4623
        %5248 = vst [vmem:[%s526 + $0x5d0] sm:$0xff] %v4974
        %5249 = vst [vmem:[%s526 + $0x5d8] sm:$0xff] %v4976
        %5250 = vst [vmem:[%s526 + $0x5e0] sm:$0xff] %v4625
        %5251 = vst [vmem:[%s526 + $0x5e8] sm:$0xff] %v4627
        %5252 = vst [vmem:[%s526 + $0x5f0] sm:$0xff] %v4978
        %5253 = vst [vmem:[%s526 + $0x5f8] sm:$0xff] %v4980
        %5254 = vst [vmem:[%s526 + $0x600] sm:$0xff] %v4631
        %5255 = vst [vmem:[%s526 + $0x608] sm:$0xff] %v4633
        %5256 = vst [vmem:[%s526 + $0x610] sm:$0xff] %v4984
        %5257 = vst [vmem:[%s526 + $0x618] sm:$0xff] %v4986
        %5258 = vst [vmem:[%s526 + $0x620] sm:$0xff] %v4635
        %5259 = vst [vmem:[%s526 + $0x628] sm:$0xff] %v4637
        %5260 = vst [vmem:[%s526 + $0x630] sm:$0xff] %v4988
        %5261 = vst [vmem:[%s526 + $0x638] sm:$0xff] %v4990
        %5262 = vst [vmem:[%s526 + $0x640] sm:$0xff] %v4641
        %5263 = vst [vmem:[%s526 + $0x648] sm:$0xff] %v4643
        %5264 = vst [vmem:[%s526 + $0x650] sm:$0xff] %v4994
        %5265 = vst [vmem:[%s526 + $0x658] sm:$0xff] %v4996
        %5266 = vst [vmem:[%s526 + $0x660] sm:$0xff] %v4645
        %5267 = vst [vmem:[%s526 + $0x668] sm:$0xff] %v4647
        %5268 = vst [vmem:[%s526 + $0x670] sm:$0xff] %v4998
        %5269 = vst [vmem:[%s526 + $0x678] sm:$0xff] %v5000
        %5270 = vst [vmem:[%s526 + $0x680] sm:$0xff] %v4651
        %5271 = vst [vmem:[%s526 + $0x688] sm:$0xff] %v4653
        %5272 = vst [vmem:[%s526 + $0x690] sm:$0xff] %v5004
        %5273 = vst [vmem:[%s526 + $0x698] sm:$0xff] %v5006
        %5274 = vst [vmem:[%s526 + $0x6a0] sm:$0xff] %v4655
        %5275 = vst [vmem:[%s526 + $0x6a8] sm:$0xff] %v4657
        %5276 = vst [vmem:[%s526 + $0x6b0] sm:$0xff] %v5008
        %5277 = vst [vmem:[%s526 + $0x6b8] sm:$0xff] %v5010
        %5278 = vst [vmem:[%s526 + $0x6c0] sm:$0xff] %v4661
        %5279 = vst [vmem:[%s526 + $0x6c8] sm:$0xff] %v4663
        %5280 = vst [vmem:[%s526 + $0x6d0] sm:$0xff] %v5014
        %5281 = vst [vmem:[%s526 + $0x6d8] sm:$0xff] %v5016
        %5282 = vst [vmem:[%s526 + $0x6e0] sm:$0xff] %v4665
        %5283 = vst [vmem:[%s526 + $0x6e8] sm:$0xff] %v4667
        %5284 = vst [vmem:[%s526 + $0x6f0] sm:$0xff] %v5018
        %5285 = vst [vmem:[%s526 + $0x6f8] sm:$0xff] %v5020
        %5286 = vst [vmem:[%s526 + $0x700] sm:$0xff] %v4671
        %5287 = vst [vmem:[%s526 + $0x708] sm:$0xff] %v4673
        %5288 = vst [vmem:[%s526 + $0x710] sm:$0xff] %v5024
        %5289 = vst [vmem:[%s526 + $0x718] sm:$0xff] %v5026
        %5290 = vst [vmem:[%s526 + $0x720] sm:$0xff] %v4675
        %5291 = vst [vmem:[%s526 + $0x728] sm:$0xff] %v4677
        %5292 = vst [vmem:[%s526 + $0x730] sm:$0xff] %v5028
        %5293 = vst [vmem:[%s526 + $0x738] sm:$0xff] %v5030
        %5294 = vst [vmem:[%s526 + $0x740] sm:$0xff] %v4681
        %5295 = vst [vmem:[%s526 + $0x748] sm:$0xff] %v4683
        %5296 = vst [vmem:[%s526 + $0x750] sm:$0xff] %v5034
        %5297 = vst [vmem:[%s526 + $0x758] sm:$0xff] %v5036
        %5298 = vst [vmem:[%s526 + $0x760] sm:$0xff] %v4685
        %5299 = vst [vmem:[%s526 + $0x768] sm:$0xff] %v4687
        %5300 = vst [vmem:[%s526 + $0x770] sm:$0xff] %v5038
        %5301 = vst [vmem:[%s526 + $0x778] sm:$0xff] %v5040
        %5302 = vst [vmem:[%s526 + $0x780] sm:$0xff] %v4691
        %5303 = vst [vmem:[%s526 + $0x788] sm:$0xff] %v4693
        %5304 = vst [vmem:[%s526 + $0x790] sm:$0xff] %v5044
        %5305 = vst [vmem:[%s526 + $0x798] sm:$0xff] %v5046
        %5306 = vst [vmem:[%s526 + $0x7a0] sm:$0xff] %v4695
        %5307 = vst [vmem:[%s526 + $0x7a8] sm:$0xff] %v4697
        %5308 = vst [vmem:[%s526 + $0x7b0] sm:$0xff] %v5048
        %5309 = vst [vmem:[%s526 + $0x7b8] sm:$0xff] %v5050
        %5310 = vst [vmem:[%s526 + $0x7c0] sm:$0xff] %v4701
        %5311 = vst [vmem:[%s526 + $0x7c8] sm:$0xff] %v4703
        %5312 = vst [vmem:[%s526 + $0x7d0] sm:$0xff] %v5054
        %5313 = vst [vmem:[%s526 + $0x7d8] sm:$0xff] %v5056
        %5314 = vst [vmem:[%s526 + $0x7e0] sm:$0xff] %v4705
        %5315 = vst [vmem:[%s526 + $0x7e8] sm:$0xff] %v4707
        %5316 = vst [vmem:[%s526 + $0x7f0] sm:$0xff] %v5058
        %5317 = vst [vmem:[%s526 + $0x7f8] sm:$0xff] %v5060
        %s5318 = sand.u32 %s277, 1
        %s5319 = scalar_lea.sflag [#allocation4], %s5318
        %s5320 = sand.u32 %s277, 1
        %s5321 = smul.addr %s5320, 2048
        %s5322 = scalar_lea.vmem [#allocation19], %s5321
        // Predicated region
        $region105: #{tpu_custom_call.1} parent=63 // pred_check
          %p5323 = pneg %p287
        $region106: #{tpu_custom_call.1} parent=63 // pred_check_branch
          %5325 = sbr.rel (%p5323) target = $region108
        $region107: #{tpu_custom_call.1} parent=63 // pred_region
          %s5326 = smul.u32 64, %s33
          %s5328 = ssub.s32 32768, 32768
          %5329 = vsyncadd %s5319, %s5328
          %s5330 = smul.addr %s5326, 4
          %s5331 = smul.addr %s5330, 128
          %s5332 = scalar_lea.hbm %s11, %s5331
          %s5333 = sshll.u32 %s5322, 4
          %s5334 = int_to_ptr.vmem [resolvable:$true] %s5333
          %5339 = dma.vmem_to_hbm [thread:$0]  %s5334, 32768, %s5332, %s5319, 512, 512, 32
        $region108: #{tpu_custom_call.1} parent=63 // pred_fallthru
          _
      $region64: #{tpu_custom_call.1} parent=5 // pred_fallthru
        _
      %p5340 = scmp.le.s32.totalorder 2, %s28
      // Predicated region
      $region109: #{tpu_custom_call.1} parent=5 // pred_check
        %p5341 = pneg %p5340
      $region110: #{tpu_custom_call.1} parent=5 // pred_check_branch
        %5343 = sbr.rel (%p5341) target = $region112
      $region111: #{tpu_custom_call.1} parent=5 // pred_region
        %s5344 = ssub.s32 %s28, 2
        // Predicated region
        $region113: #{tpu_custom_call.1} parent=111 // pred_check
          %p5345 = pneg %p293
        $region114: #{tpu_custom_call.1} parent=111 // pred_check_branch
          %5347 = sbr.rel (%p5345) target = $region116
        $region115: #{tpu_custom_call.1} parent=111 // pred_region
          %s5348 = sand.u32 %s278, 1
          %s5349 = scalar_lea.sflag [#allocation4], %s5348
          %s5350 = sand.u32 %s278, 1
          %s5351 = smul.addr %s5350, 2048
          %s5352 = scalar_lea.vmem [#allocation19], %s5351
          %5353 = dma.done %s5349, 32768
        $region116: #{tpu_custom_call.1} parent=111 // pred_fallthru
          _
      $region112: #{tpu_custom_call.1} parent=5 // pred_fallthru
        _
    $region6: #{tpu_custom_call.1} parent=1 // loop_footer
      %s32 = sadd.s32 1, %s28
    $region7: #{tpu_custom_call.1} parent=1 // loop_footer_branch
      %27 = sbr.rel target = $region3
    $region8: #{tpu_custom_call.1} parent=1 // loop_exit
      _
    %5354 = vsyncpa [#allocation3], 1
    %s5355 = scalar_lea.sflag [#allocation3], 1
    %5356 = vsyncpa %s5355, 1
    %5357 = vsyncpa [#allocation6], 1
    %5358 = vsyncpa [#allocation9], 1
    %5359 = vsyncpa [#allocation12], 1
    %5360 = vsyncpa [#allocation15], 1
    %5361 = vsyncpa [#allocation18], 1
    %5362 = vsyncpa [#allocation4], 1
    %s5363 = scalar_lea.sflag [#allocation4], 1
    %5364 = vsyncpa %s5363, 1

</llo_original>
